<compile_context>
chip_gen: v7x
topology: tpu7x:2x2x1
jax: 0.10.0
libtpu: 0.0.40
codegen_flags: <defaults>
</compile_context>

<pallas_src>
import functools

import jax
import jax.numpy as jnp
from jax.experimental import pallas as pl
from jax.experimental.pallas import tpu as pltpu


def _round_up(a, b):
    return (a + b - 1) // b * b


# ----------------------------- Pallas kernel --------------------------------

def _resnet_block_kernel(x_ref, w1_ref, b1_ref, w2_ref, b2_ref, ws_ref, bs_ref,
                         o_ref, out1_scr, *, stride, ho, wo, cin, cout_p):
    """Whole ResNet block for one NHWC image via implicit-GEMM convs.

    x_ref   : (s*s, Hc, Wc, Cin)   bf16  polyphase-split, spatially padded input
    w1_ref  : (9, Cin, Cout_p)     bf16  conv1 weights, BN1 scale folded
    b1_ref  : (1, Cout_p)          f32   BN1 bias
    w2_ref  : (9, Cout_p, Cout_p)  bf16  conv2 weights, BN2 scale folded
    b2_ref  : (1, Cout_p)          f32   BN2 bias
    ws_ref  : (Cin, Cout_p)        bf16  1x1 shortcut weights (identity if none)
    bs_ref  : (1, Cout_p)          f32   shortcut BN bias (zeros if identity)
    o_ref   : (1, Ho, Wo, Cout_p)  bf16  block output
    out1_scr: (Ho+2, Wo+2, Cout_p) bf16  VMEM scratch: conv1 output + zero halo
    """
    s = stride
    hw = ho * wo

    # ---- conv1 (3x3, stride s) + BN1 + ReLU: 9 shifted matmuls, f32 accumulate.
    # Tap (dh, dw) of a stride-s conv is a contiguous window of polyphase
    # component (dh % s, dw % s) at offset (dh // s, dw // s).
    acc1 = jnp.zeros((hw, cout_p), jnp.float32)
    for dh in range(3):
        for dw in range(3):
            comp = (dh % s) * s + (dw % s)
            oh, ow = dh // s, dw // s
            xt = x_ref[comp, oh:oh + ho, ow:ow + wo, :]          # (Ho, Wo, Cin)
            acc1 += jnp.dot(xt.reshape(hw, cin), w1_ref[dh * 3 + dw],
                            preferred_element_type=jnp.float32)
    out1 = jnp.maximum(acc1 + b1_ref[...], 0.0)

    # Stage out1 (bf16) in VMEM with a zero 1-pixel halo (conv2 has padding=1);
    # no HBM round trip between the two convs.
    out1_scr[...] = jnp.zeros_like(out1_scr)
    out1_scr[1:ho + 1, 1:wo + 1, :] = (
        out1.reshape(ho, wo, cout_p).astype(out1_scr.dtype))

    # ---- conv2 (3x3, stride 1) + BN2.
    acc2 = jnp.zeros((hw, cout_p), jnp.float32)
    for dh in range(3):
        for dw in range(3):
            ht = out1_scr[dh:dh + ho, dw:dw + wo, :]             # (Ho, Wo, Cout_p)
            acc2 += jnp.dot(ht.reshape(hw, cout_p), w2_ref[dh * 3 + dw],
                            preferred_element_type=jnp.float32)

    # ---- shortcut (1x1, stride s).  Identity path uses an identity matrix so
    # projection and identity share one code path.
    comp_s = (1 % s) * s + (1 % s)
    off_s = 1 // s
    xs = x_ref[comp_s, off_s:off_s + ho, off_s:off_s + wo, :]    # (Ho, Wo, Cin)
    res = jnp.dot(xs.reshape(hw, cin), ws_ref[...],
                  preferred_element_type=jnp.float32) + bs_ref[...]

    # ---- epilogue: BN2 bias + residual + ReLU, bf16 writeback.
    out = jnp.maximum(acc2 + b2_ref[...] + res, 0.0)
    o_ref[0] = out.reshape(ho, wo, cout_p).astype(o_ref.dtype)


# ------------------------------ JAX wrapper -----------------------------------

def _fold_bn(w, gamma, beta, mean, var, eps=1e-5):
    """Fold eval-mode BN into the conv weight's output-channel (last) axis."""
    scale = gamma / jnp.sqrt(var + eps)
    bias = (beta - mean * scale).reshape(1, -1).astype(jnp.float32)
    return w * scale, bias


class ResNetBlockPallas:
    """Mirror of the PyTorch ResNetBlock forward (eval-mode BN)."""

    def __init__(self, in_channels, out_channels, stride=1, key=None):
        key = jax.random.PRNGKey(0) if key is None else key
        k1, k2, k3, k4, k5, k6 = jax.random.split(key, 6)
        self.in_channels = in_channels
        self.out_channels = out_channels
        self.stride = stride

        def he(k, shape, fan_in):
            return jax.random.normal(k, shape, jnp.float32) * (2.0 / fan_in) ** 0.5

        def bn_params(k, c):
            ka, kb, kc, kd = jax.random.split(k, 4)
            gamma = 1.0 + 0.1 * jax.random.normal(ka, (c,), jnp.float32)
            beta = 0.1 * jax.random.normal(kb, (c,), jnp.float32)
            mean = 0.1 * jax.random.normal(kc, (c,), jnp.float32)
            var = 1.0 + 0.1 * jax.random.uniform(kd, (c,), jnp.float32)
            return gamma, beta, mean, var

        self.w1 = he(k1, (out_channels, in_channels, 3, 3), in_channels * 9)
        self.w2 = he(k2, (out_channels, out_channels, 3, 3), out_channels * 9)
        self.bn1 = bn_params(k3, out_channels)
        self.bn2 = bn_params(k4, out_channels)

        self.has_proj = (stride != 1) or (in_channels != out_channels)
        if self.has_proj:
            self.ws = he(k5, (out_channels, in_channels, 1, 1), in_channels)
            self.bns = bn_params(k6, out_channels)

    # --- small (few-KB) parameter prep: fold BN, pad Cout -> Cout_p, cast bf16.
    def _prep_params(self, cout_p):
        cin, cout = self.in_channels, self.out_channels
        pad_o = cout_p - cout

        w1 = jnp.transpose(self.w1, (2, 3, 1, 0)).reshape(9, cin, cout)
        w1, b1 = _fold_bn(w1, *self.bn1)
        w1 = jnp.pad(w1, ((0, 0), (0, 0), (0, pad_o))).astype(jnp.bfloat16)
        b1 = jnp.pad(b1, ((0, 0), (0, pad_o)))

        w2 = jnp.transpose(self.w2, (2, 3, 1, 0)).reshape(9, cout, cout)
        w2, b2 = _fold_bn(w2, *self.bn2)
        w2 = jnp.pad(w2, ((0, 0), (0, pad_o), (0, pad_o))).astype(jnp.bfloat16)
        b2 = jnp.pad(b2, ((0, 0), (0, pad_o)))

        if self.has_proj:
            ws = jnp.transpose(self.ws, (2, 3, 1, 0)).reshape(cin, cout)
            ws, bs = _fold_bn(ws, *self.bns)
            ws = jnp.pad(ws, ((0, 0), (0, pad_o))).astype(jnp.bfloat16)
            bs = jnp.pad(bs, ((0, 0), (0, pad_o)))
        else:
            ws = jnp.eye(cin, cout_p, dtype=jnp.bfloat16)   # identity residual
            bs = jnp.zeros((1, cout_p), jnp.float32)
        return w1, b1, w2, b2, ws, bs

    def __call__(self, x_nchw):
        n, cin, h, w = x_nchw.shape
        s = self.stride
        cout = self.out_channels
        cout_p = _round_up(cout, 128)          # lane-dense channels
        ho = (h - 1) // s + 1
        wo = (w - 1) // s + 1

        # NCHW f32 -> NHWC bf16 in one pass (no separate f32 intermediate).
        x = jnp.transpose(x_nchw, (0, 2, 3, 1)).astype(jnp.bfloat16)

        # conv padding=1; also round spatial dims up to a multiple of the stride.
        hp = _round_up(h + 2, s)
        wp = _round_up(w + 2, s)
        xpad = jnp.pad(x, ((0, 0), (1, hp - h - 1), (1, wp - w - 1), (0, 0)))

        # Polyphase split (one cheap rearrangement pass, no data blowup) so every
        # in-kernel tap read is contiguous even for stride 2.
        hc, wc = hp // s, wp // s
        xpp = (xpad.reshape(n, hc, s, wc, s, cin)
                   .transpose(0, 2, 4, 1, 3, 5)
                   .reshape(n * s * s, hc, wc, cin))

        w1, b1, w2, b2, ws, bs = self._prep_params(cout_p)

        kernel = functools.partial(_resnet_block_kernel, stride=s, ho=ho, wo=wo,
                                   cin=cin, cout_p=cout_p)

        flops = 2 * n * ho * wo * (9 * cin + 9 * cout_p + cin) * cout_p
        bytes_accessed = ((xpp.size + w1.size + w2.size + ws.size
                           + n * ho * wo * cout_p) * 2
                          + (b1.size + b2.size + bs.size) * 4)

        out = pl.pallas_call(
            kernel,
            out_shape=jax.ShapeDtypeStruct((n, ho, wo, cout_p), jnp.bfloat16),
            grid_spec=pltpu.PrefetchScalarGridSpec(
                num_scalar_prefetch=0,
                grid=(n,),                                   # one image per step
                in_specs=[
                    # per-image activation block (auto double-buffered)
                    pl.BlockSpec((s * s, hc, wc, cin), lambda i: (i, 0, 0, 0)),
                    # weights / biases: constant block index -> DMA'd once,
                    # resident in VMEM for the whole grid
                    pl.BlockSpec((9, cin, cout_p), lambda i: (0, 0, 0)),
                    pl.BlockSpec((1, cout_p), lambda i: (0, 0)),
                    pl.BlockSpec((9, cout_p, cout_p), lambda i: (0, 0, 0)),
                    pl.BlockSpec((1, cout_p), lambda i: (0, 0)),
                    pl.BlockSpec((cin, cout_p), lambda i: (0, 0)),
                    pl.BlockSpec((1, cout_p), lambda i: (0, 0)),
                ],
                out_specs=pl.BlockSpec((1, ho, wo, cout_p),
                                       lambda i: (i, 0, 0, 0)),
                scratch_shapes=[
                    pltpu.VMEM((ho + 2, wo + 2, cout_p), jnp.bfloat16)],
            ),
            compiler_params=pltpu.CompilerParams(
                dimension_semantics=("parallel",)),          # megacore over batch
            cost_estimate=pl.CostEstimate(flops=flops, transcendentals=0,
                                          bytes_accessed=bytes_accessed),
        )(xpp, w1, b1, w2, b2, ws, bs)

        # Slice channel padding, back to NCHW f32 (one fused XLA pass).
        return jnp.transpose(out[..., :cout], (0, 3, 1, 2)).astype(jnp.float32)


# ------------------------- pure-JAX reference --------------------------------

def _ref_forward(block, x_nchw):
    def conv(x, w, stride, pad):
        return jax.lax.conv_general_dilated(
            x, w, (stride, stride), [(pad, pad), (pad, pad)],
            dimension_numbers=("NCHW", "OIHW", "NCHW"))

    def bn(x, params, eps=1e-5):
        gamma, beta, mean, var = params
        g, b = gamma.reshape(1, -1, 1, 1), beta.reshape(1, -1, 1, 1)
        m, v = mean.reshape(1, -1, 1, 1), var.reshape(1, -1, 1, 1)
        return (x - m) / jnp.sqrt(v + eps) * g + b

    out = jax.nn.relu(bn(conv(x_nchw, block.w1, block.stride, 1), block.bn1))
    out = bn(conv(out, block.w2, 1, 1), block.bn2)
    sc = (bn(conv(x_nchw, block.ws, block.stride, 0), block.bns)
          if block.has_proj else x_nchw)
    return jax.nn.relu(out + sc)


# --------------------------------- main ---------------------------------------

if __name__ == "__main__":
    key = jax.random.PRNGKey(0)
    kx1, kx2, kp1, kp2 = jax.random.split(key, 4)

    # Projection block: stride-2 + channel change (polyphase path, 1x1 shortcut).
    n, cin, h, w = 2, 4, 16, 16
    cout, stride = 8, 2
    x1 = jax.random.normal(kx1, (n, cin, h, w), jnp.float32)
    blk1 = ResNetBlockPallas(cin, cout, stride=stride, key=kp1)
    out1 = jax.block_until_ready(jax.jit(blk1.__call__)(x1))
    assert out1.shape == (n, cout, h // stride, w // stride), out1.shape
    ref1 = jax.block_until_ready(_ref_forward(blk1, x1))
    # bf16 MXU operands / bf16 writeback vs f32 XLA reference -> ~1e-2 diffs.
    assert jnp.allclose(out1, ref1, rtol=5e-2, atol=5e-2), \
        float(jnp.max(jnp.abs(out1 - ref1)))

    # Identity block: stride-1, same channels (identity residual path).
    x2 = jax.random.normal(kx2, (2, 8, 16, 16), jnp.float32)
    blk2 = ResNetBlockPallas(8, 8, stride=1, key=kp2)
    out2 = jax.block_until_ready(jax.jit(blk2.__call__)(x2))
    assert out2.shape == x2.shape, out2.shape
    ref2 = jax.block_until_ready(_ref_forward(blk2, x2))
    assert jnp.allclose(out2, ref2, rtol=5e-2, atol=5e-2), \
        float(jnp.max(jnp.abs(out2 - ref2)))

    print("KERNEL_OK")
</pallas_src>

<mosaic_0001>
module attributes {stable_mosaic.version = 11 : i64} {
  func.func @_resnet_block_kernel(%arg0: i32, %arg1: memref<4x9x9x4xbf16, #tpu.memory_space<vmem>>, %arg2: memref<9x4x128xbf16, #tpu.memory_space<vmem>>, %arg3: memref<1x128xf32, #tpu.memory_space<vmem>>, %arg4: memref<9x128x128xbf16, #tpu.memory_space<vmem>>, %arg5: memref<1x128xf32, #tpu.memory_space<vmem>>, %arg6: memref<4x128xbf16, #tpu.memory_space<vmem>>, %arg7: memref<1x128xf32, #tpu.memory_space<vmem>>, %arg8: memref<1x8x8x128xbf16, #tpu.memory_space<vmem>>, %arg9: memref<10x10x128xbf16, #tpu.memory_space<vmem>>) attributes {dimension_semantics = [#tpu.dimension_semantics<parallel>], iteration_bounds = array<i64: 2>, scalar_prefetch = 0 : i64, scratch_operands = 1 : i64, tpu.core_type = #tpu.core_type<tc>, window_params = [{transform_indices = @transform_0, window_bounds = array<i64: 4, 9, 9, 4>}, {pipeline_mode = #tpu.pipeline_mode<synchronous>, transform_indices = @transform_1, window_bounds = array<i64: 9, 4, 128>}, {pipeline_mode = #tpu.pipeline_mode<synchronous>, transform_indices = @transform_2, window_bounds = array<i64: 1, 128>}, {pipeline_mode = #tpu.pipeline_mode<synchronous>, transform_indices = @transform_3, window_bounds = array<i64: 9, 128, 128>}, {pipeline_mode = #tpu.pipeline_mode<synchronous>, transform_indices = @transform_4, window_bounds = array<i64: 1, 128>}, {pipeline_mode = #tpu.pipeline_mode<synchronous>, transform_indices = @transform_5, window_bounds = array<i64: 4, 128>}, {pipeline_mode = #tpu.pipeline_mode<synchronous>, transform_indices = @transform_6, window_bounds = array<i64: 1, 128>}, {transform_indices = @transform_7, window_bounds = array<i64: 1, 8, 8, 128>}]} {
    %cst = arith.constant 0.000000e+00 : f32
    %0 = vector.broadcast %cst : f32 to vector<64x128xf32>
    %c0 = arith.constant 0 : index
    %c0_0 = arith.constant 0 : index
    %c0_1 = arith.constant 0 : index
    %c0_2 = arith.constant 0 : index
    %1 = vector.load %arg1[%c0, %c0_0, %c0_1, %c0_2] : memref<4x9x9x4xbf16, #tpu.memory_space<vmem>>, vector<1x8x8x4xbf16>
    %2 = vector.shape_cast %1 : vector<1x8x8x4xbf16> to vector<8x8x4xbf16>
    %3 = vector.shape_cast %2 : vector<8x8x4xbf16> to vector<64x4xbf16>
    %c0_3 = arith.constant 0 : index
    %c0_4 = arith.constant 0 : index
    %c0_5 = arith.constant 0 : index
    %4 = vector.load %arg2[%c0_3, %c0_4, %c0_5] : memref<9x4x128xbf16, #tpu.memory_space<vmem>>, vector<1x4x128xbf16>
    %5 = vector.shape_cast %4 : vector<1x4x128xbf16> to vector<4x128xbf16>
    %cst_6 = arith.constant dense<0.000000e+00> : vector<64x128xf32>
    %6 = tpu.matmul %3, %5, %cst_6 {dimension_numbers = #tpu.dot_dimension_numbers<[1], [0], [0], [1], [0, 0, 1, 1], [], []>} : vector<64x4xbf16>, vector<4x128xbf16>, vector<64x128xf32> -> vector<64x128xf32>
    %7 = arith.addf %0, %6 : vector<64x128xf32>
    %c1 = arith.constant 1 : index
    %c0_7 = arith.constant 0 : index
    %c0_8 = arith.constant 0 : index
    %c0_9 = arith.constant 0 : index
    %8 = vector.load %arg1[%c1, %c0_7, %c0_8, %c0_9] : memref<4x9x9x4xbf16, #tpu.memory_space<vmem>>, vector<1x8x8x4xbf16>
    %9 = vector.shape_cast %8 : vector<1x8x8x4xbf16> to vector<8x8x4xbf16>
    %10 = vector.shape_cast %9 : vector<8x8x4xbf16> to vector<64x4xbf16>
    %c1_10 = arith.constant 1 : index
    %c0_11 = arith.constant 0 : index
    %c0_12 = arith.constant 0 : index
    %11 = vector.load %arg2[%c1_10, %c0_11, %c0_12] : memref<9x4x128xbf16, #tpu.memory_space<vmem>>, vector<1x4x128xbf16>
    %12 = vector.shape_cast %11 : vector<1x4x128xbf16> to vector<4x128xbf16>
    %cst_13 = arith.constant dense<0.000000e+00> : vector<64x128xf32>
    %13 = tpu.matmul %10, %12, %cst_13 {dimension_numbers = #tpu.dot_dimension_numbers<[1], [0], [0], [1], [0, 0, 1, 1], [], []>} : vector<64x4xbf16>, vector<4x128xbf16>, vector<64x128xf32> -> vector<64x128xf32>
    %14 = arith.addf %7, %13 : vector<64x128xf32>
    %c0_14 = arith.constant 0 : index
    %c0_15 = arith.constant 0 : index
    %c1_16 = arith.constant 1 : index
    %c0_17 = arith.constant 0 : index
    %15 = vector.load %arg1[%c0_14, %c0_15, %c1_16, %c0_17] : memref<4x9x9x4xbf16, #tpu.memory_space<vmem>>, vector<1x8x8x4xbf16>
    %16 = vector.shape_cast %15 : vector<1x8x8x4xbf16> to vector<8x8x4xbf16>
    %17 = vector.shape_cast %16 : vector<8x8x4xbf16> to vector<64x4xbf16>
    %c2 = arith.constant 2 : index
    %c0_18 = arith.constant 0 : index
    %c0_19 = arith.constant 0 : index
    %18 = vector.load %arg2[%c2, %c0_18, %c0_19] : memref<9x4x128xbf16, #tpu.memory_space<vmem>>, vector<1x4x128xbf16>
    %19 = vector.shape_cast %18 : vector<1x4x128xbf16> to vector<4x128xbf16>
    %cst_20 = arith.constant dense<0.000000e+00> : vector<64x128xf32>
    %20 = tpu.matmul %17, %19, %cst_20 {dimension_numbers = #tpu.dot_dimension_numbers<[1], [0], [0], [1], [0, 0, 1, 1], [], []>} : vector<64x4xbf16>, vector<4x128xbf16>, vector<64x128xf32> -> vector<64x128xf32>
    %21 = arith.addf %14, %20 : vector<64x128xf32>
    %c2_21 = arith.constant 2 : index
    %c0_22 = arith.constant 0 : index
    %c0_23 = arith.constant 0 : index
    %c0_24 = arith.constant 0 : index
    %22 = vector.load %arg1[%c2_21, %c0_22, %c0_23, %c0_24] : memref<4x9x9x4xbf16, #tpu.memory_space<vmem>>, vector<1x8x8x4xbf16>
    %23 = vector.shape_cast %22 : vector<1x8x8x4xbf16> to vector<8x8x4xbf16>
    %24 = vector.shape_cast %23 : vector<8x8x4xbf16> to vector<64x4xbf16>
    %c3 = arith.constant 3 : index
    %c0_25 = arith.constant 0 : index
    %c0_26 = arith.constant 0 : index
    %25 = vector.load %arg2[%c3, %c0_25, %c0_26] : memref<9x4x128xbf16, #tpu.memory_space<vmem>>, vector<1x4x128xbf16>
    %26 = vector.shape_cast %25 : vector<1x4x128xbf16> to vector<4x128xbf16>
    %cst_27 = arith.constant dense<0.000000e+00> : vector<64x128xf32>
    %27 = tpu.matmul %24, %26, %cst_27 {dimension_numbers = #tpu.dot_dimension_numbers<[1], [0], [0], [1], [0, 0, 1, 1], [], []>} : vector<64x4xbf16>, vector<4x128xbf16>, vector<64x128xf32> -> vector<64x128xf32>
    %28 = arith.addf %21, %27 : vector<64x128xf32>
    %c3_28 = arith.constant 3 : index
    %c0_29 = arith.constant 0 : index
    %c0_30 = arith.constant 0 : index
    %c0_31 = arith.constant 0 : index
    %29 = vector.load %arg1[%c3_28, %c0_29, %c0_30, %c0_31] : memref<4x9x9x4xbf16, #tpu.memory_space<vmem>>, vector<1x8x8x4xbf16>
    %30 = vector.shape_cast %29 : vector<1x8x8x4xbf16> to vector<8x8x4xbf16>
    %31 = vector.shape_cast %30 : vector<8x8x4xbf16> to vector<64x4xbf16>
    %c4 = arith.constant 4 : index
    %c0_32 = arith.constant 0 : index
    %c0_33 = arith.constant 0 : index
    %32 = vector.load %arg2[%c4, %c0_32, %c0_33] : memref<9x4x128xbf16, #tpu.memory_space<vmem>>, vector<1x4x128xbf16>
    %33 = vector.shape_cast %32 : vector<1x4x128xbf16> to vector<4x128xbf16>
    %cst_34 = arith.constant dense<0.000000e+00> : vector<64x128xf32>
    %34 = tpu.matmul %31, %33, %cst_34 {dimension_numbers = #tpu.dot_dimension_numbers<[1], [0], [0], [1], [0, 0, 1, 1], [], []>} : vector<64x4xbf16>, vector<4x128xbf16>, vector<64x128xf32> -> vector<64x128xf32>
    %35 = arith.addf %28, %34 : vector<64x128xf32>
    %c2_35 = arith.constant 2 : index
    %c0_36 = arith.constant 0 : index
    %c1_37 = arith.constant 1 : index
    %c0_38 = arith.constant 0 : index
    %36 = vector.load %arg1[%c2_35, %c0_36, %c1_37, %c0_38] : memref<4x9x9x4xbf16, #tpu.memory_space<vmem>>, vector<1x8x8x4xbf16>
    %37 = vector.shape_cast %36 : vector<1x8x8x4xbf16> to vector<8x8x4xbf16>
    %38 = vector.shape_cast %37 : vector<8x8x4xbf16> to vector<64x4xbf16>
    %c5 = arith.constant 5 : index
    %c0_39 = arith.constant 0 : index
    %c0_40 = arith.constant 0 : index
    %39 = vector.load %arg2[%c5, %c0_39, %c0_40] : memref<9x4x128xbf16, #tpu.memory_space<vmem>>, vector<1x4x128xbf16>
    %40 = vector.shape_cast %39 : vector<1x4x128xbf16> to vector<4x128xbf16>
    %cst_41 = arith.constant dense<0.000000e+00> : vector<64x128xf32>
    %41 = tpu.matmul %38, %40, %cst_41 {dimension_numbers = #tpu.dot_dimension_numbers<[1], [0], [0], [1], [0, 0, 1, 1], [], []>} : vector<64x4xbf16>, vector<4x128xbf16>, vector<64x128xf32> -> vector<64x128xf32>
    %42 = arith.addf %35, %41 : vector<64x128xf32>
    %c0_42 = arith.constant 0 : index
    %c1_43 = arith.constant 1 : index
    %c0_44 = arith.constant 0 : index
    %c0_45 = arith.constant 0 : index
    %43 = vector.load %arg1[%c0_42, %c1_43, %c0_44, %c0_45] : memref<4x9x9x4xbf16, #tpu.memory_space<vmem>>, vector<1x8x8x4xbf16>
    %44 = vector.shape_cast %43 : vector<1x8x8x4xbf16> to vector<8x8x4xbf16>
    %45 = vector.shape_cast %44 : vector<8x8x4xbf16> to vector<64x4xbf16>
    %c6 = arith.constant 6 : index
    %c0_46 = arith.constant 0 : index
    %c0_47 = arith.constant 0 : index
    %46 = vector.load %arg2[%c6, %c0_46, %c0_47] : memref<9x4x128xbf16, #tpu.memory_space<vmem>>, vector<1x4x128xbf16>
    %47 = vector.shape_cast %46 : vector<1x4x128xbf16> to vector<4x128xbf16>
    %cst_48 = arith.constant dense<0.000000e+00> : vector<64x128xf32>
    %48 = tpu.matmul %45, %47, %cst_48 {dimension_numbers = #tpu.dot_dimension_numbers<[1], [0], [0], [1], [0, 0, 1, 1], [], []>} : vector<64x4xbf16>, vector<4x128xbf16>, vector<64x128xf32> -> vector<64x128xf32>
    %49 = arith.addf %42, %48 : vector<64x128xf32>
    %c1_49 = arith.constant 1 : index
    %c1_50 = arith.constant 1 : index
    %c0_51 = arith.constant 0 : index
    %c0_52 = arith.constant 0 : index
    %50 = vector.load %arg1[%c1_49, %c1_50, %c0_51, %c0_52] : memref<4x9x9x4xbf16, #tpu.memory_space<vmem>>, vector<1x8x8x4xbf16>
    %51 = vector.shape_cast %50 : vector<1x8x8x4xbf16> to vector<8x8x4xbf16>
    %52 = vector.shape_cast %51 : vector<8x8x4xbf16> to vector<64x4xbf16>
    %c7 = arith.constant 7 : index
    %c0_53 = arith.constant 0 : index
    %c0_54 = arith.constant 0 : index
    %53 = vector.load %arg2[%c7, %c0_53, %c0_54] : memref<9x4x128xbf16, #tpu.memory_space<vmem>>, vector<1x4x128xbf16>
    %54 = vector.shape_cast %53 : vector<1x4x128xbf16> to vector<4x128xbf16>
    %cst_55 = arith.constant dense<0.000000e+00> : vector<64x128xf32>
    %55 = tpu.matmul %52, %54, %cst_55 {dimension_numbers = #tpu.dot_dimension_numbers<[1], [0], [0], [1], [0, 0, 1, 1], [], []>} : vector<64x4xbf16>, vector<4x128xbf16>, vector<64x128xf32> -> vector<64x128xf32>
    %56 = arith.addf %49, %55 : vector<64x128xf32>
    %c0_56 = arith.constant 0 : index
    %c1_57 = arith.constant 1 : index
    %c1_58 = arith.constant 1 : index
    %c0_59 = arith.constant 0 : index
    %57 = vector.load %arg1[%c0_56, %c1_57, %c1_58, %c0_59] : memref<4x9x9x4xbf16, #tpu.memory_space<vmem>>, vector<1x8x8x4xbf16>
    %58 = vector.shape_cast %57 : vector<1x8x8x4xbf16> to vector<8x8x4xbf16>
    %59 = vector.shape_cast %58 : vector<8x8x4xbf16> to vector<64x4xbf16>
    %c8 = arith.constant 8 : index
    %c0_60 = arith.constant 0 : index
    %c0_61 = arith.constant 0 : index
    %60 = vector.load %arg2[%c8, %c0_60, %c0_61] : memref<9x4x128xbf16, #tpu.memory_space<vmem>>, vector<1x4x128xbf16>
    %61 = vector.shape_cast %60 : vector<1x4x128xbf16> to vector<4x128xbf16>
    %cst_62 = arith.constant dense<0.000000e+00> : vector<64x128xf32>
    %62 = tpu.matmul %59, %61, %cst_62 {dimension_numbers = #tpu.dot_dimension_numbers<[1], [0], [0], [1], [0, 0, 1, 1], [], []>} : vector<64x4xbf16>, vector<4x128xbf16>, vector<64x128xf32> -> vector<64x128xf32>
    %63 = arith.addf %56, %62 : vector<64x128xf32>
    %c0_63 = arith.constant 0 : index
    %c0_64 = arith.constant 0 : index
    %64 = vector.load %arg3[%c0_63, %c0_64] : memref<1x128xf32, #tpu.memory_space<vmem>>, vector<1x128xf32>
    %65 = vector.broadcast %64 : vector<1x128xf32> to vector<64x128xf32>
    %66 = arith.addf %63, %65 : vector<64x128xf32>
    %cst_65 = arith.constant 0.000000e+00 : f32
    %67 = vector.broadcast %cst_65 : f32 to vector<64x128xf32>
    %68 = arith.maximumf %66, %67 : vector<64x128xf32>
    %cst_66 = arith.constant 0.000000e+00 : bf16
    %69 = vector.broadcast %cst_66 : bf16 to vector<10x10x128xbf16>
    %c0_67 = arith.constant 0 : index
    %c0_68 = arith.constant 0 : index
    %c0_69 = arith.constant 0 : index
    %70 = vector.load %arg9[%c0_67, %c0_68, %c0_69] : memref<10x10x128xbf16, #tpu.memory_space<vmem>>, vector<10x10x128xbf16>
    tpu.vector_store %arg9[%c0_67, %c0_68, %c0_69], %69 {strides = array<i32>} : memref<10x10x128xbf16, #tpu.memory_space<vmem>>, vector<10x10x128xbf16>,
    %71 = vector.shape_cast %68 : vector<64x128xf32> to vector<8x8x128xf32>
    %72 = arith.truncf %71 : vector<8x8x128xf32> to vector<8x8x128xbf16>
    %c1_70 = arith.constant 1 : index
    %c1_71 = arith.constant 1 : index
    %c0_72 = arith.constant 0 : index
    %73 = vector.load %arg9[%c1_70, %c1_71, %c0_72] : memref<10x10x128xbf16, #tpu.memory_space<vmem>>, vector<8x8x128xbf16>
    tpu.vector_store %arg9[%c1_70, %c1_71, %c0_72], %72 {strides = array<i32>} : memref<10x10x128xbf16, #tpu.memory_space<vmem>>, vector<8x8x128xbf16>,
    %cst_73 = arith.constant 0.000000e+00 : f32
    %74 = vector.broadcast %cst_73 : f32 to vector<64x128xf32>
    %c0_74 = arith.constant 0 : index
    %c0_75 = arith.constant 0 : index
    %c0_76 = arith.constant 0 : index
    %75 = vector.load %arg9[%c0_74, %c0_75, %c0_76] : memref<10x10x128xbf16, #tpu.memory_space<vmem>>, vector<8x8x128xbf16>
    %76 = vector.shape_cast %75 : vector<8x8x128xbf16> to vector<64x128xbf16>
    %c0_77 = arith.constant 0 : index
    %c0_78 = arith.constant 0 : index
    %c0_79 = arith.constant 0 : index
    %77 = vector.load %arg4[%c0_77, %c0_78, %c0_79] : memref<9x128x128xbf16, #tpu.memory_space<vmem>>, vector<1x128x128xbf16>
    %78 = vector.shape_cast %77 : vector<1x128x128xbf16> to vector<128x128xbf16>
    %cst_80 = arith.constant dense<0.000000e+00> : vector<64x128xf32>
    %79 = tpu.matmul %76, %78, %cst_80 {dimension_numbers = #tpu.dot_dimension_numbers<[1], [0], [0], [1], [0, 0, 1, 1], [], []>} : vector<64x128xbf16>, vector<128x128xbf16>, vector<64x128xf32> -> vector<64x128xf32>
    %80 = arith.addf %74, %79 : vector<64x128xf32>
    %c0_81 = arith.constant 0 : index
    %c1_82 = arith.constant 1 : index
    %c0_83 = arith.constant 0 : index
    %81 = vector.load %arg9[%c0_81, %c1_82, %c0_83] : memref<10x10x128xbf16, #tpu.memory_space<vmem>>, vector<8x8x128xbf16>
    %82 = vector.shape_cast %81 : vector<8x8x128xbf16> to vector<64x128xbf16>
    %c1_84 = arith.constant 1 : index
    %c0_85 = arith.constant 0 : index
    %c0_86 = arith.constant 0 : index
    %83 = vector.load %arg4[%c1_84, %c0_85, %c0_86] : memref<9x128x128xbf16, #tpu.memory_space<vmem>>, vector<1x128x128xbf16>
    %84 = vector.shape_cast %83 : vector<1x128x128xbf16> to vector<128x128xbf16>
    %cst_87 = arith.constant dense<0.000000e+00> : vector<64x128xf32>
    %85 = tpu.matmul %82, %84, %cst_87 {dimension_numbers = #tpu.dot_dimension_numbers<[1], [0], [0], [1], [0, 0, 1, 1], [], []>} : vector<64x128xbf16>, vector<128x128xbf16>, vector<64x128xf32> -> vector<64x128xf32>
    %86 = arith.addf %80, %85 : vector<64x128xf32>
    %c0_88 = arith.constant 0 : index
    %c2_89 = arith.constant 2 : index
    %c0_90 = arith.constant 0 : index
    %87 = vector.load %arg9[%c0_88, %c2_89, %c0_90] : memref<10x10x128xbf16, #tpu.memory_space<vmem>>, vector<8x8x128xbf16>
    %88 = vector.shape_cast %87 : vector<8x8x128xbf16> to vector<64x128xbf16>
    %c2_91 = arith.constant 2 : index
    %c0_92 = arith.constant 0 : index
    %c0_93 = arith.constant 0 : index
    %89 = vector.load %arg4[%c2_91, %c0_92, %c0_93] : memref<9x128x128xbf16, #tpu.memory_space<vmem>>, vector<1x128x128xbf16>
    %90 = vector.shape_cast %89 : vector<1x128x128xbf16> to vector<128x128xbf16>
    %cst_94 = arith.constant dense<0.000000e+00> : vector<64x128xf32>
    %91 = tpu.matmul %88, %90, %cst_94 {dimension_numbers = #tpu.dot_dimension_numbers<[1], [0], [0], [1], [0, 0, 1, 1], [], []>} : vector<64x128xbf16>, vector<128x128xbf16>, vector<64x128xf32> -> vector<64x128xf32>
    %92 = arith.addf %86, %91 : vector<64x128xf32>
    %c1_95 = arith.constant 1 : index
    %c0_96 = arith.constant 0 : index
    %c0_97 = arith.constant 0 : index
    %93 = vector.load %arg9[%c1_95, %c0_96, %c0_97] : memref<10x10x128xbf16, #tpu.memory_space<vmem>>, vector<8x8x128xbf16>
    %94 = vector.shape_cast %93 : vector<8x8x128xbf16> to vector<64x128xbf16>
    %c3_98 = arith.constant 3 : index
    %c0_99 = arith.constant 0 : index
    %c0_100 = arith.constant 0 : index
    %95 = vector.load %arg4[%c3_98, %c0_99, %c0_100] : memref<9x128x128xbf16, #tpu.memory_space<vmem>>, vector<1x128x128xbf16>
    %96 = vector.shape_cast %95 : vector<1x128x128xbf16> to vector<128x128xbf16>
    %cst_101 = arith.constant dense<0.000000e+00> : vector<64x128xf32>
    %97 = tpu.matmul %94, %96, %cst_101 {dimension_numbers = #tpu.dot_dimension_numbers<[1], [0], [0], [1], [0, 0, 1, 1], [], []>} : vector<64x128xbf16>, vector<128x128xbf16>, vector<64x128xf32> -> vector<64x128xf32>
    %98 = arith.addf %92, %97 : vector<64x128xf32>
    %c1_102 = arith.constant 1 : index
    %c1_103 = arith.constant 1 : index
    %c0_104 = arith.constant 0 : index
    %99 = vector.load %arg9[%c1_102, %c1_103, %c0_104] : memref<10x10x128xbf16, #tpu.memory_space<vmem>>, vector<8x8x128xbf16>
    %100 = vector.shape_cast %99 : vector<8x8x128xbf16> to vector<64x128xbf16>
    %c4_105 = arith.constant 4 : index
    %c0_106 = arith.constant 0 : index
    %c0_107 = arith.constant 0 : index
    %101 = vector.load %arg4[%c4_105, %c0_106, %c0_107] : memref<9x128x128xbf16, #tpu.memory_space<vmem>>, vector<1x128x128xbf16>
    %102 = vector.shape_cast %101 : vector<1x128x128xbf16> to vector<128x128xbf16>
    %cst_108 = arith.constant dense<0.000000e+00> : vector<64x128xf32>
    %103 = tpu.matmul %100, %102, %cst_108 {dimension_numbers = #tpu.dot_dimension_numbers<[1], [0], [0], [1], [0, 0, 1, 1], [], []>} : vector<64x128xbf16>, vector<128x128xbf16>, vector<64x128xf32> -> vector<64x128xf32>
    %104 = arith.addf %98, %103 : vector<64x128xf32>
    %c1_109 = arith.constant 1 : index
    %c2_110 = arith.constant 2 : index
    %c0_111 = arith.constant 0 : index
    %105 = vector.load %arg9[%c1_109, %c2_110, %c0_111] : memref<10x10x128xbf16, #tpu.memory_space<vmem>>, vector<8x8x128xbf16>
    %106 = vector.shape_cast %105 : vector<8x8x128xbf16> to vector<64x128xbf16>
    %c5_112 = arith.constant 5 : index
    %c0_113 = arith.constant 0 : index
    %c0_114 = arith.constant 0 : index
    %107 = vector.load %arg4[%c5_112, %c0_113, %c0_114] : memref<9x128x128xbf16, #tpu.memory_space<vmem>>, vector<1x128x128xbf16>
    %108 = vector.shape_cast %107 : vector<1x128x128xbf16> to vector<128x128xbf16>
    %cst_115 = arith.constant dense<0.000000e+00> : vector<64x128xf32>
    %109 = tpu.matmul %106, %108, %cst_115 {dimension_numbers = #tpu.dot_dimension_numbers<[1], [0], [0], [1], [0, 0, 1, 1], [], []>} : vector<64x128xbf16>, vector<128x128xbf16>, vector<64x128xf32> -> vector<64x128xf32>
    %110 = arith.addf %104, %109 : vector<64x128xf32>
    %c2_116 = arith.constant 2 : index
    %c0_117 = arith.constant 0 : index
    %c0_118 = arith.constant 0 : index
    %111 = vector.load %arg9[%c2_116, %c0_117, %c0_118] : memref<10x10x128xbf16, #tpu.memory_space<vmem>>, vector<8x8x128xbf16>
    %112 = vector.shape_cast %111 : vector<8x8x128xbf16> to vector<64x128xbf16>
    %c6_119 = arith.constant 6 : index
    %c0_120 = arith.constant 0 : index
    %c0_121 = arith.constant 0 : index
    %113 = vector.load %arg4[%c6_119, %c0_120, %c0_121] : memref<9x128x128xbf16, #tpu.memory_space<vmem>>, vector<1x128x128xbf16>
    %114 = vector.shape_cast %113 : vector<1x128x128xbf16> to vector<128x128xbf16>
    %cst_122 = arith.constant dense<0.000000e+00> : vector<64x128xf32>
    %115 = tpu.matmul %112, %114, %cst_122 {dimension_numbers = #tpu.dot_dimension_numbers<[1], [0], [0], [1], [0, 0, 1, 1], [], []>} : vector<64x128xbf16>, vector<128x128xbf16>, vector<64x128xf32> -> vector<64x128xf32>
    %116 = arith.addf %110, %115 : vector<64x128xf32>
    %c2_123 = arith.constant 2 : index
    %c1_124 = arith.constant 1 : index
    %c0_125 = arith.constant 0 : index
    %117 = vector.load %arg9[%c2_123, %c1_124, %c0_125] : memref<10x10x128xbf16, #tpu.memory_space<vmem>>, vector<8x8x128xbf16>
    %118 = vector.shape_cast %117 : vector<8x8x128xbf16> to vector<64x128xbf16>
    %c7_126 = arith.constant 7 : index
    %c0_127 = arith.constant 0 : index
    %c0_128 = arith.constant 0 : index
    %119 = vector.load %arg4[%c7_126, %c0_127, %c0_128] : memref<9x128x128xbf16, #tpu.memory_space<vmem>>, vector<1x128x128xbf16>
    %120 = vector.shape_cast %119 : vector<1x128x128xbf16> to vector<128x128xbf16>
    %cst_129 = arith.constant dense<0.000000e+00> : vector<64x128xf32>
    %121 = tpu.matmul %118, %120, %cst_129 {dimension_numbers = #tpu.dot_dimension_numbers<[1], [0], [0], [1], [0, 0, 1, 1], [], []>} : vector<64x128xbf16>, vector<128x128xbf16>, vector<64x128xf32> -> vector<64x128xf32>
    %122 = arith.addf %116, %121 : vector<64x128xf32>
    %c2_130 = arith.constant 2 : index
    %c2_131 = arith.constant 2 : index
    %c0_132 = arith.constant 0 : index
    %123 = vector.load %arg9[%c2_130, %c2_131, %c0_132] : memref<10x10x128xbf16, #tpu.memory_space<vmem>>, vector<8x8x128xbf16>
    %124 = vector.shape_cast %123 : vector<8x8x128xbf16> to vector<64x128xbf16>
    %c8_133 = arith.constant 8 : index
    %c0_134 = arith.constant 0 : index
    %c0_135 = arith.constant 0 : index
    %125 = vector.load %arg4[%c8_133, %c0_134, %c0_135] : memref<9x128x128xbf16, #tpu.memory_space<vmem>>, vector<1x128x128xbf16>
    %126 = vector.shape_cast %125 : vector<1x128x128xbf16> to vector<128x128xbf16>
    %cst_136 = arith.constant dense<0.000000e+00> : vector<64x128xf32>
    %127 = tpu.matmul %124, %126, %cst_136 {dimension_numbers = #tpu.dot_dimension_numbers<[1], [0], [0], [1], [0, 0, 1, 1], [], []>} : vector<64x128xbf16>, vector<128x128xbf16>, vector<64x128xf32> -> vector<64x128xf32>
    %128 = arith.addf %122, %127 : vector<64x128xf32>
    %c3_137 = arith.constant 3 : index
    %c0_138 = arith.constant 0 : index
    %c0_139 = arith.constant 0 : index
    %c0_140 = arith.constant 0 : index
    %129 = vector.load %arg1[%c3_137, %c0_138, %c0_139, %c0_140] : memref<4x9x9x4xbf16, #tpu.memory_space<vmem>>, vector<1x8x8x4xbf16>
    %130 = vector.shape_cast %129 : vector<1x8x8x4xbf16> to vector<8x8x4xbf16>
    %131 = vector.shape_cast %130 : vector<8x8x4xbf16> to vector<64x4xbf16>
    %c0_141 = arith.constant 0 : index
    %c0_142 = arith.constant 0 : index
    %132 = vector.load %arg6[%c0_141, %c0_142] : memref<4x128xbf16, #tpu.memory_space<vmem>>, vector<4x128xbf16>
    %cst_143 = arith.constant dense<0.000000e+00> : vector<64x128xf32>
    %133 = tpu.matmul %131, %132, %cst_143 {dimension_numbers = #tpu.dot_dimension_numbers<[1], [0], [0], [1], [0, 0, 1, 1], [], []>} : vector<64x4xbf16>, vector<4x128xbf16>, vector<64x128xf32> -> vector<64x128xf32>
    %c0_144 = arith.constant 0 : index
    %c0_145 = arith.constant 0 : index
    %134 = vector.load %arg7[%c0_144, %c0_145] : memref<1x128xf32, #tpu.memory_space<vmem>>, vector<1x128xf32>
    %135 = vector.broadcast %134 : vector<1x128xf32> to vector<64x128xf32>
    %136 = arith.addf %133, %135 : vector<64x128xf32>
    %c0_146 = arith.constant 0 : index
    %c0_147 = arith.constant 0 : index
    %137 = vector.load %arg5[%c0_146, %c0_147] : memref<1x128xf32, #tpu.memory_space<vmem>>, vector<1x128xf32>
    %138 = vector.broadcast %137 : vector<1x128xf32> to vector<64x128xf32>
    %139 = arith.addf %128, %138 : vector<64x128xf32>
    %140 = arith.addf %139, %136 : vector<64x128xf32>
    %cst_148 = arith.constant 0.000000e+00 : f32
    %141 = vector.broadcast %cst_148 : f32 to vector<64x128xf32>
    %142 = arith.maximumf %140, %141 : vector<64x128xf32>
    %143 = vector.shape_cast %142 : vector<64x128xf32> to vector<8x8x128xf32>
    %144 = arith.truncf %143 : vector<8x8x128xf32> to vector<8x8x128xbf16>
    %c0_149 = arith.constant 0 : index
    %c0_150 = arith.constant 0 : index
    %c0_151 = arith.constant 0 : index
    %c0_152 = arith.constant 0 : index
    %145 = vector.load %arg8[%c0_149, %c0_150, %c0_151, %c0_152] : memref<1x8x8x128xbf16, #tpu.memory_space<vmem>>, vector<1x8x8x128xbf16>
    %146 = vector.shape_cast %145 : vector<1x8x8x128xbf16> to vector<8x8x128xbf16>
    %147 = vector.shape_cast %144 : vector<8x8x128xbf16> to vector<1x8x8x128xbf16>
    tpu.vector_store %arg8[%c0_149, %c0_150, %c0_151, %c0_152], %147 {strides = array<i32>} : memref<1x8x8x128xbf16, #tpu.memory_space<vmem>>, vector<1x8x8x128xbf16>,
    return
  }
  func.func @transform_0(%arg0: i32) -> (i32, i32, i32, i32) {
    %c0_i32 = arith.constant 0 : i32
    %c0_i32_0 = arith.constant 0 : i32
    %c0_i32_1 = arith.constant 0 : i32
    %c0_i32_2 = arith.constant 0 : i32
    return %arg0, %c0_i32, %c0_i32_0, %c0_i32_1 : i32, i32, i32, i32
  }
  func.func @transform_1(%arg0: i32) -> (i32, i32, i32) {
    %c0_i32 = arith.constant 0 : i32
    %c0_i32_0 = arith.constant 0 : i32
    %c0_i32_1 = arith.constant 0 : i32
    %c0_i32_2 = arith.constant 0 : i32
    return %c0_i32, %c0_i32_0, %c0_i32_1 : i32, i32, i32
  }
  func.func @transform_2(%arg0: i32) -> (i32, i32) {
    %c0_i32 = arith.constant 0 : i32
    %c0_i32_0 = arith.constant 0 : i32
    %c0_i32_1 = arith.constant 0 : i32
    return %c0_i32, %c0_i32_0 : i32, i32
  }
  func.func @transform_3(%arg0: i32) -> (i32, i32, i32) {
    %c0_i32 = arith.constant 0 : i32
    %c0_i32_0 = arith.constant 0 : i32
    %c0_i32_1 = arith.constant 0 : i32
    %c0_i32_2 = arith.constant 0 : i32
    return %c0_i32, %c0_i32_0, %c0_i32_1 : i32, i32, i32
  }
  func.func @transform_4(%arg0: i32) -> (i32, i32) {
    %c0_i32 = arith.constant 0 : i32
    %c0_i32_0 = arith.constant 0 : i32
    %c0_i32_1 = arith.constant 0 : i32
    return %c0_i32, %c0_i32_0 : i32, i32
  }
  func.func @transform_5(%arg0: i32) -> (i32, i32) {
    %c0_i32 = arith.constant 0 : i32
    %c0_i32_0 = arith.constant 0 : i32
    %c0_i32_1 = arith.constant 0 : i32
    return %c0_i32, %c0_i32_0 : i32, i32
  }
  func.func @transform_6(%arg0: i32) -> (i32, i32) {
    %c0_i32 = arith.constant 0 : i32
    %c0_i32_0 = arith.constant 0 : i32
    %c0_i32_1 = arith.constant 0 : i32
    return %c0_i32, %c0_i32_0 : i32, i32
  }
  func.func @transform_7(%arg0: i32) -> (i32, i32, i32, i32) {
    %c0_i32 = arith.constant 0 : i32
    %c0_i32_0 = arith.constant 0 : i32
    %c0_i32_1 = arith.constant 0 : i32
    %c0_i32_2 = arith.constant 0 : i32
    return %arg0, %c0_i32, %c0_i32_0, %c0_i32_1 : i32, i32, i32, i32
  }
}

</mosaic_0001>

<llo_original>
// kernel: a_call__.1
$region0: #{a_call__.1}
  #allocation0 [shape = 'u32[]', space=smem, size = 0x4, offset = 0x4, fixed_abs, tag = 'smem constant byte address 0x4 - core index']
  #allocation1 [shape = 'u32[144,128]{1,0:T(1,128)}', space=vmem, size = 0x12000, scoped, tag = 'internal scratch']
  #allocation2 [shape = 'bf16[10,10,128]{2,1,0:T(8,128)(2,1)}', space=vmem, size = 0xa000, scoped, tag = 'scratch operand']
  %s0 = inlined_call_operand.vmem [shape: bf16[8,9,9,4], index: 0, kind: input, shape index: {}]
  %s1 = inlined_call_operand.vmem [shape: bf16[9,4,128], index: 1, kind: input, shape index: {}]
  %s2 = inlined_call_operand.vmem [shape: f32[1,128], index: 2, kind: input, shape index: {}]
  %s3 = inlined_call_operand.vmem [shape: bf16[9,128,128], index: 3, kind: input, shape index: {}]
  %s4 = inlined_call_operand.vmem [shape: f32[1,128], index: 4, kind: input, shape index: {}]
  %s5 = inlined_call_operand.vmem [shape: bf16[4,128], index: 5, kind: input, shape index: {}]
  %s6 = inlined_call_operand.vmem [shape: f32[1,128], index: 6, kind: input, shape index: {}]
  %s7 = inlined_call_operand.vmem [shape: bf16[2,8,8,128], index: 7, kind: output, shape index: {}]
  %s8 = sld [smem:[#allocation0]]
  $region61: #{a_call__.1} parent=0
    _
  %s10 = ssub.s32 1, %s8
  %s11 = scalar_select 0, %s10, %s8
  loop: start=0, step=1, limit=4
  $region2: #{a_call__.1} parent=0 // loop_pre_header
    _
  $region3: #{a_call__.1} parent=0 // loop_header
    %s13 = sphi 0, %s17
    %p14 = scmp.ge.s32.totalorder %s13, 4
    %s23 = sphi 0, %s25
    %s26 = sphi 0, %s23
    %s27 = sphi 0, %s26
    %s43 = sphi 0, %s27
    %s47 = sphi 0, %s47
    %s49 = sphi 0, %s47
    %s50 = sphi 0, %s49
    %s64 = sphi 0, %s50
    %s68 = sphi 0, %s68
    %s70 = sphi 0, %s68
    %s71 = sphi 0, %s70
    %s85 = sphi 0, %s71
    %s89 = sphi 0, %s89
    %s91 = sphi 0, %s89
    %s92 = sphi 0, %s91
    %s106 = sphi 0, %s92
    %s110 = sphi 0, %s110
    %s112 = sphi 0, %s110
    %s113 = sphi 0, %s112
    %s127 = sphi 0, %s113
    %s131 = sphi 0, %s131
    %s133 = sphi 0, %s131
    %s134 = sphi 0, %s133
    %s148 = sphi 0, %s134
    %s152 = sphi 0, %s152
    %s154 = sphi 0, %s152
    %s155 = sphi 0, %s154
    %s169 = sphi 0, %s155
    %s175 = sphi 0, %s177
    %s178 = sphi 0, %s175
    %s179 = sphi 0, %s178
    %s195 = sphi 0, %s179
  $region4: #{a_call__.1} parent=0 // loop_header_branch
    %16 = sbr.rel (%p14) target = $region8
  $region5: #{a_call__.1} parent=0 // loop_body
    %s18 = ssub.s32 %s13, 1
    %s19 = ssub.s32 %s13, 2
    %s20 = sadd.s32 %s13, 1
    %s21 = ssub.s32 %s13, %s20
    %p22 = scmp.eq.s32.totalorder %s21, 0
    %s24 = sadd.s32 %s23, 1
    %s25 = scalar_select %p22, %s23, %s24
    %p28 = pneg %p22
    %p29 = scmp.eq.s32.totalorder %s13, 1
    %p30 = por %p28, %p29
    %p31 = scmp.ne.s32.totalorder %s23, %s26
    %p32 = scmp.eq.s32.totalorder %s13, 0
    %p33 = por %p31, %p32
    %p34 = scmp.ne.s32.totalorder %s23, %s26
    %p35 = scmp.eq.s32.totalorder %s18, 1
    %p36 = por %p34, %p35
    %p37 = scmp.ne.s32.totalorder %s26, %s27
    %p38 = scmp.eq.s32.totalorder %s18, 0
    %p39 = por %p37, %p38
    %p40 = scmp.ne.s32.totalorder %s26, %s27
    %p41 = scmp.eq.s32.totalorder %s19, 1
    %p42 = por %p40, %p41
    %p44 = scmp.ne.s32.totalorder %s27, %s43
    %p45 = scmp.eq.s32.totalorder %s19, 0
    %p46 = por %p44, %p45
    %s48 = sadd.s32 %s47, 1
    %p51 = scmp.eq.s32.totalorder %s13, 1
    %p52 = scmp.ne.s32.totalorder %s47, %s49
    %p53 = scmp.eq.s32.totalorder %s13, 0
    %p54 = por %p52, %p53
    %p55 = scmp.ne.s32.totalorder %s47, %s49
    %p56 = scmp.eq.s32.totalorder %s18, 1
    %p57 = por %p55, %p56
    %p58 = scmp.ne.s32.totalorder %s49, %s50
    %p59 = scmp.eq.s32.totalorder %s18, 0
    %p60 = por %p58, %p59
    %p61 = scmp.ne.s32.totalorder %s49, %s50
    %p62 = scmp.eq.s32.totalorder %s19, 1
    %p63 = por %p61, %p62
    %p65 = scmp.ne.s32.totalorder %s50, %s64
    %p66 = scmp.eq.s32.totalorder %s19, 0
    %p67 = por %p65, %p66
    %s69 = sadd.s32 %s68, 1
    %p72 = scmp.eq.s32.totalorder %s13, 1
    %p73 = scmp.ne.s32.totalorder %s68, %s70
    %p74 = scmp.eq.s32.totalorder %s13, 0
    %p75 = por %p73, %p74
    %p76 = scmp.ne.s32.totalorder %s68, %s70
    %p77 = scmp.eq.s32.totalorder %s18, 1
    %p78 = por %p76, %p77
    %p79 = scmp.ne.s32.totalorder %s70, %s71
    %p80 = scmp.eq.s32.totalorder %s18, 0
    %p81 = por %p79, %p80
    %p82 = scmp.ne.s32.totalorder %s70, %s71
    %p83 = scmp.eq.s32.totalorder %s19, 1
    %p84 = por %p82, %p83
    %p86 = scmp.ne.s32.totalorder %s71, %s85
    %p87 = scmp.eq.s32.totalorder %s19, 0
    %p88 = por %p86, %p87
    %s90 = sadd.s32 %s89, 1
    %p93 = scmp.eq.s32.totalorder %s13, 1
    %p94 = scmp.ne.s32.totalorder %s89, %s91
    %p95 = scmp.eq.s32.totalorder %s13, 0
    %p96 = por %p94, %p95
    %p97 = scmp.ne.s32.totalorder %s89, %s91
    %p98 = scmp.eq.s32.totalorder %s18, 1
    %p99 = por %p97, %p98
    %p100 = scmp.ne.s32.totalorder %s91, %s92
    %p101 = scmp.eq.s32.totalorder %s18, 0
    %p102 = por %p100, %p101
    %p103 = scmp.ne.s32.totalorder %s91, %s92
    %p104 = scmp.eq.s32.totalorder %s19, 1
    %p105 = por %p103, %p104
    %p107 = scmp.ne.s32.totalorder %s92, %s106
    %p108 = scmp.eq.s32.totalorder %s19, 0
    %p109 = por %p107, %p108
    %s111 = sadd.s32 %s110, 1
    %p114 = scmp.eq.s32.totalorder %s13, 1
    %p115 = scmp.ne.s32.totalorder %s110, %s112
    %p116 = scmp.eq.s32.totalorder %s13, 0
    %p117 = por %p115, %p116
    %p118 = scmp.ne.s32.totalorder %s110, %s112
    %p119 = scmp.eq.s32.totalorder %s18, 1
    %p120 = por %p118, %p119
    %p121 = scmp.ne.s32.totalorder %s112, %s113
    %p122 = scmp.eq.s32.totalorder %s18, 0
    %p123 = por %p121, %p122
    %p124 = scmp.ne.s32.totalorder %s112, %s113
    %p125 = scmp.eq.s32.totalorder %s19, 1
    %p126 = por %p124, %p125
    %p128 = scmp.ne.s32.totalorder %s113, %s127
    %p129 = scmp.eq.s32.totalorder %s19, 0
    %p130 = por %p128, %p129
    %s132 = sadd.s32 %s131, 1
    %p135 = scmp.eq.s32.totalorder %s13, 1
    %p136 = scmp.ne.s32.totalorder %s131, %s133
    %p137 = scmp.eq.s32.totalorder %s13, 0
    %p138 = por %p136, %p137
    %p139 = scmp.ne.s32.totalorder %s131, %s133
    %p140 = scmp.eq.s32.totalorder %s18, 1
    %p141 = por %p139, %p140
    %p142 = scmp.ne.s32.totalorder %s133, %s134
    %p143 = scmp.eq.s32.totalorder %s18, 0
    %p144 = por %p142, %p143
    %p145 = scmp.ne.s32.totalorder %s133, %s134
    %p146 = scmp.eq.s32.totalorder %s19, 1
    %p147 = por %p145, %p146
    %p149 = scmp.ne.s32.totalorder %s134, %s148
    %p150 = scmp.eq.s32.totalorder %s19, 0
    %p151 = por %p149, %p150
    %s153 = sadd.s32 %s152, 1
    %p156 = scmp.eq.s32.totalorder %s13, 1
    %p157 = scmp.ne.s32.totalorder %s152, %s154
    %p158 = scmp.eq.s32.totalorder %s13, 0
    %p159 = por %p157, %p158
    %p160 = scmp.ne.s32.totalorder %s152, %s154
    %p161 = scmp.eq.s32.totalorder %s18, 1
    %p162 = por %p160, %p161
    %p163 = scmp.ne.s32.totalorder %s154, %s155
    %p164 = scmp.eq.s32.totalorder %s18, 0
    %p165 = por %p163, %p164
    %p166 = scmp.ne.s32.totalorder %s154, %s155
    %p167 = scmp.eq.s32.totalorder %s19, 1
    %p168 = por %p166, %p167
    %p170 = scmp.ne.s32.totalorder %s155, %s169
    %p171 = scmp.eq.s32.totalorder %s19, 0
    %p172 = por %p170, %p171
    %s173 = ssub.s32 %s13, %s20
    %p174 = scmp.eq.s32.totalorder %s173, 0
    %s176 = sadd.s32 %s175, 1
    %s177 = scalar_select %p174, %s175, %s176
    %p180 = pneg %p174
    %p181 = scmp.eq.s32.totalorder %s13, 1
    %p182 = por %p180, %p181
    %p183 = scmp.ne.s32.totalorder %s175, %s178
    %p184 = scmp.eq.s32.totalorder %s13, 0
    %p185 = por %p183, %p184
    %p186 = scmp.ne.s32.totalorder %s175, %s178
    %p187 = scmp.eq.s32.totalorder %s18, 1
    %p188 = por %p186, %p187
    %p189 = scmp.ne.s32.totalorder %s178, %s179
    %p190 = scmp.eq.s32.totalorder %s18, 0
    %p191 = por %p189, %p190
    %p192 = scmp.ne.s32.totalorder %s178, %s179
    %p193 = scmp.eq.s32.totalorder %s19, 1
    %p194 = por %p192, %p193
    %p196 = scmp.ne.s32.totalorder %s179, %s195
    %p197 = scmp.eq.s32.totalorder %s19, 0
    %p198 = por %p196, %p197
    %p199 = scmp.le.s32.totalorder 1, %s13
    %p200 = scmp.lt.s32.totalorder %s13, 3
    %p201 = pnand %p199, %p200
    %p202 = pneg %p201
    // Predicated region
    $region9: #{a_call__.1} parent=5 // pred_check
      _
    $region10: #{a_call__.1} parent=5 // pred_check_branch
      %204 = sbr.rel (%p201) target = $region12
    $region11: #{a_call__.1} parent=5 // pred_region
      %s205 = ssub.s32 %s13, 1
      // Predicated region
      $region13: #{a_call__.1} parent=11 // pred_check
        %p206 = pneg %p60
      $region14: #{a_call__.1} parent=11 // pred_check_branch
        %208 = sbr.rel (%p206) target = $region16
      $region15: #{a_call__.1} parent=11 // pred_region
        _
      $region16: #{a_call__.1} parent=11 // pred_fallthru
        _
      // Predicated region
      $region17: #{a_call__.1} parent=11 // pred_check
        %p209 = pneg %p81
      $region18: #{a_call__.1} parent=11 // pred_check_branch
        %211 = sbr.rel (%p209) target = $region20
      $region19: #{a_call__.1} parent=11 // pred_region
        _
      $region20: #{a_call__.1} parent=11 // pred_fallthru
        _
      // Predicated region
      $region21: #{a_call__.1} parent=11 // pred_check
        %p212 = pneg %p102
      $region22: #{a_call__.1} parent=11 // pred_check_branch
        %214 = sbr.rel (%p212) target = $region24
      $region23: #{a_call__.1} parent=11 // pred_region
        _
      $region24: #{a_call__.1} parent=11 // pred_fallthru
        _
      // Predicated region
      $region25: #{a_call__.1} parent=11 // pred_check
        %p215 = pneg %p123
      $region26: #{a_call__.1} parent=11 // pred_check_branch
        %217 = sbr.rel (%p215) target = $region28
      $region27: #{a_call__.1} parent=11 // pred_region
        _
      $region28: #{a_call__.1} parent=11 // pred_fallthru
        _
      // Predicated region
      $region29: #{a_call__.1} parent=11 // pred_check
        %p218 = pneg %p144
      $region30: #{a_call__.1} parent=11 // pred_check_branch
        %220 = sbr.rel (%p218) target = $region32
      $region31: #{a_call__.1} parent=11 // pred_region
        _
      $region32: #{a_call__.1} parent=11 // pred_fallthru
        _
      // Predicated region
      $region33: #{a_call__.1} parent=11 // pred_check
        %p221 = pneg %p165
      $region34: #{a_call__.1} parent=11 // pred_check_branch
        %223 = sbr.rel (%p221) target = $region36
      $region35: #{a_call__.1} parent=11 // pred_region
        _
      $region36: #{a_call__.1} parent=11 // pred_fallthru
        _
    $region12: #{a_call__.1} parent=5 // pred_fallthru
      _
    %p224 = scmp.lt.s32.totalorder %s13, 2
    // Predicated region
    $region37: #{a_call__.1} parent=5 // pred_check
      %p225 = pneg %p224
    $region38: #{a_call__.1} parent=5 // pred_check_branch
      %227 = sbr.rel (%p225) target = $region40
    $region39: #{a_call__.1} parent=5 // pred_region
      // Predicated region
      $region41: #{a_call__.1} parent=39 // pred_check
        %p228 = pneg %p33
      $region42: #{a_call__.1} parent=39 // pred_check_branch
        %230 = sbr.rel (%p228) target = $region44
      $region43: #{a_call__.1} parent=39 // pred_region
        %s231 = smul.u32 4, %s13
        %p232 = scmp.lt.s32.totalorder %s231, 7
        %s233 = scalar_select %p232, %s231, 7
        %s234 = smul.addr %s233, 18
        %s235 = smul.addr %s234, 4
        %s236 = scalar_lea.vmem %s0, %s235
        %s237 = smul.u32 4, %s13
      $region44: #{a_call__.1} parent=39 // pred_fallthru
        _
    $region40: #{a_call__.1} parent=5 // pred_fallthru
      _
    %p238 = scmp.le.s32.totalorder 1, %s13
    %p239 = scmp.lt.s32.totalorder %s13, 3
    %p240 = pnand %p238, %p239
    %p241 = pneg %p240
    // Predicated region
    $region45: #{a_call__.1} parent=5 // pred_check
      _
    $region46: #{a_call__.1} parent=5 // pred_check_branch
      %243 = sbr.rel (%p240) target = $region48
    $region47: #{a_call__.1} parent=5 // pred_region
      %s244 = ssub.s32 %s13, 1
      %s245 = smul.u32 4, %s18
      %p246 = scmp.lt.s32.totalorder %s245, 7
      %s247 = scalar_select %p246, %s245, 7
      %s248 = smul.addr %s247, 18
      %s249 = smul.addr %s248, 4
      %s250 = scalar_lea.vmem %s0, %s249
      %p251 = pneg %p39
      %p252 = pneg %p36
      %p253 = pneg %p60
      %p254 = pneg %p57
      %p255 = pneg %p81
      %p256 = pneg %p78
      %p257 = pneg %p102
      %p258 = pneg %p99
      %p259 = pneg %p123
      %p260 = pneg %p120
      %p261 = pneg %p144
      %p262 = pneg %p141
      %p263 = pneg %p165
      %p264 = pneg %p162
      %p265 = pneg %p191
      %p266 = pneg %p188
      %p267 = scmp.lt.s32.totalorder %s18, 1
      %s268 = scalar_select %p267, %s18, 1
      %s269 = smul.addr %s268, 8
      %s270 = smul.addr %s269, 4
      %s271 = scalar_lea.vmem %s7, %s270
      %s272 = smul.u32 4, %s18
      %p273 = scmp.lt.s32.totalorder %s272, 7
      %s274 = scalar_select %p273, %s272, 7
      %s275 = smul.addr %s274, 18
      %s276 = smul.addr %s275, 4
      %s277 = scalar_lea.vmem %s0, %s276
      %s278 = smul.u32 4, %s18
      %p279 = scmp.lt.s32.totalorder %s18, 1
      %s280 = scalar_select %p279, %s18, 1
      %s281 = smul.addr %s280, 8
      %s282 = smul.addr %s281, 4
      %s283 = scalar_lea.vmem %s7, %s282
      %v285 = vld [vmem:[%s277] sm:$0xf]
      %v286 = vld [vmem:[%s277 + $0x8] sm:$0xf]
      %v287 = vld [vmem:[%s277 + $0x10] sm:$0xf]
      %v288 = vld [vmem:[%s277 + $0x18] sm:$0xf]
      %v289 = vld [vmem:[%s277 + $0x20] sm:$0xf]
      %v290 = vld [vmem:[%s277 + $0x28] sm:$0xf]
      %v291 = vld [vmem:[%s277 + $0x30] sm:$0xf]
      %v292 = vld [vmem:[%s277 + $0x38] sm:$0xf]
      %v293 = vld [vmem:[%s1] sm:$0x3]
      %s294 = scalar_lea.vmem %s277, 72
      %v295 = vld [vmem:[%s294] sm:$0xf]
      %v296 = vld [vmem:[%s294 + $0x8] sm:$0xf]
      %v297 = vld [vmem:[%s294 + $0x10] sm:$0xf]
      %v298 = vld [vmem:[%s294 + $0x18] sm:$0xf]
      %v299 = vld [vmem:[%s294 + $0x20] sm:$0xf]
      %v300 = vld [vmem:[%s294 + $0x28] sm:$0xf]
      %v301 = vld [vmem:[%s294 + $0x30] sm:$0xf]
      %v302 = vld [vmem:[%s294 + $0x38] sm:$0xf]
      %s303 = scalar_lea.vmem %s1, 2
      %v304 = vld [vmem:[%s303] sm:$0x3]
      %v313 = vunpack.c.l.b16 %v295
      %v314 = vunpack.c.l.b16 %v296
      %v315 = vunpack.c.l.b16 %v297
      %v316 = vunpack.c.l.b16 %v298
      %v317 = vunpack.c.l.b16 %v299
      %v318 = vunpack.c.l.b16 %v300
      %v319 = vunpack.c.l.b16 %v301
      %v320 = vunpack.c.l.b16 %v302
      %v321 = vpack.c.b16 %v314, %v313
      %v322 = vpack.c.b16 %v316, %v315
      %v323 = vpack.c.b16 %v318, %v317
      %v324 = vpack.c.b16 %v320, %v319
      %vm325 = vcmask 31744
      %v327 = vsel %vm325, %v321, 0
      %v330 = vsel %vm325, %v322, 0
      %v333 = vsel %vm325, %v323, 0
      %v336 = vsel %vm325, %v324, 0
      %vm338 = vcmask 1041408
      %v340 = vsel %vm338, %v304, 0
      %342 = vmatprep.subr.bf16.mxu0 0
      %343 = vmatpush1.bf16.msra.mxu0 %v340
      %344 = vmatprep.subr.bf16.mxu0 0
      %345 = vmatpush1.bf16.msra.mxu0 0
      %346 = vmatprep.subr.bf16.mxu0 0
      %347 = vmatpush1.bf16.msra.mxu0 0
      %348 = vmatprep.subr.bf16.mxu0 0
      %349 = vmatpush1.bf16.msra.mxu0 0
      %350 = vmatprep.subr.bf16.mxu0 0
      %351 = vmatpush1.bf16.msra.mxu0 0
      %352 = vmatprep.subr.bf16.mxu0 0
      %353 = vmatpush1.bf16.msra.mxu0 0
      %354 = vmatprep.subr.bf16.mxu0 0
      %355 = vmatpush1.bf16.msra.mxu0 0
      %356 = vmatprep.subr.bf16.mxu0 0
      %357 = vmatpush1.bf16.msra.mxu0 0
      %358 = vmatprep.subr.bf16.mxu0 0
      %359 = vmatpush1.bf16.msra.mxu0 0
      %360 = vmatprep.subr.bf16.mxu0 0
      %361 = vmatpush1.bf16.msra.mxu0 0
      %362 = vmatprep.subr.bf16.mxu0 0
      %363 = vmatpush1.bf16.msra.mxu0 0
      %364 = vmatprep.subr.bf16.mxu0 0
      %365 = vmatpush1.bf16.msra.mxu0 0
      %366 = vmatprep.subr.bf16.mxu0 0
      %367 = vmatpush1.bf16.msra.mxu0 0
      %368 = vmatprep.subr.bf16.mxu0 0
      %369 = vmatpush1.bf16.msra.mxu0 0
      %370 = vmatprep.subr.bf16.mxu0 0
      %371 = vmatpush1.bf16.msra.mxu0 0
      %372 = vmatprep.subr.bf16.mxu0 0
      %373 = vmatpush1.bf16.msra.mxu0 0
      %374 = vmatprep.mubr.bf16.mxu0 0
      %375 = vmatmul.mubr.bf16.gmra.mrb[0].mxu0 %v327
      %v376 = vpop.f32.mrb[0].mxu0
      %v377 = vadd.f32 0.0, %v376
      %v378 = vpop.f32.mrb[0].mxu0
      %v379 = vpop.f32.mrb[0].mxu0
      %v380 = vadd.f32 0.0, %v379
      %v381 = vpop.f32.mrb[0].mxu0
      %382 = vmatprep.mubr.bf16.mxu0 0
      %383 = vmatmul.mubr.bf16.gmra.mrb[0].mxu0 %v330
      %v384 = vpop.f32.mrb[0].mxu0
      %v385 = vadd.f32 0.0, %v384
      %v386 = vpop.f32.mrb[0].mxu0
      %v387 = vpop.f32.mrb[0].mxu0
      %v388 = vadd.f32 0.0, %v387
      %v389 = vpop.f32.mrb[0].mxu0
      %390 = vmatprep.mubr.bf16.mxu0 0
      %391 = vmatmul.mubr.bf16.gmra.mrb[0].mxu0 %v333
      %v392 = vpop.f32.mrb[0].mxu0
      %v393 = vadd.f32 0.0, %v392
      %v394 = vpop.f32.mrb[0].mxu0
      %v395 = vpop.f32.mrb[0].mxu0
      %v396 = vadd.f32 0.0, %v395
      %v397 = vpop.f32.mrb[0].mxu0
      %398 = vmatprep.mubr.bf16.mxu0 0
      %399 = vmatmul.mubr.bf16.gmra.mrb[0].mxu0 %v336
      %v400 = vpop.f32.mrb[0].mxu0
      %v401 = vadd.f32 0.0, %v400
      %v402 = vpop.f32.mrb[0].mxu0
      %v403 = vpop.f32.mrb[0].mxu0
      %v404 = vadd.f32 0.0, %v403
      %v405 = vpop.f32.mrb[0].mxu0
      %406 = vdwg.mxu0
      %v415 = vunpack.c.l.b16 %v285
      %v416 = vunpack.c.l.b16 %v286
      %v417 = vunpack.c.l.b16 %v287
      %v418 = vunpack.c.l.b16 %v288
      %v419 = vunpack.c.l.b16 %v289
      %v420 = vunpack.c.l.b16 %v290
      %v421 = vunpack.c.l.b16 %v291
      %v422 = vunpack.c.l.b16 %v292
      %v423 = vpack.c.b16 %v416, %v415
      %v424 = vpack.c.b16 %v418, %v417
      %v425 = vpack.c.b16 %v420, %v419
      %v426 = vpack.c.b16 %v422, %v421
      %v428 = vsel %vm325, %v423, 0
      %v431 = vsel %vm325, %v424, 0
      %v434 = vsel %vm325, %v425, 0
      %v437 = vsel %vm325, %v426, 0
      %v440 = vsel %vm338, %v293, 0
      %442 = vmatprep.subr.bf16.mxu0 0
      %443 = vmatpush1.bf16.msra.mxu0 %v440
      %444 = vmatprep.subr.bf16.mxu0 0
      %445 = vmatpush1.bf16.msra.mxu0 0
      %446 = vmatprep.subr.bf16.mxu0 0
      %447 = vmatpush1.bf16.msra.mxu0 0
      %448 = vmatprep.subr.bf16.mxu0 0
      %449 = vmatpush1.bf16.msra.mxu0 0
      %450 = vmatprep.subr.bf16.mxu0 0
      %451 = vmatpush1.bf16.msra.mxu0 0
      %452 = vmatprep.subr.bf16.mxu0 0
      %453 = vmatpush1.bf16.msra.mxu0 0
      %454 = vmatprep.subr.bf16.mxu0 0
      %455 = vmatpush1.bf16.msra.mxu0 0
      %456 = vmatprep.subr.bf16.mxu0 0
      %457 = vmatpush1.bf16.msra.mxu0 0
      %458 = vmatprep.subr.bf16.mxu0 0
      %459 = vmatpush1.bf16.msra.mxu0 0
      %460 = vmatprep.subr.bf16.mxu0 0
      %461 = vmatpush1.bf16.msra.mxu0 0
      %462 = vmatprep.subr.bf16.mxu0 0
      %463 = vmatpush1.bf16.msra.mxu0 0
      %464 = vmatprep.subr.bf16.mxu0 0
      %465 = vmatpush1.bf16.msra.mxu0 0
      %466 = vmatprep.subr.bf16.mxu0 0
      %467 = vmatpush1.bf16.msra.mxu0 0
      %468 = vmatprep.subr.bf16.mxu0 0
      %469 = vmatpush1.bf16.msra.mxu0 0
      %470 = vmatprep.subr.bf16.mxu0 0
      %471 = vmatpush1.bf16.msra.mxu0 0
      %472 = vmatprep.subr.bf16.mxu0 0
      %473 = vmatpush1.bf16.msra.mxu0 0
      %474 = vmatprep.mubr.bf16.mxu0 0
      %475 = vmatmul.mubr.bf16.gmra.mrb[0].mxu0 %v428
      %v476 = vpop.f32.mrb[0].mxu0
      %v477 = vadd.f32 %v377, %v476
      %v478 = vpop.f32.mrb[0].mxu0
      %v479 = vpop.f32.mrb[0].mxu0
      %v480 = vadd.f32 %v380, %v479
      %v481 = vpop.f32.mrb[0].mxu0
      %482 = vmatprep.mubr.bf16.mxu0 0
      %483 = vmatmul.mubr.bf16.gmra.mrb[0].mxu0 %v431
      %v484 = vpop.f32.mrb[0].mxu0
      %v485 = vadd.f32 %v385, %v484
      %v486 = vpop.f32.mrb[0].mxu0
      %v487 = vpop.f32.mrb[0].mxu0
      %v488 = vadd.f32 %v388, %v487
      %v489 = vpop.f32.mrb[0].mxu0
      %490 = vmatprep.mubr.bf16.mxu0 0
      %491 = vmatmul.mubr.bf16.gmra.mrb[0].mxu0 %v434
      %v492 = vpop.f32.mrb[0].mxu0
      %v493 = vadd.f32 %v393, %v492
      %v494 = vpop.f32.mrb[0].mxu0
      %v495 = vpop.f32.mrb[0].mxu0
      %v496 = vadd.f32 %v396, %v495
      %v497 = vpop.f32.mrb[0].mxu0
      %498 = vmatprep.mubr.bf16.mxu0 0
      %499 = vmatmul.mubr.bf16.gmra.mrb[0].mxu0 %v437
      %v500 = vpop.f32.mrb[0].mxu0
      %v501 = vadd.f32 %v401, %v500
      %v502 = vpop.f32.mrb[0].mxu0
      %v503 = vpop.f32.mrb[0].mxu0
      %v504 = vadd.f32 %v404, %v503
      %v505 = vpop.f32.mrb[0].mxu0
      %506 = vdwg.mxu0
      %v507 = vld [vmem:[%s277] sm:$0xf]
      %v508 = vld [vmem:[%s277 + $0x4] sm:$0x1]
      %v509 = vld [vmem:[%s277 + $0x8] sm:$0xf]
      %v510 = vld [vmem:[%s277 + $0xc] sm:$0x1]
      %v511 = vld [vmem:[%s277 + $0x10] sm:$0xf]
      %v512 = vld [vmem:[%s277 + $0x14] sm:$0x1]
      %v513 = vld [vmem:[%s277 + $0x18] sm:$0xf]
      %v514 = vld [vmem:[%s277 + $0x1c] sm:$0x1]
      %v515 = vld [vmem:[%s277 + $0x20] sm:$0xf]
      %v516 = vld [vmem:[%s277 + $0x24] sm:$0x1]
      %v517 = vld [vmem:[%s277 + $0x28] sm:$0xf]
      %v518 = vld [vmem:[%s277 + $0x2c] sm:$0x1]
      %v519 = vld [vmem:[%s277 + $0x30] sm:$0xf]
      %v520 = vld [vmem:[%s277 + $0x34] sm:$0x1]
      %v521 = vld [vmem:[%s277 + $0x38] sm:$0xf]
      %v522 = vld [vmem:[%s277 + $0x3c] sm:$0x1]
      %vm523 = vsmask.f32 3328
      %vm524 = vsmask.f32 7440
      %vm525 = vmor %vm523, %vm524
      %v527 = vshrl.u32 %v507, 16
      %v529 = vrot.slane %v527, 4
      %v530 = vshll.u32 %v507, 16
      %v532 = vrot.slane %v530, 5
      %v533 = vor.u32 %v529, %v532
      %v534 = vrot.slane %v533, 4
      %v536 = vshll.u32 %v508, 16
      %v538 = vrot.slane %v536, 5
      %v539 = vsel %vm525, %v534, %v538
      %v541 = vshrl.u32 %v509, 16
      %v543 = vrot.slane %v541, 4
      %v544 = vshll.u32 %v509, 16
      %v546 = vrot.slane %v544, 5
      %v547 = vor.u32 %v543, %v546
      %v548 = vrot.slane %v547, 4
      %v550 = vshll.u32 %v510, 16
      %v552 = vrot.slane %v550, 5
      %v553 = vsel %vm525, %v548, %v552
      %v555 = vshrl.u32 %v511, 16
      %v557 = vrot.slane %v555, 4
      %v558 = vshll.u32 %v511, 16
      %v560 = vrot.slane %v558, 5
      %v561 = vor.u32 %v557, %v560
      %v562 = vrot.slane %v561, 4
      %v564 = vshll.u32 %v512, 16
      %v566 = vrot.slane %v564, 5
      %v567 = vsel %vm525, %v562, %v566
      %v569 = vshrl.u32 %v513, 16
      %v571 = vrot.slane %v569, 4
      %v572 = vshll.u32 %v513, 16
      %v574 = vrot.slane %v572, 5
      %v575 = vor.u32 %v571, %v574
      %v576 = vrot.slane %v575, 4
      %v578 = vshll.u32 %v514, 16
      %v580 = vrot.slane %v578, 5
      %v581 = vsel %vm525, %v576, %v580
      %v583 = vshrl.u32 %v515, 16
      %v585 = vrot.slane %v583, 4
      %v586 = vshll.u32 %v515, 16
      %v588 = vrot.slane %v586, 5
      %v589 = vor.u32 %v585, %v588
      %v590 = vrot.slane %v589, 4
      %v592 = vshll.u32 %v516, 16
      %v594 = vrot.slane %v592, 5
      %v595 = vsel %vm525, %v590, %v594
      %v597 = vshrl.u32 %v517, 16
      %v599 = vrot.slane %v597, 4
      %v600 = vshll.u32 %v517, 16
      %v602 = vrot.slane %v600, 5
      %v603 = vor.u32 %v599, %v602
      %v604 = vrot.slane %v603, 4
      %v606 = vshll.u32 %v518, 16
      %v608 = vrot.slane %v606, 5
      %v609 = vsel %vm525, %v604, %v608
      %v611 = vshrl.u32 %v519, 16
      %v613 = vrot.slane %v611, 4
      %v614 = vshll.u32 %v519, 16
      %v616 = vrot.slane %v614, 5
      %v617 = vor.u32 %v613, %v616
      %v618 = vrot.slane %v617, 4
      %v620 = vshll.u32 %v520, 16
      %v622 = vrot.slane %v620, 5
      %v623 = vsel %vm525, %v618, %v622
      %v625 = vshrl.u32 %v521, 16
      %v627 = vrot.slane %v625, 4
      %v628 = vshll.u32 %v521, 16
      %v630 = vrot.slane %v628, 5
      %v631 = vor.u32 %v627, %v630
      %v632 = vrot.slane %v631, 4
      %v634 = vshll.u32 %v522, 16
      %v636 = vrot.slane %v634, 5
      %v637 = vsel %vm525, %v632, %v636
      %s638 = scalar_lea.vmem %s1, 4
      %v639 = vld [vmem:[%s638] sm:$0x3]
      %v640 = vunpack.c.l.b16 %v539
      %v641 = vunpack.c.l.b16 %v553
      %v642 = vunpack.c.l.b16 %v567
      %v643 = vunpack.c.l.b16 %v581
      %v644 = vunpack.c.l.b16 %v595
      %v645 = vunpack.c.l.b16 %v609
      %v646 = vunpack.c.l.b16 %v623
      %v647 = vunpack.c.l.b16 %v637
      %v648 = vpack.c.b16 %v641, %v640
      %v649 = vpack.c.b16 %v643, %v642
      %v650 = vpack.c.b16 %v645, %v644
      %v651 = vpack.c.b16 %v647, %v646
      %v653 = vsel %vm325, %v648, 0
      %v656 = vsel %vm325, %v649, 0
      %v659 = vsel %vm325, %v650, 0
      %v662 = vsel %vm325, %v651, 0
      %v665 = vsel %vm338, %v639, 0
      %667 = vmatprep.subr.bf16.mxu0 0
      %668 = vmatpush1.bf16.msra.mxu0 %v665
      %669 = vmatprep.subr.bf16.mxu0 0
      %670 = vmatpush1.bf16.msra.mxu0 0
      %671 = vmatprep.subr.bf16.mxu0 0
      %672 = vmatpush1.bf16.msra.mxu0 0
      %673 = vmatprep.subr.bf16.mxu0 0
      %674 = vmatpush1.bf16.msra.mxu0 0
      %675 = vmatprep.subr.bf16.mxu0 0
      %676 = vmatpush1.bf16.msra.mxu0 0
      %677 = vmatprep.subr.bf16.mxu0 0
      %678 = vmatpush1.bf16.msra.mxu0 0
      %679 = vmatprep.subr.bf16.mxu0 0
      %680 = vmatpush1.bf16.msra.mxu0 0
      %681 = vmatprep.subr.bf16.mxu0 0
      %682 = vmatpush1.bf16.msra.mxu0 0
      %683 = vmatprep.subr.bf16.mxu0 0
      %684 = vmatpush1.bf16.msra.mxu0 0
      %685 = vmatprep.subr.bf16.mxu0 0
      %686 = vmatpush1.bf16.msra.mxu0 0
      %687 = vmatprep.subr.bf16.mxu0 0
      %688 = vmatpush1.bf16.msra.mxu0 0
      %689 = vmatprep.subr.bf16.mxu0 0
      %690 = vmatpush1.bf16.msra.mxu0 0
      %691 = vmatprep.subr.bf16.mxu0 0
      %692 = vmatpush1.bf16.msra.mxu0 0
      %693 = vmatprep.subr.bf16.mxu0 0
      %694 = vmatpush1.bf16.msra.mxu0 0
      %695 = vmatprep.subr.bf16.mxu0 0
      %696 = vmatpush1.bf16.msra.mxu0 0
      %697 = vmatprep.subr.bf16.mxu0 0
      %698 = vmatpush1.bf16.msra.mxu0 0
      %699 = vmatprep.mubr.bf16.mxu0 0
      %700 = vmatmul.mubr.bf16.gmra.mrb[0].mxu0 %v653
      %v701 = vpop.f32.mrb[0].mxu0
      %v702 = vadd.f32 0.0, %v701
      %v703 = vpop.f32.mrb[0].mxu0
      %v704 = vpop.f32.mrb[0].mxu0
      %v705 = vadd.f32 0.0, %v704
      %v706 = vpop.f32.mrb[0].mxu0
      %707 = vmatprep.mubr.bf16.mxu0 0
      %708 = vmatmul.mubr.bf16.gmra.mrb[0].mxu0 %v656
      %v709 = vpop.f32.mrb[0].mxu0
      %v710 = vadd.f32 0.0, %v709
      %v711 = vpop.f32.mrb[0].mxu0
      %v712 = vpop.f32.mrb[0].mxu0
      %v713 = vadd.f32 0.0, %v712
      %v714 = vpop.f32.mrb[0].mxu0
      %715 = vmatprep.mubr.bf16.mxu0 0
      %716 = vmatmul.mubr.bf16.gmra.mrb[0].mxu0 %v659
      %v717 = vpop.f32.mrb[0].mxu0
      %v718 = vadd.f32 0.0, %v717
      %v719 = vpop.f32.mrb[0].mxu0
      %v720 = vpop.f32.mrb[0].mxu0
      %v721 = vadd.f32 0.0, %v720
      %v722 = vpop.f32.mrb[0].mxu0
      %723 = vmatprep.mubr.bf16.mxu0 0
      %724 = vmatmul.mubr.bf16.gmra.mrb[0].mxu0 %v662
      %v725 = vpop.f32.mrb[0].mxu0
      %v726 = vadd.f32 0.0, %v725
      %v727 = vpop.f32.mrb[0].mxu0
      %v728 = vpop.f32.mrb[0].mxu0
      %v729 = vadd.f32 0.0, %v728
      %v730 = vpop.f32.mrb[0].mxu0
      %731 = vdwg.mxu0
      %v732 = vadd.f32 %v477, %v702
      %v733 = vadd.f32 %v480, %v705
      %v734 = vadd.f32 %v485, %v710
      %v735 = vadd.f32 %v488, %v713
      %v736 = vadd.f32 %v493, %v718
      %v737 = vadd.f32 %v496, %v721
      %v738 = vadd.f32 %v501, %v726
      %v739 = vadd.f32 %v504, %v729
      %s740 = scalar_lea.vmem %s277, 144
      %v741 = vld [vmem:[%s740] sm:$0xf]
      %v742 = vld [vmem:[%s740 + $0x8] sm:$0xf]
      %v743 = vld [vmem:[%s740 + $0x10] sm:$0xf]
      %v744 = vld [vmem:[%s740 + $0x18] sm:$0xf]
      %v745 = vld [vmem:[%s740 + $0x20] sm:$0xf]
      %v746 = vld [vmem:[%s740 + $0x28] sm:$0xf]
      %v747 = vld [vmem:[%s740 + $0x30] sm:$0xf]
      %v748 = vld [vmem:[%s740 + $0x38] sm:$0xf]
      %s749 = scalar_lea.vmem %s1, 6
      %v750 = vld [vmem:[%s749] sm:$0x3]
      %v759 = vunpack.c.l.b16 %v741
      %v760 = vunpack.c.l.b16 %v742
      %v761 = vunpack.c.l.b16 %v743
      %v762 = vunpack.c.l.b16 %v744
      %v763 = vunpack.c.l.b16 %v745
      %v764 = vunpack.c.l.b16 %v746
      %v765 = vunpack.c.l.b16 %v747
      %v766 = vunpack.c.l.b16 %v748
      %v767 = vpack.c.b16 %v760, %v759
      %v768 = vpack.c.b16 %v762, %v761
      %v769 = vpack.c.b16 %v764, %v763
      %v770 = vpack.c.b16 %v766, %v765
      %v772 = vsel %vm325, %v767, 0
      %v775 = vsel %vm325, %v768, 0
      %v778 = vsel %vm325, %v769, 0
      %v781 = vsel %vm325, %v770, 0
      %v784 = vsel %vm338, %v750, 0
      %786 = vmatprep.subr.bf16.mxu0 0
      %787 = vmatpush1.bf16.msra.mxu0 %v784
      %788 = vmatprep.subr.bf16.mxu0 0
      %789 = vmatpush1.bf16.msra.mxu0 0
      %790 = vmatprep.subr.bf16.mxu0 0
      %791 = vmatpush1.bf16.msra.mxu0 0
      %792 = vmatprep.subr.bf16.mxu0 0
      %793 = vmatpush1.bf16.msra.mxu0 0
      %794 = vmatprep.subr.bf16.mxu0 0
      %795 = vmatpush1.bf16.msra.mxu0 0
      %796 = vmatprep.subr.bf16.mxu0 0
      %797 = vmatpush1.bf16.msra.mxu0 0
      %798 = vmatprep.subr.bf16.mxu0 0
      %799 = vmatpush1.bf16.msra.mxu0 0
      %800 = vmatprep.subr.bf16.mxu0 0
      %801 = vmatpush1.bf16.msra.mxu0 0
      %802 = vmatprep.subr.bf16.mxu0 0
      %803 = vmatpush1.bf16.msra.mxu0 0
      %804 = vmatprep.subr.bf16.mxu0 0
      %805 = vmatpush1.bf16.msra.mxu0 0
      %806 = vmatprep.subr.bf16.mxu0 0
      %807 = vmatpush1.bf16.msra.mxu0 0
      %808 = vmatprep.subr.bf16.mxu0 0
      %809 = vmatpush1.bf16.msra.mxu0 0
      %810 = vmatprep.subr.bf16.mxu0 0
      %811 = vmatpush1.bf16.msra.mxu0 0
      %812 = vmatprep.subr.bf16.mxu0 0
      %813 = vmatpush1.bf16.msra.mxu0 0
      %814 = vmatprep.subr.bf16.mxu0 0
      %815 = vmatpush1.bf16.msra.mxu0 0
      %816 = vmatprep.subr.bf16.mxu0 0
      %817 = vmatpush1.bf16.msra.mxu0 0
      %818 = vmatprep.mubr.bf16.mxu0 0
      %819 = vmatmul.mubr.bf16.gmra.mrb[0].mxu0 %v772
      %v820 = vpop.f32.mrb[0].mxu0
      %v821 = vadd.f32 0.0, %v820
      %v822 = vpop.f32.mrb[0].mxu0
      %v823 = vpop.f32.mrb[0].mxu0
      %v824 = vadd.f32 0.0, %v823
      %v825 = vpop.f32.mrb[0].mxu0
      %826 = vmatprep.mubr.bf16.mxu0 0
      %827 = vmatmul.mubr.bf16.gmra.mrb[0].mxu0 %v775
      %v828 = vpop.f32.mrb[0].mxu0
      %v829 = vadd.f32 0.0, %v828
      %v830 = vpop.f32.mrb[0].mxu0
      %v831 = vpop.f32.mrb[0].mxu0
      %v832 = vadd.f32 0.0, %v831
      %v833 = vpop.f32.mrb[0].mxu0
      %834 = vmatprep.mubr.bf16.mxu0 0
      %835 = vmatmul.mubr.bf16.gmra.mrb[0].mxu0 %v778
      %v836 = vpop.f32.mrb[0].mxu0
      %v837 = vadd.f32 0.0, %v836
      %v838 = vpop.f32.mrb[0].mxu0
      %v839 = vpop.f32.mrb[0].mxu0
      %v840 = vadd.f32 0.0, %v839
      %v841 = vpop.f32.mrb[0].mxu0
      %842 = vmatprep.mubr.bf16.mxu0 0
      %843 = vmatmul.mubr.bf16.gmra.mrb[0].mxu0 %v781
      %v844 = vpop.f32.mrb[0].mxu0
      %v845 = vadd.f32 0.0, %v844
      %v846 = vpop.f32.mrb[0].mxu0
      %v847 = vpop.f32.mrb[0].mxu0
      %v848 = vadd.f32 0.0, %v847
      %v849 = vpop.f32.mrb[0].mxu0
      %850 = vdwg.mxu0
      %v851 = vadd.f32 %v732, %v821
      %v852 = vadd.f32 %v733, %v824
      %v853 = vadd.f32 %v734, %v829
      %v854 = vadd.f32 %v735, %v832
      %v855 = vadd.f32 %v736, %v837
      %v856 = vadd.f32 %v737, %v840
      %v857 = vadd.f32 %v738, %v845
      %v858 = vadd.f32 %v739, %v848
      %s859 = scalar_lea.vmem %s277, 216
      %v860 = vld [vmem:[%s859] sm:$0xf]
      %v861 = vld [vmem:[%s859 + $0x8] sm:$0xf]
      %v862 = vld [vmem:[%s859 + $0x10] sm:$0xf]
      %v863 = vld [vmem:[%s859 + $0x18] sm:$0xf]
      %v864 = vld [vmem:[%s859 + $0x20] sm:$0xf]
      %v865 = vld [vmem:[%s859 + $0x28] sm:$0xf]
      %v866 = vld [vmem:[%s859 + $0x30] sm:$0xf]
      %v867 = vld [vmem:[%s859 + $0x38] sm:$0xf]
      %s868 = scalar_lea.vmem %s1, 8
      %v869 = vld [vmem:[%s868] sm:$0x3]
      %v878 = vunpack.c.l.b16 %v860
      %v879 = vunpack.c.l.b16 %v861
      %v880 = vunpack.c.l.b16 %v862
      %v881 = vunpack.c.l.b16 %v863
      %v882 = vunpack.c.l.b16 %v864
      %v883 = vunpack.c.l.b16 %v865
      %v884 = vunpack.c.l.b16 %v866
      %v885 = vunpack.c.l.b16 %v867
      %v886 = vpack.c.b16 %v879, %v878
      %v887 = vpack.c.b16 %v881, %v880
      %v888 = vpack.c.b16 %v883, %v882
      %v889 = vpack.c.b16 %v885, %v884
      %v891 = vsel %vm325, %v886, 0
      %v894 = vsel %vm325, %v887, 0
      %v897 = vsel %vm325, %v888, 0
      %v900 = vsel %vm325, %v889, 0
      %v903 = vsel %vm338, %v869, 0
      %905 = vmatprep.subr.bf16.mxu0 0
      %906 = vmatpush1.bf16.msra.mxu0 %v903
      %907 = vmatprep.subr.bf16.mxu0 0
      %908 = vmatpush1.bf16.msra.mxu0 0
      %909 = vmatprep.subr.bf16.mxu0 0
      %910 = vmatpush1.bf16.msra.mxu0 0
      %911 = vmatprep.subr.bf16.mxu0 0
      %912 = vmatpush1.bf16.msra.mxu0 0
      %913 = vmatprep.subr.bf16.mxu0 0
      %914 = vmatpush1.bf16.msra.mxu0 0
      %915 = vmatprep.subr.bf16.mxu0 0
      %916 = vmatpush1.bf16.msra.mxu0 0
      %917 = vmatprep.subr.bf16.mxu0 0
      %918 = vmatpush1.bf16.msra.mxu0 0
      %919 = vmatprep.subr.bf16.mxu0 0
      %920 = vmatpush1.bf16.msra.mxu0 0
      %921 = vmatprep.subr.bf16.mxu0 0
      %922 = vmatpush1.bf16.msra.mxu0 0
      %923 = vmatprep.subr.bf16.mxu0 0
      %924 = vmatpush1.bf16.msra.mxu0 0
      %925 = vmatprep.subr.bf16.mxu0 0
      %926 = vmatpush1.bf16.msra.mxu0 0
      %927 = vmatprep.subr.bf16.mxu0 0
      %928 = vmatpush1.bf16.msra.mxu0 0
      %929 = vmatprep.subr.bf16.mxu0 0
      %930 = vmatpush1.bf16.msra.mxu0 0
      %931 = vmatprep.subr.bf16.mxu0 0
      %932 = vmatpush1.bf16.msra.mxu0 0
      %933 = vmatprep.subr.bf16.mxu0 0
      %934 = vmatpush1.bf16.msra.mxu0 0
      %935 = vmatprep.subr.bf16.mxu0 0
      %936 = vmatpush1.bf16.msra.mxu0 0
      %937 = vmatprep.mubr.bf16.mxu0 0
      %938 = vmatmul.mubr.bf16.gmra.mrb[0].mxu0 %v891
      %v939 = vpop.f32.mrb[0].mxu0
      %v940 = vadd.f32 0.0, %v939
      %v941 = vpop.f32.mrb[0].mxu0
      %v942 = vpop.f32.mrb[0].mxu0
      %v943 = vadd.f32 0.0, %v942
      %v944 = vpop.f32.mrb[0].mxu0
      %945 = vmatprep.mubr.bf16.mxu0 0
      %946 = vmatmul.mubr.bf16.gmra.mrb[0].mxu0 %v894
      %v947 = vpop.f32.mrb[0].mxu0
      %v948 = vadd.f32 0.0, %v947
      %v949 = vpop.f32.mrb[0].mxu0
      %v950 = vpop.f32.mrb[0].mxu0
      %v951 = vadd.f32 0.0, %v950
      %v952 = vpop.f32.mrb[0].mxu0
      %953 = vmatprep.mubr.bf16.mxu0 0
      %954 = vmatmul.mubr.bf16.gmra.mrb[0].mxu0 %v897
      %v955 = vpop.f32.mrb[0].mxu0
      %v956 = vadd.f32 0.0, %v955
      %v957 = vpop.f32.mrb[0].mxu0
      %v958 = vpop.f32.mrb[0].mxu0
      %v959 = vadd.f32 0.0, %v958
      %v960 = vpop.f32.mrb[0].mxu0
      %961 = vmatprep.mubr.bf16.mxu0 0
      %962 = vmatmul.mubr.bf16.gmra.mrb[0].mxu0 %v900
      %v963 = vpop.f32.mrb[0].mxu0
      %v964 = vadd.f32 0.0, %v963
      %v965 = vpop.f32.mrb[0].mxu0
      %v966 = vpop.f32.mrb[0].mxu0
      %v967 = vadd.f32 0.0, %v966
      %v968 = vpop.f32.mrb[0].mxu0
      %969 = vdwg.mxu0
      %v970 = vadd.f32 %v851, %v940
      %v971 = vadd.f32 %v852, %v943
      %v972 = vadd.f32 %v853, %v948
      %v973 = vadd.f32 %v854, %v951
      %v974 = vadd.f32 %v855, %v956
      %v975 = vadd.f32 %v856, %v959
      %v976 = vadd.f32 %v857, %v964
      %v977 = vadd.f32 %v858, %v967
      %v978 = vld [vmem:[%s740] sm:$0xf]
      %v979 = vld [vmem:[%s740 + $0x4] sm:$0x1]
      %v980 = vld [vmem:[%s740 + $0x8] sm:$0xf]
      %v981 = vld [vmem:[%s740 + $0xc] sm:$0x1]
      %v982 = vld [vmem:[%s740 + $0x10] sm:$0xf]
      %v983 = vld [vmem:[%s740 + $0x14] sm:$0x1]
      %v984 = vld [vmem:[%s740 + $0x18] sm:$0xf]
      %v985 = vld [vmem:[%s740 + $0x1c] sm:$0x1]
      %v986 = vld [vmem:[%s740 + $0x20] sm:$0xf]
      %v987 = vld [vmem:[%s740 + $0x24] sm:$0x1]
      %v988 = vld [vmem:[%s740 + $0x28] sm:$0xf]
      %v989 = vld [vmem:[%s740 + $0x2c] sm:$0x1]
      %v990 = vld [vmem:[%s740 + $0x30] sm:$0xf]
      %v991 = vld [vmem:[%s740 + $0x34] sm:$0x1]
      %v992 = vld [vmem:[%s740 + $0x38] sm:$0xf]
      %v993 = vld [vmem:[%s740 + $0x3c] sm:$0x1]
      %v995 = vshrl.u32 %v978, 16
      %v997 = vrot.slane %v995, 4
      %v998 = vshll.u32 %v978, 16
      %v1000 = vrot.slane %v998, 5
      %v1001 = vor.u32 %v997, %v1000
      %v1002 = vrot.slane %v1001, 4
      %v1004 = vshll.u32 %v979, 16
      %v1006 = vrot.slane %v1004, 5
      %v1007 = vsel %vm525, %v1002, %v1006
      %v1009 = vshrl.u32 %v980, 16
      %v1011 = vrot.slane %v1009, 4
      %v1012 = vshll.u32 %v980, 16
      %v1014 = vrot.slane %v1012, 5
      %v1015 = vor.u32 %v1011, %v1014
      %v1016 = vrot.slane %v1015, 4
      %v1018 = vshll.u32 %v981, 16
      %v1020 = vrot.slane %v1018, 5
      %v1021 = vsel %vm525, %v1016, %v1020
      %v1023 = vshrl.u32 %v982, 16
      %v1025 = vrot.slane %v1023, 4
      %v1026 = vshll.u32 %v982, 16
      %v1028 = vrot.slane %v1026, 5
      %v1029 = vor.u32 %v1025, %v1028
      %v1030 = vrot.slane %v1029, 4
      %v1032 = vshll.u32 %v983, 16
      %v1034 = vrot.slane %v1032, 5
      %v1035 = vsel %vm525, %v1030, %v1034
      %v1037 = vshrl.u32 %v984, 16
      %v1039 = vrot.slane %v1037, 4
      %v1040 = vshll.u32 %v984, 16
      %v1042 = vrot.slane %v1040, 5
      %v1043 = vor.u32 %v1039, %v1042
      %v1044 = vrot.slane %v1043, 4
      %v1046 = vshll.u32 %v985, 16
      %v1048 = vrot.slane %v1046, 5
      %v1049 = vsel %vm525, %v1044, %v1048
      %v1051 = vshrl.u32 %v986, 16
      %v1053 = vrot.slane %v1051, 4
      %v1054 = vshll.u32 %v986, 16
      %v1056 = vrot.slane %v1054, 5
      %v1057 = vor.u32 %v1053, %v1056
      %v1058 = vrot.slane %v1057, 4
      %v1060 = vshll.u32 %v987, 16
      %v1062 = vrot.slane %v1060, 5
      %v1063 = vsel %vm525, %v1058, %v1062
      %v1065 = vshrl.u32 %v988, 16
      %v1067 = vrot.slane %v1065, 4
      %v1068 = vshll.u32 %v988, 16
      %v1070 = vrot.slane %v1068, 5
      %v1071 = vor.u32 %v1067, %v1070
      %v1072 = vrot.slane %v1071, 4
      %v1074 = vshll.u32 %v989, 16
      %v1076 = vrot.slane %v1074, 5
      %v1077 = vsel %vm525, %v1072, %v1076
      %v1079 = vshrl.u32 %v990, 16
      %v1081 = vrot.slane %v1079, 4
      %v1082 = vshll.u32 %v990, 16
      %v1084 = vrot.slane %v1082, 5
      %v1085 = vor.u32 %v1081, %v1084
      %v1086 = vrot.slane %v1085, 4
      %v1088 = vshll.u32 %v991, 16
      %v1090 = vrot.slane %v1088, 5
      %v1091 = vsel %vm525, %v1086, %v1090
      %v1093 = vshrl.u32 %v992, 16
      %v1095 = vrot.slane %v1093, 4
      %v1096 = vshll.u32 %v992, 16
      %v1098 = vrot.slane %v1096, 5
      %v1099 = vor.u32 %v1095, %v1098
      %v1100 = vrot.slane %v1099, 4
      %v1102 = vshll.u32 %v993, 16
      %v1104 = vrot.slane %v1102, 5
      %v1105 = vsel %vm525, %v1100, %v1104
      %s1106 = scalar_lea.vmem %s1, 10
      %v1107 = vld [vmem:[%s1106] sm:$0x3]
      %v1108 = vunpack.c.l.b16 %v1007
      %v1109 = vunpack.c.l.b16 %v1021
      %v1110 = vunpack.c.l.b16 %v1035
      %v1111 = vunpack.c.l.b16 %v1049
      %v1112 = vunpack.c.l.b16 %v1063
      %v1113 = vunpack.c.l.b16 %v1077
      %v1114 = vunpack.c.l.b16 %v1091
      %v1115 = vunpack.c.l.b16 %v1105
      %v1116 = vpack.c.b16 %v1109, %v1108
      %v1117 = vpack.c.b16 %v1111, %v1110
      %v1118 = vpack.c.b16 %v1113, %v1112
      %v1119 = vpack.c.b16 %v1115, %v1114
      %v1121 = vsel %vm325, %v1116, 0
      %v1124 = vsel %vm325, %v1117, 0
      %v1127 = vsel %vm325, %v1118, 0
      %v1130 = vsel %vm325, %v1119, 0
      %v1133 = vsel %vm338, %v1107, 0
      %1135 = vmatprep.subr.bf16.mxu0 0
      %1136 = vmatpush1.bf16.msra.mxu0 %v1133
      %1137 = vmatprep.subr.bf16.mxu0 0
      %1138 = vmatpush1.bf16.msra.mxu0 0
      %1139 = vmatprep.subr.bf16.mxu0 0
      %1140 = vmatpush1.bf16.msra.mxu0 0
      %1141 = vmatprep.subr.bf16.mxu0 0
      %1142 = vmatpush1.bf16.msra.mxu0 0
      %1143 = vmatprep.subr.bf16.mxu0 0
      %1144 = vmatpush1.bf16.msra.mxu0 0
      %1145 = vmatprep.subr.bf16.mxu0 0
      %1146 = vmatpush1.bf16.msra.mxu0 0
      %1147 = vmatprep.subr.bf16.mxu0 0
      %1148 = vmatpush1.bf16.msra.mxu0 0
      %1149 = vmatprep.subr.bf16.mxu0 0
      %1150 = vmatpush1.bf16.msra.mxu0 0
      %1151 = vmatprep.subr.bf16.mxu0 0
      %1152 = vmatpush1.bf16.msra.mxu0 0
      %1153 = vmatprep.subr.bf16.mxu0 0
      %1154 = vmatpush1.bf16.msra.mxu0 0
      %1155 = vmatprep.subr.bf16.mxu0 0
      %1156 = vmatpush1.bf16.msra.mxu0 0
      %1157 = vmatprep.subr.bf16.mxu0 0
      %1158 = vmatpush1.bf16.msra.mxu0 0
      %1159 = vmatprep.subr.bf16.mxu0 0
      %1160 = vmatpush1.bf16.msra.mxu0 0
      %1161 = vmatprep.subr.bf16.mxu0 0
      %1162 = vmatpush1.bf16.msra.mxu0 0
      %1163 = vmatprep.subr.bf16.mxu0 0
      %1164 = vmatpush1.bf16.msra.mxu0 0
      %1165 = vmatprep.subr.bf16.mxu0 0
      %1166 = vmatpush1.bf16.msra.mxu0 0
      %1167 = vmatprep.mubr.bf16.mxu0 0
      %1168 = vmatmul.mubr.bf16.gmra.mrb[0].mxu0 %v1121
      %v1169 = vpop.f32.mrb[0].mxu0
      %v1170 = vadd.f32 0.0, %v1169
      %v1171 = vpop.f32.mrb[0].mxu0
      %v1172 = vpop.f32.mrb[0].mxu0
      %v1173 = vadd.f32 0.0, %v1172
      %v1174 = vpop.f32.mrb[0].mxu0
      %1175 = vmatprep.mubr.bf16.mxu0 0
      %1176 = vmatmul.mubr.bf16.gmra.mrb[0].mxu0 %v1124
      %v1177 = vpop.f32.mrb[0].mxu0
      %v1178 = vadd.f32 0.0, %v1177
      %v1179 = vpop.f32.mrb[0].mxu0
      %v1180 = vpop.f32.mrb[0].mxu0
      %v1181 = vadd.f32 0.0, %v1180
      %v1182 = vpop.f32.mrb[0].mxu0
      %1183 = vmatprep.mubr.bf16.mxu0 0
      %1184 = vmatmul.mubr.bf16.gmra.mrb[0].mxu0 %v1127
      %v1185 = vpop.f32.mrb[0].mxu0
      %v1186 = vadd.f32 0.0, %v1185
      %v1187 = vpop.f32.mrb[0].mxu0
      %v1188 = vpop.f32.mrb[0].mxu0
      %v1189 = vadd.f32 0.0, %v1188
      %v1190 = vpop.f32.mrb[0].mxu0
      %1191 = vmatprep.mubr.bf16.mxu0 0
      %1192 = vmatmul.mubr.bf16.gmra.mrb[0].mxu0 %v1130
      %v1193 = vpop.f32.mrb[0].mxu0
      %v1194 = vadd.f32 0.0, %v1193
      %v1195 = vpop.f32.mrb[0].mxu0
      %v1196 = vpop.f32.mrb[0].mxu0
      %v1197 = vadd.f32 0.0, %v1196
      %v1198 = vpop.f32.mrb[0].mxu0
      %1199 = vdwg.mxu0
      %v1200 = vadd.f32 %v970, %v1170
      %v1201 = vadd.f32 %v971, %v1173
      %v1202 = vadd.f32 %v972, %v1178
      %v1203 = vadd.f32 %v973, %v1181
      %v1204 = vadd.f32 %v974, %v1186
      %v1205 = vadd.f32 %v975, %v1189
      %v1206 = vadd.f32 %v976, %v1194
      %v1207 = vadd.f32 %v977, %v1197
      %s1208 = scalar_lea.vmem %s277, 8
      %v1209 = vld [vmem:[%s1208] sm:$0xf]
      %v1210 = vld [vmem:[%s1208 + $0x8] sm:$0xf]
      %v1211 = vld [vmem:[%s1208 + $0x10] sm:$0xf]
      %v1212 = vld [vmem:[%s1208 + $0x18] sm:$0xf]
      %v1213 = vld [vmem:[%s1208 + $0x20] sm:$0xf]
      %v1214 = vld [vmem:[%s1208 + $0x28] sm:$0xf]
      %v1215 = vld [vmem:[%s1208 + $0x30] sm:$0xf]
      %v1216 = vld [vmem:[%s1208 + $0x38] sm:$0xf]
      %s1217 = scalar_lea.vmem %s1, 12
      %v1218 = vld [vmem:[%s1217] sm:$0x3]
      %v1227 = vunpack.c.l.b16 %v1209
      %v1228 = vunpack.c.l.b16 %v1210
      %v1229 = vunpack.c.l.b16 %v1211
      %v1230 = vunpack.c.l.b16 %v1212
      %v1231 = vunpack.c.l.b16 %v1213
      %v1232 = vunpack.c.l.b16 %v1214
      %v1233 = vunpack.c.l.b16 %v1215
      %v1234 = vunpack.c.l.b16 %v1216
      %v1235 = vpack.c.b16 %v1228, %v1227
      %v1236 = vpack.c.b16 %v1230, %v1229
      %v1237 = vpack.c.b16 %v1232, %v1231
      %v1238 = vpack.c.b16 %v1234, %v1233
      %v1240 = vsel %vm325, %v1235, 0
      %v1243 = vsel %vm325, %v1236, 0
      %v1246 = vsel %vm325, %v1237, 0
      %v1249 = vsel %vm325, %v1238, 0
      %v1252 = vsel %vm338, %v1218, 0
      %1254 = vmatprep.subr.bf16.mxu0 0
      %1255 = vmatpush1.bf16.msra.mxu0 %v1252
      %1256 = vmatprep.subr.bf16.mxu0 0
      %1257 = vmatpush1.bf16.msra.mxu0 0
      %1258 = vmatprep.subr.bf16.mxu0 0
      %1259 = vmatpush1.bf16.msra.mxu0 0
      %1260 = vmatprep.subr.bf16.mxu0 0
      %1261 = vmatpush1.bf16.msra.mxu0 0
      %1262 = vmatprep.subr.bf16.mxu0 0
      %1263 = vmatpush1.bf16.msra.mxu0 0
      %1264 = vmatprep.subr.bf16.mxu0 0
      %1265 = vmatpush1.bf16.msra.mxu0 0
      %1266 = vmatprep.subr.bf16.mxu0 0
      %1267 = vmatpush1.bf16.msra.mxu0 0
      %1268 = vmatprep.subr.bf16.mxu0 0
      %1269 = vmatpush1.bf16.msra.mxu0 0
      %1270 = vmatprep.subr.bf16.mxu0 0
      %1271 = vmatpush1.bf16.msra.mxu0 0
      %1272 = vmatprep.subr.bf16.mxu0 0
      %1273 = vmatpush1.bf16.msra.mxu0 0
      %1274 = vmatprep.subr.bf16.mxu0 0
      %1275 = vmatpush1.bf16.msra.mxu0 0
      %1276 = vmatprep.subr.bf16.mxu0 0
      %1277 = vmatpush1.bf16.msra.mxu0 0
      %1278 = vmatprep.subr.bf16.mxu0 0
      %1279 = vmatpush1.bf16.msra.mxu0 0
      %1280 = vmatprep.subr.bf16.mxu0 0
      %1281 = vmatpush1.bf16.msra.mxu0 0
      %1282 = vmatprep.subr.bf16.mxu0 0
      %1283 = vmatpush1.bf16.msra.mxu0 0
      %1284 = vmatprep.subr.bf16.mxu0 0
      %1285 = vmatpush1.bf16.msra.mxu0 0
      %1286 = vmatprep.mubr.bf16.mxu0 0
      %1287 = vmatmul.mubr.bf16.gmra.mrb[0].mxu0 %v1240
      %v1288 = vpop.f32.mrb[0].mxu0
      %v1289 = vadd.f32 0.0, %v1288
      %v1290 = vpop.f32.mrb[0].mxu0
      %v1291 = vpop.f32.mrb[0].mxu0
      %v1292 = vadd.f32 0.0, %v1291
      %v1293 = vpop.f32.mrb[0].mxu0
      %1294 = vmatprep.mubr.bf16.mxu0 0
      %1295 = vmatmul.mubr.bf16.gmra.mrb[0].mxu0 %v1243
      %v1296 = vpop.f32.mrb[0].mxu0
      %v1297 = vadd.f32 0.0, %v1296
      %v1298 = vpop.f32.mrb[0].mxu0
      %v1299 = vpop.f32.mrb[0].mxu0
      %v1300 = vadd.f32 0.0, %v1299
      %v1301 = vpop.f32.mrb[0].mxu0
      %1302 = vmatprep.mubr.bf16.mxu0 0
      %1303 = vmatmul.mubr.bf16.gmra.mrb[0].mxu0 %v1246
      %v1304 = vpop.f32.mrb[0].mxu0
      %v1305 = vadd.f32 0.0, %v1304
      %v1306 = vpop.f32.mrb[0].mxu0
      %v1307 = vpop.f32.mrb[0].mxu0
      %v1308 = vadd.f32 0.0, %v1307
      %v1309 = vpop.f32.mrb[0].mxu0
      %1310 = vmatprep.mubr.bf16.mxu0 0
      %1311 = vmatmul.mubr.bf16.gmra.mrb[0].mxu0 %v1249
      %v1312 = vpop.f32.mrb[0].mxu0
      %v1313 = vadd.f32 0.0, %v1312
      %v1314 = vpop.f32.mrb[0].mxu0
      %v1315 = vpop.f32.mrb[0].mxu0
      %v1316 = vadd.f32 0.0, %v1315
      %v1317 = vpop.f32.mrb[0].mxu0
      %1318 = vdwg.mxu0
      %v1319 = vadd.f32 %v1200, %v1289
      %v1320 = vadd.f32 %v1201, %v1292
      %v1321 = vadd.f32 %v1202, %v1297
      %v1322 = vadd.f32 %v1203, %v1300
      %v1323 = vadd.f32 %v1204, %v1305
      %v1324 = vadd.f32 %v1205, %v1308
      %v1325 = vadd.f32 %v1206, %v1313
      %v1326 = vadd.f32 %v1207, %v1316
      %s1327 = scalar_lea.vmem %s277, 80
      %v1328 = vld [vmem:[%s1327] sm:$0xf]
      %v1329 = vld [vmem:[%s1327 + $0x8] sm:$0xf]
      %v1330 = vld [vmem:[%s1327 + $0x10] sm:$0xf]
      %v1331 = vld [vmem:[%s1327 + $0x18] sm:$0xf]
      %v1332 = vld [vmem:[%s1327 + $0x20] sm:$0xf]
      %v1333 = vld [vmem:[%s1327 + $0x28] sm:$0xf]
      %v1334 = vld [vmem:[%s1327 + $0x30] sm:$0xf]
      %v1335 = vld [vmem:[%s1327 + $0x38] sm:$0xf]
      %s1336 = scalar_lea.vmem %s1, 14
      %v1337 = vld [vmem:[%s1336] sm:$0x3]
      %v1346 = vunpack.c.l.b16 %v1328
      %v1347 = vunpack.c.l.b16 %v1329
      %v1348 = vunpack.c.l.b16 %v1330
      %v1349 = vunpack.c.l.b16 %v1331
      %v1350 = vunpack.c.l.b16 %v1332
      %v1351 = vunpack.c.l.b16 %v1333
      %v1352 = vunpack.c.l.b16 %v1334
      %v1353 = vunpack.c.l.b16 %v1335
      %v1354 = vpack.c.b16 %v1347, %v1346
      %v1355 = vpack.c.b16 %v1349, %v1348
      %v1356 = vpack.c.b16 %v1351, %v1350
      %v1357 = vpack.c.b16 %v1353, %v1352
      %v1359 = vsel %vm325, %v1354, 0
      %v1362 = vsel %vm325, %v1355, 0
      %v1365 = vsel %vm325, %v1356, 0
      %v1368 = vsel %vm325, %v1357, 0
      %v1371 = vsel %vm338, %v1337, 0
      %1373 = vmatprep.subr.bf16.mxu0 0
      %1374 = vmatpush1.bf16.msra.mxu0 %v1371
      %1375 = vmatprep.subr.bf16.mxu0 0
      %1376 = vmatpush1.bf16.msra.mxu0 0
      %1377 = vmatprep.subr.bf16.mxu0 0
      %1378 = vmatpush1.bf16.msra.mxu0 0
      %1379 = vmatprep.subr.bf16.mxu0 0
      %1380 = vmatpush1.bf16.msra.mxu0 0
      %1381 = vmatprep.subr.bf16.mxu0 0
      %1382 = vmatpush1.bf16.msra.mxu0 0
      %1383 = vmatprep.subr.bf16.mxu0 0
      %1384 = vmatpush1.bf16.msra.mxu0 0
      %1385 = vmatprep.subr.bf16.mxu0 0
      %1386 = vmatpush1.bf16.msra.mxu0 0
      %1387 = vmatprep.subr.bf16.mxu0 0
      %1388 = vmatpush1.bf16.msra.mxu0 0
      %1389 = vmatprep.subr.bf16.mxu0 0
      %1390 = vmatpush1.bf16.msra.mxu0 0
      %1391 = vmatprep.subr.bf16.mxu0 0
      %1392 = vmatpush1.bf16.msra.mxu0 0
      %1393 = vmatprep.subr.bf16.mxu0 0
      %1394 = vmatpush1.bf16.msra.mxu0 0
      %1395 = vmatprep.subr.bf16.mxu0 0
      %1396 = vmatpush1.bf16.msra.mxu0 0
      %1397 = vmatprep.subr.bf16.mxu0 0
      %1398 = vmatpush1.bf16.msra.mxu0 0
      %1399 = vmatprep.subr.bf16.mxu0 0
      %1400 = vmatpush1.bf16.msra.mxu0 0
      %1401 = vmatprep.subr.bf16.mxu0 0
      %1402 = vmatpush1.bf16.msra.mxu0 0
      %1403 = vmatprep.subr.bf16.mxu0 0
      %1404 = vmatpush1.bf16.msra.mxu0 0
      %1405 = vmatprep.mubr.bf16.mxu0 0
      %1406 = vmatmul.mubr.bf16.gmra.mrb[0].mxu0 %v1359
      %v1407 = vpop.f32.mrb[0].mxu0
      %v1408 = vadd.f32 0.0, %v1407
      %v1409 = vpop.f32.mrb[0].mxu0
      %v1410 = vpop.f32.mrb[0].mxu0
      %v1411 = vadd.f32 0.0, %v1410
      %v1412 = vpop.f32.mrb[0].mxu0
      %1413 = vmatprep.mubr.bf16.mxu0 0
      %1414 = vmatmul.mubr.bf16.gmra.mrb[0].mxu0 %v1362
      %v1415 = vpop.f32.mrb[0].mxu0
      %v1416 = vadd.f32 0.0, %v1415
      %v1417 = vpop.f32.mrb[0].mxu0
      %v1418 = vpop.f32.mrb[0].mxu0
      %v1419 = vadd.f32 0.0, %v1418
      %v1420 = vpop.f32.mrb[0].mxu0
      %1421 = vmatprep.mubr.bf16.mxu0 0
      %1422 = vmatmul.mubr.bf16.gmra.mrb[0].mxu0 %v1365
      %v1423 = vpop.f32.mrb[0].mxu0
      %v1424 = vadd.f32 0.0, %v1423
      %v1425 = vpop.f32.mrb[0].mxu0
      %v1426 = vpop.f32.mrb[0].mxu0
      %v1427 = vadd.f32 0.0, %v1426
      %v1428 = vpop.f32.mrb[0].mxu0
      %1429 = vmatprep.mubr.bf16.mxu0 0
      %1430 = vmatmul.mubr.bf16.gmra.mrb[0].mxu0 %v1368
      %v1431 = vpop.f32.mrb[0].mxu0
      %v1432 = vadd.f32 0.0, %v1431
      %v1433 = vpop.f32.mrb[0].mxu0
      %v1434 = vpop.f32.mrb[0].mxu0
      %v1435 = vadd.f32 0.0, %v1434
      %v1436 = vpop.f32.mrb[0].mxu0
      %1437 = vdwg.mxu0
      %v1438 = vadd.f32 %v1319, %v1408
      %v1439 = vadd.f32 %v1320, %v1411
      %v1440 = vadd.f32 %v1321, %v1416
      %v1441 = vadd.f32 %v1322, %v1419
      %v1442 = vadd.f32 %v1323, %v1424
      %v1443 = vadd.f32 %v1324, %v1427
      %v1444 = vadd.f32 %v1325, %v1432
      %v1445 = vadd.f32 %v1326, %v1435
      %v1446 = vld [vmem:[%s1208] sm:$0xf]
      %v1447 = vld [vmem:[%s1208 + $0x4] sm:$0x1]
      %v1448 = vld [vmem:[%s1208 + $0x8] sm:$0xf]
      %v1449 = vld [vmem:[%s1208 + $0xc] sm:$0x1]
      %v1450 = vld [vmem:[%s1208 + $0x10] sm:$0xf]
      %v1451 = vld [vmem:[%s1208 + $0x14] sm:$0x1]
      %v1452 = vld [vmem:[%s1208 + $0x18] sm:$0xf]
      %v1453 = vld [vmem:[%s1208 + $0x1c] sm:$0x1]
      %v1454 = vld [vmem:[%s1208 + $0x20] sm:$0xf]
      %v1455 = vld [vmem:[%s1208 + $0x24] sm:$0x1]
      %v1456 = vld [vmem:[%s1208 + $0x28] sm:$0xf]
      %v1457 = vld [vmem:[%s1208 + $0x2c] sm:$0x1]
      %v1458 = vld [vmem:[%s1208 + $0x30] sm:$0xf]
      %v1459 = vld [vmem:[%s1208 + $0x34] sm:$0x1]
      %v1460 = vld [vmem:[%s1208 + $0x38] sm:$0xf]
      %v1461 = vld [vmem:[%s1208 + $0x3c] sm:$0x1]
      %v1463 = vshrl.u32 %v1446, 16
      %v1465 = vrot.slane %v1463, 4
      %v1466 = vshll.u32 %v1446, 16
      %v1468 = vrot.slane %v1466, 5
      %v1469 = vor.u32 %v1465, %v1468
      %v1470 = vrot.slane %v1469, 4
      %v1472 = vshll.u32 %v1447, 16
      %v1474 = vrot.slane %v1472, 5
      %v1475 = vsel %vm525, %v1470, %v1474
      %v1477 = vshrl.u32 %v1448, 16
      %v1479 = vrot.slane %v1477, 4
      %v1480 = vshll.u32 %v1448, 16
      %v1482 = vrot.slane %v1480, 5
      %v1483 = vor.u32 %v1479, %v1482
      %v1484 = vrot.slane %v1483, 4
      %v1486 = vshll.u32 %v1449, 16
      %v1488 = vrot.slane %v1486, 5
      %v1489 = vsel %vm525, %v1484, %v1488
      %v1491 = vshrl.u32 %v1450, 16
      %v1493 = vrot.slane %v1491, 4
      %v1494 = vshll.u32 %v1450, 16
      %v1496 = vrot.slane %v1494, 5
      %v1497 = vor.u32 %v1493, %v1496
      %v1498 = vrot.slane %v1497, 4
      %v1500 = vshll.u32 %v1451, 16
      %v1502 = vrot.slane %v1500, 5
      %v1503 = vsel %vm525, %v1498, %v1502
      %v1505 = vshrl.u32 %v1452, 16
      %v1507 = vrot.slane %v1505, 4
      %v1508 = vshll.u32 %v1452, 16
      %v1510 = vrot.slane %v1508, 5
      %v1511 = vor.u32 %v1507, %v1510
      %v1512 = vrot.slane %v1511, 4
      %v1514 = vshll.u32 %v1453, 16
      %v1516 = vrot.slane %v1514, 5
      %v1517 = vsel %vm525, %v1512, %v1516
      %v1519 = vshrl.u32 %v1454, 16
      %v1521 = vrot.slane %v1519, 4
      %v1522 = vshll.u32 %v1454, 16
      %v1524 = vrot.slane %v1522, 5
      %v1525 = vor.u32 %v1521, %v1524
      %v1526 = vrot.slane %v1525, 4
      %v1528 = vshll.u32 %v1455, 16
      %v1530 = vrot.slane %v1528, 5
      %v1531 = vsel %vm525, %v1526, %v1530
      %v1533 = vshrl.u32 %v1456, 16
      %v1535 = vrot.slane %v1533, 4
      %v1536 = vshll.u32 %v1456, 16
      %v1538 = vrot.slane %v1536, 5
      %v1539 = vor.u32 %v1535, %v1538
      %v1540 = vrot.slane %v1539, 4
      %v1542 = vshll.u32 %v1457, 16
      %v1544 = vrot.slane %v1542, 5
      %v1545 = vsel %vm525, %v1540, %v1544
      %v1547 = vshrl.u32 %v1458, 16
      %v1549 = vrot.slane %v1547, 4
      %v1550 = vshll.u32 %v1458, 16
      %v1552 = vrot.slane %v1550, 5
      %v1553 = vor.u32 %v1549, %v1552
      %v1554 = vrot.slane %v1553, 4
      %v1556 = vshll.u32 %v1459, 16
      %v1558 = vrot.slane %v1556, 5
      %v1559 = vsel %vm525, %v1554, %v1558
      %v1561 = vshrl.u32 %v1460, 16
      %v1563 = vrot.slane %v1561, 4
      %v1564 = vshll.u32 %v1460, 16
      %v1566 = vrot.slane %v1564, 5
      %v1567 = vor.u32 %v1563, %v1566
      %v1568 = vrot.slane %v1567, 4
      %v1570 = vshll.u32 %v1461, 16
      %v1572 = vrot.slane %v1570, 5
      %v1573 = vsel %vm525, %v1568, %v1572
      %s1574 = scalar_lea.vmem %s1, 16
      %v1575 = vld [vmem:[%s1574] sm:$0x3]
      %v1576 = vunpack.c.l.b16 %v1475
      %v1577 = vunpack.c.l.b16 %v1489
      %v1578 = vunpack.c.l.b16 %v1503
      %v1579 = vunpack.c.l.b16 %v1517
      %v1580 = vunpack.c.l.b16 %v1531
      %v1581 = vunpack.c.l.b16 %v1545
      %v1582 = vunpack.c.l.b16 %v1559
      %v1583 = vunpack.c.l.b16 %v1573
      %v1584 = vpack.c.b16 %v1577, %v1576
      %v1585 = vpack.c.b16 %v1579, %v1578
      %v1586 = vpack.c.b16 %v1581, %v1580
      %v1587 = vpack.c.b16 %v1583, %v1582
      %v1589 = vsel %vm325, %v1584, 0
      %v1592 = vsel %vm325, %v1585, 0
      %v1595 = vsel %vm325, %v1586, 0
      %v1598 = vsel %vm325, %v1587, 0
      %v1601 = vsel %vm338, %v1575, 0
      %1603 = vmatprep.subr.bf16.mxu0 0
      %1604 = vmatpush1.bf16.msra.mxu0 %v1601
      %1605 = vmatprep.subr.bf16.mxu0 0
      %1606 = vmatpush1.bf16.msra.mxu0 0
      %1607 = vmatprep.subr.bf16.mxu0 0
      %1608 = vmatpush1.bf16.msra.mxu0 0
      %1609 = vmatprep.subr.bf16.mxu0 0
      %1610 = vmatpush1.bf16.msra.mxu0 0
      %1611 = vmatprep.subr.bf16.mxu0 0
      %1612 = vmatpush1.bf16.msra.mxu0 0
      %1613 = vmatprep.subr.bf16.mxu0 0
      %1614 = vmatpush1.bf16.msra.mxu0 0
      %1615 = vmatprep.subr.bf16.mxu0 0
      %1616 = vmatpush1.bf16.msra.mxu0 0
      %1617 = vmatprep.subr.bf16.mxu0 0
      %1618 = vmatpush1.bf16.msra.mxu0 0
      %1619 = vmatprep.subr.bf16.mxu0 0
      %1620 = vmatpush1.bf16.msra.mxu0 0
      %1621 = vmatprep.subr.bf16.mxu0 0
      %1622 = vmatpush1.bf16.msra.mxu0 0
      %1623 = vmatprep.subr.bf16.mxu0 0
      %1624 = vmatpush1.bf16.msra.mxu0 0
      %1625 = vmatprep.subr.bf16.mxu0 0
      %1626 = vmatpush1.bf16.msra.mxu0 0
      %1627 = vmatprep.subr.bf16.mxu0 0
      %1628 = vmatpush1.bf16.msra.mxu0 0
      %1629 = vmatprep.subr.bf16.mxu0 0
      %1630 = vmatpush1.bf16.msra.mxu0 0
      %1631 = vmatprep.subr.bf16.mxu0 0
      %1632 = vmatpush1.bf16.msra.mxu0 0
      %1633 = vmatprep.subr.bf16.mxu0 0
      %1634 = vmatpush1.bf16.msra.mxu0 0
      %1635 = vmatprep.mubr.bf16.mxu0 0
      %1636 = vmatmul.mubr.bf16.gmra.mrb[0].mxu0 %v1589
      %v1637 = vpop.f32.mrb[0].mxu0
      %v1638 = vadd.f32 0.0, %v1637
      %v1639 = vpop.f32.mrb[0].mxu0
      %v1640 = vpop.f32.mrb[0].mxu0
      %v1641 = vadd.f32 0.0, %v1640
      %v1642 = vpop.f32.mrb[0].mxu0
      %1643 = vmatprep.mubr.bf16.mxu0 0
      %1644 = vmatmul.mubr.bf16.gmra.mrb[0].mxu0 %v1592
      %v1645 = vpop.f32.mrb[0].mxu0
      %v1646 = vadd.f32 0.0, %v1645
      %v1647 = vpop.f32.mrb[0].mxu0
      %v1648 = vpop.f32.mrb[0].mxu0
      %v1649 = vadd.f32 0.0, %v1648
      %v1650 = vpop.f32.mrb[0].mxu0
      %1651 = vmatprep.mubr.bf16.mxu0 0
      %1652 = vmatmul.mubr.bf16.gmra.mrb[0].mxu0 %v1595
      %v1653 = vpop.f32.mrb[0].mxu0
      %v1654 = vadd.f32 0.0, %v1653
      %v1655 = vpop.f32.mrb[0].mxu0
      %v1656 = vpop.f32.mrb[0].mxu0
      %v1657 = vadd.f32 0.0, %v1656
      %v1658 = vpop.f32.mrb[0].mxu0
      %1659 = vmatprep.mubr.bf16.mxu0 0
      %1660 = vmatmul.mubr.bf16.gmra.mrb[0].mxu0 %v1598
      %v1661 = vpop.f32.mrb[0].mxu0
      %v1662 = vadd.f32 0.0, %v1661
      %v1663 = vpop.f32.mrb[0].mxu0
      %v1664 = vpop.f32.mrb[0].mxu0
      %v1665 = vadd.f32 0.0, %v1664
      %v1666 = vpop.f32.mrb[0].mxu0
      %1667 = vdwg.mxu0
      %v1668 = vadd.f32 %v1438, %v1638
      %v1669 = vadd.f32 %v1439, %v1641
      %v1670 = vadd.f32 %v1440, %v1646
      %v1671 = vadd.f32 %v1441, %v1649
      %v1672 = vadd.f32 %v1442, %v1654
      %v1673 = vadd.f32 %v1443, %v1657
      %v1674 = vadd.f32 %v1444, %v1662
      %v1675 = vadd.f32 %v1445, %v1665
      %v1676 = vld [vmem:[%s2] sm:$0x1]
      %v1678 = vlaneseq
      %v1679 = vshrl.u32 %v1678, 7
      %v1680 = vsub.s32 0, %v1679
      %v1681 = vrot.slane %v1676, %v1680
      %v1683 = vadd.f32 %v1668, %v1681
      %v1684 = vadd.f32 %v1669, %v1681
      %v1685 = vadd.f32 %v1670, %v1681
      %v1686 = vadd.f32 %v1671, %v1681
      %v1687 = vadd.f32 %v1672, %v1681
      %v1688 = vadd.f32 %v1673, %v1681
      %v1689 = vadd.f32 %v1674, %v1681
      %v1690 = vadd.f32 %v1675, %v1681
      %v1691 = vmax.f32 %v1683, 0.0
      %v1692 = vmax.f32 %v1684, 0.0
      %v1693 = vmax.f32 %v1685, 0.0
      %v1694 = vmax.f32 %v1686, 0.0
      %v1695 = vmax.f32 %v1687, 0.0
      %v1696 = vmax.f32 %v1688, 0.0
      %v1697 = vmax.f32 %v1689, 0.0
      %v1698 = vmax.f32 %v1690, 0.0
      %1699 = vst [vmem:[#allocation2] sm:$0xf] 0
      %1700 = vst [vmem:[#allocation2 + $0x4] sm:$0x1] 0
      %1701 = vst [vmem:[#allocation2 + $0x8] sm:$0xf] 0
      %1702 = vst [vmem:[#allocation2 + $0xc] sm:$0x1] 0
      %1703 = vst [vmem:[#allocation2 + $0x10] sm:$0xf] 0
      %1704 = vst [vmem:[#allocation2 + $0x14] sm:$0x1] 0
      %1705 = vst [vmem:[#allocation2 + $0x18] sm:$0xf] 0
      %1706 = vst [vmem:[#allocation2 + $0x1c] sm:$0x1] 0
      %1707 = vst [vmem:[#allocation2 + $0x20] sm:$0xf] 0
      %1708 = vst [vmem:[#allocation2 + $0x24] sm:$0x1] 0
      %1709 = vst [vmem:[#allocation2 + $0x28] sm:$0xf] 0
      %1710 = vst [vmem:[#allocation2 + $0x2c] sm:$0x1] 0
      %1711 = vst [vmem:[#allocation2 + $0x30] sm:$0xf] 0
      %1712 = vst [vmem:[#allocation2 + $0x34] sm:$0x1] 0
      %1713 = vst [vmem:[#allocation2 + $0x38] sm:$0xf] 0
      %1714 = vst [vmem:[#allocation2 + $0x3c] sm:$0x1] 0
      %1715 = vst [vmem:[#allocation2 + $0x40] sm:$0xf] 0
      %1716 = vst [vmem:[#allocation2 + $0x44] sm:$0x1] 0
      %1717 = vst [vmem:[#allocation2 + $0x48] sm:$0xf] 0
      %1718 = vst [vmem:[#allocation2 + $0x4c] sm:$0x1] 0
      %v1719 = vpack.c.bf16 %v1691, %v1691
      %v1720 = vpack.c.bf16 %v1692, %v1692
      %v1721 = vpack.c.bf16 %v1693, %v1693
      %v1722 = vpack.c.bf16 %v1694, %v1694
      %v1723 = vpack.c.bf16 %v1695, %v1695
      %v1724 = vpack.c.bf16 %v1696, %v1696
      %v1725 = vpack.c.bf16 %v1697, %v1697
      %v1726 = vpack.c.bf16 %v1698, %v1698
      %v1735 = vunpack.c.l.b16 %v1719
      %v1736 = vunpack.c.l.b16 %v1720
      %v1737 = vunpack.c.l.b16 %v1721
      %v1738 = vunpack.c.l.b16 %v1722
      %v1739 = vunpack.c.l.b16 %v1723
      %v1740 = vunpack.c.l.b16 %v1724
      %v1741 = vunpack.c.l.b16 %v1725
      %v1742 = vunpack.c.l.b16 %v1726
      %v1743 = vpack.c.b16 %v1735, %v1735
      %v1744 = vpack.c.b16 %v1736, %v1736
      %v1745 = vpack.c.b16 %v1737, %v1737
      %v1746 = vpack.c.b16 %v1738, %v1738
      %v1747 = vpack.c.b16 %v1739, %v1739
      %v1748 = vpack.c.b16 %v1740, %v1740
      %v1749 = vpack.c.b16 %v1741, %v1741
      %v1750 = vpack.c.b16 %v1742, %v1742
      %v1752 = vshrl.u32 %v1743, 16
      %v1754 = vrot.slane %v1752, 7
      %v1755 = vshll.u32 %v1743, 16
      %v1757 = vor.u32 %v1754, %v1755
      %v1758 = vrot.slane %v1754, 4
      %v1760 = vshrl.u32 %v1744, 16
      %v1762 = vrot.slane %v1760, 7
      %v1763 = vshll.u32 %v1744, 16
      %v1765 = vor.u32 %v1762, %v1763
      %v1766 = vrot.slane %v1762, 4
      %v1768 = vshrl.u32 %v1745, 16
      %v1770 = vrot.slane %v1768, 7
      %v1771 = vshll.u32 %v1745, 16
      %v1773 = vor.u32 %v1770, %v1771
      %v1774 = vrot.slane %v1770, 4
      %v1776 = vshrl.u32 %v1746, 16
      %v1778 = vrot.slane %v1776, 7
      %v1779 = vshll.u32 %v1746, 16
      %v1781 = vor.u32 %v1778, %v1779
      %v1782 = vrot.slane %v1778, 4
      %v1784 = vshrl.u32 %v1747, 16
      %v1786 = vrot.slane %v1784, 7
      %v1787 = vshll.u32 %v1747, 16
      %v1789 = vor.u32 %v1786, %v1787
      %v1790 = vrot.slane %v1786, 4
      %v1792 = vshrl.u32 %v1748, 16
      %v1794 = vrot.slane %v1792, 7
      %v1795 = vshll.u32 %v1748, 16
      %v1797 = vor.u32 %v1794, %v1795
      %v1798 = vrot.slane %v1794, 4
      %v1800 = vshrl.u32 %v1749, 16
      %v1802 = vrot.slane %v1800, 7
      %v1803 = vshll.u32 %v1749, 16
      %v1805 = vor.u32 %v1802, %v1803
      %v1806 = vrot.slane %v1802, 4
      %v1808 = vshrl.u32 %v1750, 16
      %v1810 = vrot.slane %v1808, 7
      %v1811 = vshll.u32 %v1750, 16
      %v1813 = vor.u32 %v1810, %v1811
      %v1814 = vrot.slane %v1810, 4
      %s1831 = scalar_lea.vmem [#allocation2], 8
      %vm1832 = vcmask 1043456
      %vm1833 = vsmask.f32 7938
      %vm1834 = vmand %vm1832, %vm1833
      %v1835 = vld [vmem:[%s1831] sm:$0xf]
      %v1836 = vsel %vm1834, %v1757, %v1835
      %1837 = vst [vmem:[%s1831] sm:$0xf] %v1836
      %vm1838 = vcmask 1040384
      %vm1839 = vsmask.f32 256
      %vm1840 = vmand %vm1838, %vm1839
      %v1841 = vld [vmem:[%s1831 + $0x4] sm:$0x1]
      %v1842 = vsel %vm1840, %v1758, %v1841
      %1843 = vst [vmem:[%s1831 + $0x4] sm:$0x1] %v1842
      %v1844 = vld [vmem:[%s1831 + $0x8] sm:$0xf]
      %v1845 = vsel %vm1834, %v1765, %v1844
      %1846 = vst [vmem:[%s1831 + $0x8] sm:$0xf] %v1845
      %v1847 = vld [vmem:[%s1831 + $0xc] sm:$0x1]
      %v1848 = vsel %vm1840, %v1766, %v1847
      %1849 = vst [vmem:[%s1831 + $0xc] sm:$0x1] %v1848
      %v1850 = vld [vmem:[%s1831 + $0x10] sm:$0xf]
      %v1851 = vsel %vm1834, %v1773, %v1850
      %1852 = vst [vmem:[%s1831 + $0x10] sm:$0xf] %v1851
      %v1853 = vld [vmem:[%s1831 + $0x14] sm:$0x1]
      %v1854 = vsel %vm1840, %v1774, %v1853
      %1855 = vst [vmem:[%s1831 + $0x14] sm:$0x1] %v1854
      %v1856 = vld [vmem:[%s1831 + $0x18] sm:$0xf]
      %v1857 = vsel %vm1834, %v1781, %v1856
      %1858 = vst [vmem:[%s1831 + $0x18] sm:$0xf] %v1857
      %v1859 = vld [vmem:[%s1831 + $0x1c] sm:$0x1]
      %v1860 = vsel %vm1840, %v1782, %v1859
      %1861 = vst [vmem:[%s1831 + $0x1c] sm:$0x1] %v1860
      %v1862 = vld [vmem:[%s1831 + $0x20] sm:$0xf]
      %v1863 = vsel %vm1834, %v1789, %v1862
      %1864 = vst [vmem:[%s1831 + $0x20] sm:$0xf] %v1863
      %v1865 = vld [vmem:[%s1831 + $0x24] sm:$0x1]
      %v1866 = vsel %vm1840, %v1790, %v1865
      %1867 = vst [vmem:[%s1831 + $0x24] sm:$0x1] %v1866
      %v1868 = vld [vmem:[%s1831 + $0x28] sm:$0xf]
      %v1869 = vsel %vm1834, %v1797, %v1868
      %1870 = vst [vmem:[%s1831 + $0x28] sm:$0xf] %v1869
      %v1871 = vld [vmem:[%s1831 + $0x2c] sm:$0x1]
      %v1872 = vsel %vm1840, %v1798, %v1871
      %1873 = vst [vmem:[%s1831 + $0x2c] sm:$0x1] %v1872
      %v1874 = vld [vmem:[%s1831 + $0x30] sm:$0xf]
      %v1875 = vsel %vm1834, %v1805, %v1874
      %1876 = vst [vmem:[%s1831 + $0x30] sm:$0xf] %v1875
      %v1877 = vld [vmem:[%s1831 + $0x34] sm:$0x1]
      %v1878 = vsel %vm1840, %v1806, %v1877
      %1879 = vst [vmem:[%s1831 + $0x34] sm:$0x1] %v1878
      %v1880 = vld [vmem:[%s1831 + $0x38] sm:$0xf]
      %v1881 = vsel %vm1834, %v1813, %v1880
      %1882 = vst [vmem:[%s1831 + $0x38] sm:$0xf] %v1881
      %v1883 = vld [vmem:[%s1831 + $0x3c] sm:$0x1]
      %v1884 = vsel %vm1840, %v1814, %v1883
      %1885 = vst [vmem:[%s1831 + $0x3c] sm:$0x1] %v1884
      %v1886 = vld [vmem:[#allocation2] sm:$0xf]
      %v1887 = vld [vmem:[#allocation2 + $0x8] sm:$0xf]
      %v1888 = vld [vmem:[#allocation2 + $0x10] sm:$0xf]
      %v1889 = vld [vmem:[#allocation2 + $0x18] sm:$0xf]
      %v1890 = vld [vmem:[#allocation2 + $0x20] sm:$0xf]
      %v1891 = vld [vmem:[#allocation2 + $0x28] sm:$0xf]
      %v1892 = vld [vmem:[#allocation2 + $0x30] sm:$0xf]
      %v1893 = vld [vmem:[#allocation2 + $0x38] sm:$0xf]
      %v1894 = vld [vmem:[%s3] sm:$0xf]
      %v1895 = vld [vmem:[%s3 + $0x4] sm:$0xf]
      %v1896 = vld [vmem:[%s3 + $0x8] sm:$0xf]
      %v1897 = vld [vmem:[%s3 + $0xc] sm:$0xf]
      %v1898 = vld [vmem:[%s3 + $0x10] sm:$0xf]
      %v1899 = vld [vmem:[%s3 + $0x14] sm:$0xf]
      %v1900 = vld [vmem:[%s3 + $0x18] sm:$0xf]
      %v1901 = vld [vmem:[%s3 + $0x1c] sm:$0xf]
      %v1902 = vld [vmem:[%s3 + $0x20] sm:$0xf]
      %v1903 = vld [vmem:[%s3 + $0x24] sm:$0xf]
      %v1904 = vld [vmem:[%s3 + $0x28] sm:$0xf]
      %v1905 = vld [vmem:[%s3 + $0x2c] sm:$0xf]
      %v1906 = vld [vmem:[%s3 + $0x30] sm:$0xf]
      %v1907 = vld [vmem:[%s3 + $0x34] sm:$0xf]
      %v1908 = vld [vmem:[%s3 + $0x38] sm:$0xf]
      %v1909 = vld [vmem:[%s3 + $0x3c] sm:$0xf]
      %v1910 = vld [vmem:[#allocation2 + $0x4] sm:$0x1]
      %v1911 = vld [vmem:[#allocation2 + $0xc] sm:$0x1]
      %v1912 = vld [vmem:[#allocation2 + $0x14] sm:$0x1]
      %v1913 = vld [vmem:[#allocation2 + $0x1c] sm:$0x1]
      %v1914 = vld [vmem:[#allocation2 + $0x24] sm:$0x1]
      %v1915 = vld [vmem:[#allocation2 + $0x2c] sm:$0x1]
      %v1916 = vld [vmem:[#allocation2 + $0x34] sm:$0x1]
      %v1917 = vld [vmem:[#allocation2 + $0x3c] sm:$0x1]
      %v1919 = vshrl.u32 %v1886, 16
      %v1921 = vrot.slane %v1919, 4
      %v1922 = vshll.u32 %v1886, 16
      %v1924 = vrot.slane %v1922, 5
      %v1925 = vor.u32 %v1921, %v1924
      %v1926 = vrot.slane %v1925, 4
      %v1928 = vshll.u32 %v1910, 16
      %v1930 = vrot.slane %v1928, 5
      %v1931 = vsel %vm525, %v1926, %v1930
      %v1933 = vshrl.u32 %v1887, 16
      %v1935 = vrot.slane %v1933, 4
      %v1936 = vshll.u32 %v1887, 16
      %v1938 = vrot.slane %v1936, 5
      %v1939 = vor.u32 %v1935, %v1938
      %v1940 = vrot.slane %v1939, 4
      %v1942 = vshll.u32 %v1911, 16
      %v1944 = vrot.slane %v1942, 5
      %v1945 = vsel %vm525, %v1940, %v1944
      %v1947 = vshrl.u32 %v1888, 16
      %v1949 = vrot.slane %v1947, 4
      %v1950 = vshll.u32 %v1888, 16
      %v1952 = vrot.slane %v1950, 5
      %v1953 = vor.u32 %v1949, %v1952
      %v1954 = vrot.slane %v1953, 4
      %v1956 = vshll.u32 %v1912, 16
      %v1958 = vrot.slane %v1956, 5
      %v1959 = vsel %vm525, %v1954, %v1958
      %v1961 = vshrl.u32 %v1889, 16
      %v1963 = vrot.slane %v1961, 4
      %v1964 = vshll.u32 %v1889, 16
      %v1966 = vrot.slane %v1964, 5
      %v1967 = vor.u32 %v1963, %v1966
      %v1968 = vrot.slane %v1967, 4
      %v1970 = vshll.u32 %v1913, 16
      %v1972 = vrot.slane %v1970, 5
      %v1973 = vsel %vm525, %v1968, %v1972
      %v1975 = vshrl.u32 %v1890, 16
      %v1977 = vrot.slane %v1975, 4
      %v1978 = vshll.u32 %v1890, 16
      %v1980 = vrot.slane %v1978, 5
      %v1981 = vor.u32 %v1977, %v1980
      %v1982 = vrot.slane %v1981, 4
      %v1984 = vshll.u32 %v1914, 16
      %v1986 = vrot.slane %v1984, 5
      %v1987 = vsel %vm525, %v1982, %v1986
      %v1989 = vshrl.u32 %v1891, 16
      %v1991 = vrot.slane %v1989, 4
      %v1992 = vshll.u32 %v1891, 16
      %v1994 = vrot.slane %v1992, 5
      %v1995 = vor.u32 %v1991, %v1994
      %v1996 = vrot.slane %v1995, 4
      %v1998 = vshll.u32 %v1915, 16
      %v2000 = vrot.slane %v1998, 5
      %v2001 = vsel %vm525, %v1996, %v2000
      %v2003 = vshrl.u32 %v1892, 16
      %v2005 = vrot.slane %v2003, 4
      %v2006 = vshll.u32 %v1892, 16
      %v2008 = vrot.slane %v2006, 5
      %v2009 = vor.u32 %v2005, %v2008
      %v2010 = vrot.slane %v2009, 4
      %v2012 = vshll.u32 %v1916, 16
      %v2014 = vrot.slane %v2012, 5
      %v2015 = vsel %vm525, %v2010, %v2014
      %v2017 = vshrl.u32 %v1893, 16
      %v2019 = vrot.slane %v2017, 4
      %v2020 = vshll.u32 %v1893, 16
      %v2022 = vrot.slane %v2020, 5
      %v2023 = vor.u32 %v2019, %v2022
      %v2024 = vrot.slane %v2023, 4
      %v2026 = vshll.u32 %v1917, 16
      %v2028 = vrot.slane %v2026, 5
      %v2029 = vsel %vm525, %v2024, %v2028
      %s2030 = scalar_lea.vmem %s3, 64
      %v2031 = vld [vmem:[%s2030] sm:$0xf]
      %v2032 = vld [vmem:[%s2030 + $0x4] sm:$0xf]
      %v2033 = vld [vmem:[%s2030 + $0x8] sm:$0xf]
      %v2034 = vld [vmem:[%s2030 + $0xc] sm:$0xf]
      %v2035 = vld [vmem:[%s2030 + $0x10] sm:$0xf]
      %v2036 = vld [vmem:[%s2030 + $0x14] sm:$0xf]
      %v2037 = vld [vmem:[%s2030 + $0x18] sm:$0xf]
      %v2038 = vld [vmem:[%s2030 + $0x1c] sm:$0xf]
      %v2039 = vld [vmem:[%s2030 + $0x20] sm:$0xf]
      %v2040 = vld [vmem:[%s2030 + $0x24] sm:$0xf]
      %v2041 = vld [vmem:[%s2030 + $0x28] sm:$0xf]
      %v2042 = vld [vmem:[%s2030 + $0x2c] sm:$0xf]
      %v2043 = vld [vmem:[%s2030 + $0x30] sm:$0xf]
      %v2044 = vld [vmem:[%s2030 + $0x34] sm:$0xf]
      %v2045 = vld [vmem:[%s2030 + $0x38] sm:$0xf]
      %v2046 = vld [vmem:[%s2030 + $0x3c] sm:$0xf]
      %v2047 = vunpack.c.l.b16 %v1931
      %v2048 = vunpack.c.l.b16 %v1945
      %v2049 = vunpack.c.l.b16 %v1959
      %v2050 = vunpack.c.l.b16 %v1973
      %v2051 = vunpack.c.l.b16 %v1987
      %v2052 = vunpack.c.l.b16 %v2001
      %v2053 = vunpack.c.l.b16 %v2015
      %v2054 = vunpack.c.l.b16 %v2029
      %v2055 = vpack.c.b16 %v2048, %v2047
      %v2056 = vpack.c.b16 %v2050, %v2049
      %v2057 = vpack.c.b16 %v2052, %v2051
      %v2058 = vpack.c.b16 %v2054, %v2053
      %v2079 = vunpack.c.l.b16 %v2031
      %v2080 = vunpack.c.l.b16 %v2032
      %v2081 = vunpack.c.l.b16 %v2033
      %v2082 = vunpack.c.l.b16 %v2034
      %v2083 = vunpack.c.l.b16 %v2035
      %v2084 = vunpack.c.l.b16 %v2036
      %v2085 = vunpack.c.l.b16 %v2037
      %v2086 = vunpack.c.l.b16 %v2038
      %v2087 = vunpack.c.l.b16 %v2039
      %v2088 = vunpack.c.l.b16 %v2040
      %v2089 = vunpack.c.l.b16 %v2041
      %v2090 = vunpack.c.l.b16 %v2042
      %v2091 = vunpack.c.l.b16 %v2043
      %v2092 = vunpack.c.l.b16 %v2044
      %v2093 = vunpack.c.l.b16 %v2045
      %v2094 = vunpack.c.l.b16 %v2046
      %v2095 = vpack.c.b16 %v2080, %v2079
      %v2096 = vpack.c.b16 %v2082, %v2081
      %v2097 = vpack.c.b16 %v2084, %v2083
      %v2098 = vpack.c.b16 %v2086, %v2085
      %v2099 = vpack.c.b16 %v2088, %v2087
      %v2100 = vpack.c.b16 %v2090, %v2089
      %v2101 = vpack.c.b16 %v2092, %v2091
      %v2102 = vpack.c.b16 %v2094, %v2093
      %2111 = vmatprep.subr.bf16.mxu0 0
      %2112 = vmatpush1.bf16.msra.mxu0 %v2095
      %2113 = vmatprep.subr.bf16.mxu0 0
      %2114 = vmatpush1.bf16.msra.mxu0 %v2096
      %2115 = vmatprep.subr.bf16.mxu0 0
      %2116 = vmatpush1.bf16.msra.mxu0 %v2097
      %2117 = vmatprep.subr.bf16.mxu0 0
      %2118 = vmatpush1.bf16.msra.mxu0 %v2098
      %2119 = vmatprep.subr.bf16.mxu0 0
      %2120 = vmatpush1.bf16.msra.mxu0 %v2099
      %2121 = vmatprep.subr.bf16.mxu0 0
      %2122 = vmatpush1.bf16.msra.mxu0 %v2100
      %2123 = vmatprep.subr.bf16.mxu0 0
      %2124 = vmatpush1.bf16.msra.mxu0 %v2101
      %2125 = vmatprep.subr.bf16.mxu0 0
      %2126 = vmatpush1.bf16.msra.mxu0 %v2102
      %2127 = vmatprep.subr.bf16.mxu0 0
      %2128 = vmatpush1.bf16.msra.mxu0 0
      %2129 = vmatprep.subr.bf16.mxu0 0
      %2130 = vmatpush1.bf16.msra.mxu0 0
      %2131 = vmatprep.subr.bf16.mxu0 0
      %2132 = vmatpush1.bf16.msra.mxu0 0
      %2133 = vmatprep.subr.bf16.mxu0 0
      %2134 = vmatpush1.bf16.msra.mxu0 0
      %2135 = vmatprep.subr.bf16.mxu0 0
      %2136 = vmatpush1.bf16.msra.mxu0 0
      %2137 = vmatprep.subr.bf16.mxu0 0
      %2138 = vmatpush1.bf16.msra.mxu0 0
      %2139 = vmatprep.subr.bf16.mxu0 0
      %2140 = vmatpush1.bf16.msra.mxu0 0
      %2141 = vmatprep.subr.bf16.mxu0 0
      %2142 = vmatpush1.bf16.msra.mxu0 0
      %2143 = vmatprep.mubr.bf16.mxu0 0
      %2144 = vmatmul.mubr.bf16.gmra.mrb[0].mxu0 %v2055
      %v2145 = vpop.f32.mrb[0].mxu0
      %v2146 = vadd.f32 0.0, %v2145
      %v2147 = vpop.f32.mrb[0].mxu0
      %v2148 = vpop.f32.mrb[0].mxu0
      %v2149 = vadd.f32 0.0, %v2148
      %v2150 = vpop.f32.mrb[0].mxu0
      %2151 = vmatprep.mubr.bf16.mxu0 0
      %2152 = vmatmul.mubr.bf16.gmra.mrb[0].mxu0 %v2056
      %v2153 = vpop.f32.mrb[0].mxu0
      %v2154 = vadd.f32 0.0, %v2153
      %v2155 = vpop.f32.mrb[0].mxu0
      %v2156 = vpop.f32.mrb[0].mxu0
      %v2157 = vadd.f32 0.0, %v2156
      %v2158 = vpop.f32.mrb[0].mxu0
      %2159 = vmatprep.mubr.bf16.mxu0 0
      %2160 = vmatmul.mubr.bf16.gmra.mrb[0].mxu0 %v2057
      %v2161 = vpop.f32.mrb[0].mxu0
      %v2162 = vadd.f32 0.0, %v2161
      %v2163 = vpop.f32.mrb[0].mxu0
      %v2164 = vpop.f32.mrb[0].mxu0
      %v2165 = vadd.f32 0.0, %v2164
      %v2166 = vpop.f32.mrb[0].mxu0
      %2167 = vmatprep.mubr.bf16.mxu0 0
      %2168 = vmatmul.mubr.bf16.gmra.mrb[0].mxu0 %v2058
      %v2169 = vpop.f32.mrb[0].mxu0
      %v2170 = vadd.f32 0.0, %v2169
      %v2171 = vpop.f32.mrb[0].mxu0
      %v2172 = vpop.f32.mrb[0].mxu0
      %v2173 = vadd.f32 0.0, %v2172
      %v2174 = vpop.f32.mrb[0].mxu0
      %2175 = vdwg.mxu0
      %v2184 = vunpack.c.l.b16 %v1886
      %v2185 = vunpack.c.l.b16 %v1887
      %v2186 = vunpack.c.l.b16 %v1888
      %v2187 = vunpack.c.l.b16 %v1889
      %v2188 = vunpack.c.l.b16 %v1890
      %v2189 = vunpack.c.l.b16 %v1891
      %v2190 = vunpack.c.l.b16 %v1892
      %v2191 = vunpack.c.l.b16 %v1893
      %v2192 = vpack.c.b16 %v2185, %v2184
      %v2193 = vpack.c.b16 %v2187, %v2186
      %v2194 = vpack.c.b16 %v2189, %v2188
      %v2195 = vpack.c.b16 %v2191, %v2190
      %v2216 = vunpack.c.l.b16 %v1894
      %v2217 = vunpack.c.l.b16 %v1895
      %v2218 = vunpack.c.l.b16 %v1896
      %v2219 = vunpack.c.l.b16 %v1897
      %v2220 = vunpack.c.l.b16 %v1898
      %v2221 = vunpack.c.l.b16 %v1899
      %v2222 = vunpack.c.l.b16 %v1900
      %v2223 = vunpack.c.l.b16 %v1901
      %v2224 = vunpack.c.l.b16 %v1902
      %v2225 = vunpack.c.l.b16 %v1903
      %v2226 = vunpack.c.l.b16 %v1904
      %v2227 = vunpack.c.l.b16 %v1905
      %v2228 = vunpack.c.l.b16 %v1906
      %v2229 = vunpack.c.l.b16 %v1907
      %v2230 = vunpack.c.l.b16 %v1908
      %v2231 = vunpack.c.l.b16 %v1909
      %v2232 = vpack.c.b16 %v2217, %v2216
      %v2233 = vpack.c.b16 %v2219, %v2218
      %v2234 = vpack.c.b16 %v2221, %v2220
      %v2235 = vpack.c.b16 %v2223, %v2222
      %v2236 = vpack.c.b16 %v2225, %v2224
      %v2237 = vpack.c.b16 %v2227, %v2226
      %v2238 = vpack.c.b16 %v2229, %v2228
      %v2239 = vpack.c.b16 %v2231, %v2230
      %2248 = vmatprep.subr.bf16.mxu0 0
      %2249 = vmatpush1.bf16.msra.mxu0 %v2232
      %2250 = vmatprep.subr.bf16.mxu0 0
      %2251 = vmatpush1.bf16.msra.mxu0 %v2233
      %2252 = vmatprep.subr.bf16.mxu0 0
      %2253 = vmatpush1.bf16.msra.mxu0 %v2234
      %2254 = vmatprep.subr.bf16.mxu0 0
      %2255 = vmatpush1.bf16.msra.mxu0 %v2235
      %2256 = vmatprep.subr.bf16.mxu0 0
      %2257 = vmatpush1.bf16.msra.mxu0 %v2236
      %2258 = vmatprep.subr.bf16.mxu0 0
      %2259 = vmatpush1.bf16.msra.mxu0 %v2237
      %2260 = vmatprep.subr.bf16.mxu0 0
      %2261 = vmatpush1.bf16.msra.mxu0 %v2238
      %2262 = vmatprep.subr.bf16.mxu0 0
      %2263 = vmatpush1.bf16.msra.mxu0 %v2239
      %2264 = vmatprep.subr.bf16.mxu0 0
      %2265 = vmatpush1.bf16.msra.mxu0 0
      %2266 = vmatprep.subr.bf16.mxu0 0
      %2267 = vmatpush1.bf16.msra.mxu0 0
      %2268 = vmatprep.subr.bf16.mxu0 0
      %2269 = vmatpush1.bf16.msra.mxu0 0
      %2270 = vmatprep.subr.bf16.mxu0 0
      %2271 = vmatpush1.bf16.msra.mxu0 0
      %2272 = vmatprep.subr.bf16.mxu0 0
      %2273 = vmatpush1.bf16.msra.mxu0 0
      %2274 = vmatprep.subr.bf16.mxu0 0
      %2275 = vmatpush1.bf16.msra.mxu0 0
      %2276 = vmatprep.subr.bf16.mxu0 0
      %2277 = vmatpush1.bf16.msra.mxu0 0
      %2278 = vmatprep.subr.bf16.mxu0 0
      %2279 = vmatpush1.bf16.msra.mxu0 0
      %2280 = vmatprep.mubr.bf16.mxu0 0
      %2281 = vmatmul.mubr.bf16.gmra.mrb[0].mxu0 %v2192
      %v2282 = vpop.f32.mrb[0].mxu0
      %v2283 = vadd.f32 %v2146, %v2282
      %v2284 = vpop.f32.mrb[0].mxu0
      %v2285 = vpop.f32.mrb[0].mxu0
      %v2286 = vadd.f32 %v2149, %v2285
      %v2287 = vpop.f32.mrb[0].mxu0
      %2288 = vmatprep.mubr.bf16.mxu0 0
      %2289 = vmatmul.mubr.bf16.gmra.mrb[0].mxu0 %v2193
      %v2290 = vpop.f32.mrb[0].mxu0
      %v2291 = vadd.f32 %v2154, %v2290
      %v2292 = vpop.f32.mrb[0].mxu0
      %v2293 = vpop.f32.mrb[0].mxu0
      %v2294 = vadd.f32 %v2157, %v2293
      %v2295 = vpop.f32.mrb[0].mxu0
      %2296 = vmatprep.mubr.bf16.mxu0 0
      %2297 = vmatmul.mubr.bf16.gmra.mrb[0].mxu0 %v2194
      %v2298 = vpop.f32.mrb[0].mxu0
      %v2299 = vadd.f32 %v2162, %v2298
      %v2300 = vpop.f32.mrb[0].mxu0
      %v2301 = vpop.f32.mrb[0].mxu0
      %v2302 = vadd.f32 %v2165, %v2301
      %v2303 = vpop.f32.mrb[0].mxu0
      %2304 = vmatprep.mubr.bf16.mxu0 0
      %2305 = vmatmul.mubr.bf16.gmra.mrb[0].mxu0 %v2195
      %v2306 = vpop.f32.mrb[0].mxu0
      %v2307 = vadd.f32 %v2170, %v2306
      %v2308 = vpop.f32.mrb[0].mxu0
      %v2309 = vpop.f32.mrb[0].mxu0
      %v2310 = vadd.f32 %v2173, %v2309
      %v2311 = vpop.f32.mrb[0].mxu0
      %2312 = vdwg.mxu0
      %v2313 = vld [vmem:[#allocation2] sm:$0xe]
      %v2314 = vld [vmem:[#allocation2 + $0x8] sm:$0xe]
      %v2315 = vld [vmem:[#allocation2 + $0x10] sm:$0xe]
      %v2316 = vld [vmem:[#allocation2 + $0x18] sm:$0xe]
      %v2317 = vld [vmem:[#allocation2 + $0x20] sm:$0xe]
      %v2318 = vld [vmem:[#allocation2 + $0x28] sm:$0xe]
      %v2319 = vld [vmem:[#allocation2 + $0x30] sm:$0xe]
      %v2320 = vld [vmem:[#allocation2 + $0x38] sm:$0xe]
      %vm2337 = vcmask 1042432
      %vm2338 = vcmask 1046532
      %vm2339 = vmor %vm2337, %vm2338
      %v2340 = vrot.slane %v2313, 5
      %v2341 = vrot.slane %v2340, 4
      %v2342 = vrot.slane %v1910, 5
      %v2343 = vsel %vm2339, %v2341, %v2342
      %v2344 = vrot.slane %v2314, 5
      %v2345 = vrot.slane %v2344, 4
      %v2346 = vrot.slane %v1911, 5
      %v2347 = vsel %vm2339, %v2345, %v2346
      %v2348 = vrot.slane %v2315, 5
      %v2349 = vrot.slane %v2348, 4
      %v2350 = vrot.slane %v1912, 5
      %v2351 = vsel %vm2339, %v2349, %v2350
      %v2352 = vrot.slane %v2316, 5
      %v2353 = vrot.slane %v2352, 4
      %v2354 = vrot.slane %v1913, 5
      %v2355 = vsel %vm2339, %v2353, %v2354
      %v2356 = vrot.slane %v2317, 5
      %v2357 = vrot.slane %v2356, 4
      %v2358 = vrot.slane %v1914, 5
      %v2359 = vsel %vm2339, %v2357, %v2358
      %v2360 = vrot.slane %v2318, 5
      %v2361 = vrot.slane %v2360, 4
      %v2362 = vrot.slane %v1915, 5
      %v2363 = vsel %vm2339, %v2361, %v2362
      %v2364 = vrot.slane %v2319, 5
      %v2365 = vrot.slane %v2364, 4
      %v2366 = vrot.slane %v1916, 5
      %v2367 = vsel %vm2339, %v2365, %v2366
      %v2368 = vrot.slane %v2320, 5
      %v2369 = vrot.slane %v2368, 4
      %v2370 = vrot.slane %v1917, 5
      %v2371 = vsel %vm2339, %v2369, %v2370
      %s2372 = scalar_lea.vmem %s3, 128
      %v2373 = vld [vmem:[%s2372] sm:$0xf]
      %v2374 = vld [vmem:[%s2372 + $0x4] sm:$0xf]
      %v2375 = vld [vmem:[%s2372 + $0x8] sm:$0xf]
      %v2376 = vld [vmem:[%s2372 + $0xc] sm:$0xf]
      %v2377 = vld [vmem:[%s2372 + $0x10] sm:$0xf]
      %v2378 = vld [vmem:[%s2372 + $0x14] sm:$0xf]
      %v2379 = vld [vmem:[%s2372 + $0x18] sm:$0xf]
      %v2380 = vld [vmem:[%s2372 + $0x1c] sm:$0xf]
      %v2381 = vld [vmem:[%s2372 + $0x20] sm:$0xf]
      %v2382 = vld [vmem:[%s2372 + $0x24] sm:$0xf]
      %v2383 = vld [vmem:[%s2372 + $0x28] sm:$0xf]
      %v2384 = vld [vmem:[%s2372 + $0x2c] sm:$0xf]
      %v2385 = vld [vmem:[%s2372 + $0x30] sm:$0xf]
      %v2386 = vld [vmem:[%s2372 + $0x34] sm:$0xf]
      %v2387 = vld [vmem:[%s2372 + $0x38] sm:$0xf]
      %v2388 = vld [vmem:[%s2372 + $0x3c] sm:$0xf]
      %v2389 = vunpack.c.l.b16 %v2343
      %v2390 = vunpack.c.l.b16 %v2347
      %v2391 = vunpack.c.l.b16 %v2351
      %v2392 = vunpack.c.l.b16 %v2355
      %v2393 = vunpack.c.l.b16 %v2359
      %v2394 = vunpack.c.l.b16 %v2363
      %v2395 = vunpack.c.l.b16 %v2367
      %v2396 = vunpack.c.l.b16 %v2371
      %v2397 = vpack.c.b16 %v2390, %v2389
      %v2398 = vpack.c.b16 %v2392, %v2391
      %v2399 = vpack.c.b16 %v2394, %v2393
      %v2400 = vpack.c.b16 %v2396, %v2395
      %v2421 = vunpack.c.l.b16 %v2373
      %v2422 = vunpack.c.l.b16 %v2374
      %v2423 = vunpack.c.l.b16 %v2375
      %v2424 = vunpack.c.l.b16 %v2376
      %v2425 = vunpack.c.l.b16 %v2377
      %v2426 = vunpack.c.l.b16 %v2378
      %v2427 = vunpack.c.l.b16 %v2379
      %v2428 = vunpack.c.l.b16 %v2380
      %v2429 = vunpack.c.l.b16 %v2381
      %v2430 = vunpack.c.l.b16 %v2382
      %v2431 = vunpack.c.l.b16 %v2383
      %v2432 = vunpack.c.l.b16 %v2384
      %v2433 = vunpack.c.l.b16 %v2385
      %v2434 = vunpack.c.l.b16 %v2386
      %v2435 = vunpack.c.l.b16 %v2387
      %v2436 = vunpack.c.l.b16 %v2388
      %v2437 = vpack.c.b16 %v2422, %v2421
      %v2438 = vpack.c.b16 %v2424, %v2423
      %v2439 = vpack.c.b16 %v2426, %v2425
      %v2440 = vpack.c.b16 %v2428, %v2427
      %v2441 = vpack.c.b16 %v2430, %v2429
      %v2442 = vpack.c.b16 %v2432, %v2431
      %v2443 = vpack.c.b16 %v2434, %v2433
      %v2444 = vpack.c.b16 %v2436, %v2435
      %2453 = vmatprep.subr.bf16.mxu0 0
      %2454 = vmatpush1.bf16.msra.mxu0 %v2437
      %2455 = vmatprep.subr.bf16.mxu0 0
      %2456 = vmatpush1.bf16.msra.mxu0 %v2438
      %2457 = vmatprep.subr.bf16.mxu0 0
      %2458 = vmatpush1.bf16.msra.mxu0 %v2439
      %2459 = vmatprep.subr.bf16.mxu0 0
      %2460 = vmatpush1.bf16.msra.mxu0 %v2440
      %2461 = vmatprep.subr.bf16.mxu0 0
      %2462 = vmatpush1.bf16.msra.mxu0 %v2441
      %2463 = vmatprep.subr.bf16.mxu0 0
      %2464 = vmatpush1.bf16.msra.mxu0 %v2442
      %2465 = vmatprep.subr.bf16.mxu0 0
      %2466 = vmatpush1.bf16.msra.mxu0 %v2443
      %2467 = vmatprep.subr.bf16.mxu0 0
      %2468 = vmatpush1.bf16.msra.mxu0 %v2444
      %2469 = vmatprep.subr.bf16.mxu0 0
      %2470 = vmatpush1.bf16.msra.mxu0 0
      %2471 = vmatprep.subr.bf16.mxu0 0
      %2472 = vmatpush1.bf16.msra.mxu0 0
      %2473 = vmatprep.subr.bf16.mxu0 0
      %2474 = vmatpush1.bf16.msra.mxu0 0
      %2475 = vmatprep.subr.bf16.mxu0 0
      %2476 = vmatpush1.bf16.msra.mxu0 0
      %2477 = vmatprep.subr.bf16.mxu0 0
      %2478 = vmatpush1.bf16.msra.mxu0 0
      %2479 = vmatprep.subr.bf16.mxu0 0
      %2480 = vmatpush1.bf16.msra.mxu0 0
      %2481 = vmatprep.subr.bf16.mxu0 0
      %2482 = vmatpush1.bf16.msra.mxu0 0
      %2483 = vmatprep.subr.bf16.mxu0 0
      %2484 = vmatpush1.bf16.msra.mxu0 0
      %2485 = vmatprep.mubr.bf16.mxu0 0
      %2486 = vmatmul.mubr.bf16.gmra.mrb[0].mxu0 %v2397
      %v2487 = vpop.f32.mrb[0].mxu0
      %v2488 = vadd.f32 0.0, %v2487
      %v2489 = vpop.f32.mrb[0].mxu0
      %v2490 = vpop.f32.mrb[0].mxu0
      %v2491 = vadd.f32 0.0, %v2490
      %v2492 = vpop.f32.mrb[0].mxu0
      %2493 = vmatprep.mubr.bf16.mxu0 0
      %2494 = vmatmul.mubr.bf16.gmra.mrb[0].mxu0 %v2398
      %v2495 = vpop.f32.mrb[0].mxu0
      %v2496 = vadd.f32 0.0, %v2495
      %v2497 = vpop.f32.mrb[0].mxu0
      %v2498 = vpop.f32.mrb[0].mxu0
      %v2499 = vadd.f32 0.0, %v2498
      %v2500 = vpop.f32.mrb[0].mxu0
      %2501 = vmatprep.mubr.bf16.mxu0 0
      %2502 = vmatmul.mubr.bf16.gmra.mrb[0].mxu0 %v2399
      %v2503 = vpop.f32.mrb[0].mxu0
      %v2504 = vadd.f32 0.0, %v2503
      %v2505 = vpop.f32.mrb[0].mxu0
      %v2506 = vpop.f32.mrb[0].mxu0
      %v2507 = vadd.f32 0.0, %v2506
      %v2508 = vpop.f32.mrb[0].mxu0
      %2509 = vmatprep.mubr.bf16.mxu0 0
      %2510 = vmatmul.mubr.bf16.gmra.mrb[0].mxu0 %v2400
      %v2511 = vpop.f32.mrb[0].mxu0
      %v2512 = vadd.f32 0.0, %v2511
      %v2513 = vpop.f32.mrb[0].mxu0
      %v2514 = vpop.f32.mrb[0].mxu0
      %v2515 = vadd.f32 0.0, %v2514
      %v2516 = vpop.f32.mrb[0].mxu0
      %2517 = vdwg.mxu0
      %v2518 = vadd.f32 %v2283, %v2488
      %v2519 = vadd.f32 %v2286, %v2491
      %v2520 = vadd.f32 %v2291, %v2496
      %v2521 = vadd.f32 %v2294, %v2499
      %v2522 = vadd.f32 %v2299, %v2504
      %v2523 = vadd.f32 %v2302, %v2507
      %v2524 = vadd.f32 %v2307, %v2512
      %v2525 = vadd.f32 %v2310, %v2515
      %v2526 = vld [vmem:[%s1831] sm:$0xf]
      %v2527 = vld [vmem:[%s1831 + $0x8] sm:$0xf]
      %v2528 = vld [vmem:[%s1831 + $0x10] sm:$0xf]
      %v2529 = vld [vmem:[%s1831 + $0x18] sm:$0xf]
      %v2530 = vld [vmem:[%s1831 + $0x20] sm:$0xf]
      %v2531 = vld [vmem:[%s1831 + $0x28] sm:$0xf]
      %v2532 = vld [vmem:[%s1831 + $0x30] sm:$0xf]
      %v2533 = vld [vmem:[%s1831 + $0x38] sm:$0xf]
      %s2534 = scalar_lea.vmem %s3, 192
      %v2535 = vld [vmem:[%s2534] sm:$0xf]
      %v2536 = vld [vmem:[%s2534 + $0x4] sm:$0xf]
      %v2537 = vld [vmem:[%s2534 + $0x8] sm:$0xf]
      %v2538 = vld [vmem:[%s2534 + $0xc] sm:$0xf]
      %v2539 = vld [vmem:[%s2534 + $0x10] sm:$0xf]
      %v2540 = vld [vmem:[%s2534 + $0x14] sm:$0xf]
      %v2541 = vld [vmem:[%s2534 + $0x18] sm:$0xf]
      %v2542 = vld [vmem:[%s2534 + $0x1c] sm:$0xf]
      %v2543 = vld [vmem:[%s2534 + $0x20] sm:$0xf]
      %v2544 = vld [vmem:[%s2534 + $0x24] sm:$0xf]
      %v2545 = vld [vmem:[%s2534 + $0x28] sm:$0xf]
      %v2546 = vld [vmem:[%s2534 + $0x2c] sm:$0xf]
      %v2547 = vld [vmem:[%s2534 + $0x30] sm:$0xf]
      %v2548 = vld [vmem:[%s2534 + $0x34] sm:$0xf]
      %v2549 = vld [vmem:[%s2534 + $0x38] sm:$0xf]
      %v2550 = vld [vmem:[%s2534 + $0x3c] sm:$0xf]
      %v2559 = vunpack.c.l.b16 %v2526
      %v2560 = vunpack.c.l.b16 %v2527
      %v2561 = vunpack.c.l.b16 %v2528
      %v2562 = vunpack.c.l.b16 %v2529
      %v2563 = vunpack.c.l.b16 %v2530
      %v2564 = vunpack.c.l.b16 %v2531
      %v2565 = vunpack.c.l.b16 %v2532
      %v2566 = vunpack.c.l.b16 %v2533
      %v2567 = vpack.c.b16 %v2560, %v2559
      %v2568 = vpack.c.b16 %v2562, %v2561
      %v2569 = vpack.c.b16 %v2564, %v2563
      %v2570 = vpack.c.b16 %v2566, %v2565
      %v2591 = vunpack.c.l.b16 %v2535
      %v2592 = vunpack.c.l.b16 %v2536
      %v2593 = vunpack.c.l.b16 %v2537
      %v2594 = vunpack.c.l.b16 %v2538
      %v2595 = vunpack.c.l.b16 %v2539
      %v2596 = vunpack.c.l.b16 %v2540
      %v2597 = vunpack.c.l.b16 %v2541
      %v2598 = vunpack.c.l.b16 %v2542
      %v2599 = vunpack.c.l.b16 %v2543
      %v2600 = vunpack.c.l.b16 %v2544
      %v2601 = vunpack.c.l.b16 %v2545
      %v2602 = vunpack.c.l.b16 %v2546
      %v2603 = vunpack.c.l.b16 %v2547
      %v2604 = vunpack.c.l.b16 %v2548
      %v2605 = vunpack.c.l.b16 %v2549
      %v2606 = vunpack.c.l.b16 %v2550
      %v2607 = vpack.c.b16 %v2592, %v2591
      %v2608 = vpack.c.b16 %v2594, %v2593
      %v2609 = vpack.c.b16 %v2596, %v2595
      %v2610 = vpack.c.b16 %v2598, %v2597
      %v2611 = vpack.c.b16 %v2600, %v2599
      %v2612 = vpack.c.b16 %v2602, %v2601
      %v2613 = vpack.c.b16 %v2604, %v2603
      %v2614 = vpack.c.b16 %v2606, %v2605
      %2623 = vmatprep.subr.bf16.mxu0 0
      %2624 = vmatpush1.bf16.msra.mxu0 %v2607
      %2625 = vmatprep.subr.bf16.mxu0 0
      %2626 = vmatpush1.bf16.msra.mxu0 %v2608
      %2627 = vmatprep.subr.bf16.mxu0 0
      %2628 = vmatpush1.bf16.msra.mxu0 %v2609
      %2629 = vmatprep.subr.bf16.mxu0 0
      %2630 = vmatpush1.bf16.msra.mxu0 %v2610
      %2631 = vmatprep.subr.bf16.mxu0 0
      %2632 = vmatpush1.bf16.msra.mxu0 %v2611
      %2633 = vmatprep.subr.bf16.mxu0 0
      %2634 = vmatpush1.bf16.msra.mxu0 %v2612
      %2635 = vmatprep.subr.bf16.mxu0 0
      %2636 = vmatpush1.bf16.msra.mxu0 %v2613
      %2637 = vmatprep.subr.bf16.mxu0 0
      %2638 = vmatpush1.bf16.msra.mxu0 %v2614
      %2639 = vmatprep.subr.bf16.mxu0 0
      %2640 = vmatpush1.bf16.msra.mxu0 0
      %2641 = vmatprep.subr.bf16.mxu0 0
      %2642 = vmatpush1.bf16.msra.mxu0 0
      %2643 = vmatprep.subr.bf16.mxu0 0
      %2644 = vmatpush1.bf16.msra.mxu0 0
      %2645 = vmatprep.subr.bf16.mxu0 0
      %2646 = vmatpush1.bf16.msra.mxu0 0
      %2647 = vmatprep.subr.bf16.mxu0 0
      %2648 = vmatpush1.bf16.msra.mxu0 0
      %2649 = vmatprep.subr.bf16.mxu0 0
      %2650 = vmatpush1.bf16.msra.mxu0 0
      %2651 = vmatprep.subr.bf16.mxu0 0
      %2652 = vmatpush1.bf16.msra.mxu0 0
      %2653 = vmatprep.subr.bf16.mxu0 0
      %2654 = vmatpush1.bf16.msra.mxu0 0
      %2655 = vmatprep.mubr.bf16.mxu0 0
      %2656 = vmatmul.mubr.bf16.gmra.mrb[0].mxu0 %v2567
      %v2657 = vpop.f32.mrb[0].mxu0
      %v2658 = vadd.f32 0.0, %v2657
      %v2659 = vpop.f32.mrb[0].mxu0
      %v2660 = vpop.f32.mrb[0].mxu0
      %v2661 = vadd.f32 0.0, %v2660
      %v2662 = vpop.f32.mrb[0].mxu0
      %2663 = vmatprep.mubr.bf16.mxu0 0
      %2664 = vmatmul.mubr.bf16.gmra.mrb[0].mxu0 %v2568
      %v2665 = vpop.f32.mrb[0].mxu0
      %v2666 = vadd.f32 0.0, %v2665
      %v2667 = vpop.f32.mrb[0].mxu0
      %v2668 = vpop.f32.mrb[0].mxu0
      %v2669 = vadd.f32 0.0, %v2668
      %v2670 = vpop.f32.mrb[0].mxu0
      %2671 = vmatprep.mubr.bf16.mxu0 0
      %2672 = vmatmul.mubr.bf16.gmra.mrb[0].mxu0 %v2569
      %v2673 = vpop.f32.mrb[0].mxu0
      %v2674 = vadd.f32 0.0, %v2673
      %v2675 = vpop.f32.mrb[0].mxu0
      %v2676 = vpop.f32.mrb[0].mxu0
      %v2677 = vadd.f32 0.0, %v2676
      %v2678 = vpop.f32.mrb[0].mxu0
      %2679 = vmatprep.mubr.bf16.mxu0 0
      %2680 = vmatmul.mubr.bf16.gmra.mrb[0].mxu0 %v2570
      %v2681 = vpop.f32.mrb[0].mxu0
      %v2682 = vadd.f32 0.0, %v2681
      %v2683 = vpop.f32.mrb[0].mxu0
      %v2684 = vpop.f32.mrb[0].mxu0
      %v2685 = vadd.f32 0.0, %v2684
      %v2686 = vpop.f32.mrb[0].mxu0
      %2687 = vdwg.mxu0
      %v2688 = vadd.f32 %v2518, %v2658
      %v2689 = vadd.f32 %v2519, %v2661
      %v2690 = vadd.f32 %v2520, %v2666
      %v2691 = vadd.f32 %v2521, %v2669
      %v2692 = vadd.f32 %v2522, %v2674
      %v2693 = vadd.f32 %v2523, %v2677
      %v2694 = vadd.f32 %v2524, %v2682
      %v2695 = vadd.f32 %v2525, %v2685
      %v2696 = vld [vmem:[%s1831] sm:$0xf]
      %v2697 = vld [vmem:[%s1831 + $0x4] sm:$0x1]
      %v2698 = vld [vmem:[%s1831 + $0x8] sm:$0xf]
      %v2699 = vld [vmem:[%s1831 + $0xc] sm:$0x1]
      %v2700 = vld [vmem:[%s1831 + $0x10] sm:$0xf]
      %v2701 = vld [vmem:[%s1831 + $0x14] sm:$0x1]
      %v2702 = vld [vmem:[%s1831 + $0x18] sm:$0xf]
      %v2703 = vld [vmem:[%s1831 + $0x1c] sm:$0x1]
      %v2704 = vld [vmem:[%s1831 + $0x20] sm:$0xf]
      %v2705 = vld [vmem:[%s1831 + $0x24] sm:$0x1]
      %v2706 = vld [vmem:[%s1831 + $0x28] sm:$0xf]
      %v2707 = vld [vmem:[%s1831 + $0x2c] sm:$0x1]
      %v2708 = vld [vmem:[%s1831 + $0x30] sm:$0xf]
      %v2709 = vld [vmem:[%s1831 + $0x34] sm:$0x1]
      %v2710 = vld [vmem:[%s1831 + $0x38] sm:$0xf]
      %v2711 = vld [vmem:[%s1831 + $0x3c] sm:$0x1]
      %v2713 = vshrl.u32 %v2696, 16
      %v2715 = vrot.slane %v2713, 4
      %v2716 = vshll.u32 %v2696, 16
      %v2718 = vrot.slane %v2716, 5
      %v2719 = vor.u32 %v2715, %v2718
      %v2720 = vrot.slane %v2719, 4
      %v2722 = vshll.u32 %v2697, 16
      %v2724 = vrot.slane %v2722, 5
      %v2725 = vsel %vm525, %v2720, %v2724
      %v2727 = vshrl.u32 %v2698, 16
      %v2729 = vrot.slane %v2727, 4
      %v2730 = vshll.u32 %v2698, 16
      %v2732 = vrot.slane %v2730, 5
      %v2733 = vor.u32 %v2729, %v2732
      %v2734 = vrot.slane %v2733, 4
      %v2736 = vshll.u32 %v2699, 16
      %v2738 = vrot.slane %v2736, 5
      %v2739 = vsel %vm525, %v2734, %v2738
      %v2741 = vshrl.u32 %v2700, 16
      %v2743 = vrot.slane %v2741, 4
      %v2744 = vshll.u32 %v2700, 16
      %v2746 = vrot.slane %v2744, 5
      %v2747 = vor.u32 %v2743, %v2746
      %v2748 = vrot.slane %v2747, 4
      %v2750 = vshll.u32 %v2701, 16
      %v2752 = vrot.slane %v2750, 5
      %v2753 = vsel %vm525, %v2748, %v2752
      %v2755 = vshrl.u32 %v2702, 16
      %v2757 = vrot.slane %v2755, 4
      %v2758 = vshll.u32 %v2702, 16
      %v2760 = vrot.slane %v2758, 5
      %v2761 = vor.u32 %v2757, %v2760
      %v2762 = vrot.slane %v2761, 4
      %v2764 = vshll.u32 %v2703, 16
      %v2766 = vrot.slane %v2764, 5
      %v2767 = vsel %vm525, %v2762, %v2766
      %v2769 = vshrl.u32 %v2704, 16
      %v2771 = vrot.slane %v2769, 4
      %v2772 = vshll.u32 %v2704, 16
      %v2774 = vrot.slane %v2772, 5
      %v2775 = vor.u32 %v2771, %v2774
      %v2776 = vrot.slane %v2775, 4
      %v2778 = vshll.u32 %v2705, 16
      %v2780 = vrot.slane %v2778, 5
      %v2781 = vsel %vm525, %v2776, %v2780
      %v2783 = vshrl.u32 %v2706, 16
      %v2785 = vrot.slane %v2783, 4
      %v2786 = vshll.u32 %v2706, 16
      %v2788 = vrot.slane %v2786, 5
      %v2789 = vor.u32 %v2785, %v2788
      %v2790 = vrot.slane %v2789, 4
      %v2792 = vshll.u32 %v2707, 16
      %v2794 = vrot.slane %v2792, 5
      %v2795 = vsel %vm525, %v2790, %v2794
      %v2797 = vshrl.u32 %v2708, 16
      %v2799 = vrot.slane %v2797, 4
      %v2800 = vshll.u32 %v2708, 16
      %v2802 = vrot.slane %v2800, 5
      %v2803 = vor.u32 %v2799, %v2802
      %v2804 = vrot.slane %v2803, 4
      %v2806 = vshll.u32 %v2709, 16
      %v2808 = vrot.slane %v2806, 5
      %v2809 = vsel %vm525, %v2804, %v2808
      %v2811 = vshrl.u32 %v2710, 16
      %v2813 = vrot.slane %v2811, 4
      %v2814 = vshll.u32 %v2710, 16
      %v2816 = vrot.slane %v2814, 5
      %v2817 = vor.u32 %v2813, %v2816
      %v2818 = vrot.slane %v2817, 4
      %v2820 = vshll.u32 %v2711, 16
      %v2822 = vrot.slane %v2820, 5
      %v2823 = vsel %vm525, %v2818, %v2822
      %s2824 = scalar_lea.vmem %s3, 256
      %v2825 = vld [vmem:[%s2824] sm:$0xf]
      %v2826 = vld [vmem:[%s2824 + $0x4] sm:$0xf]
      %v2827 = vld [vmem:[%s2824 + $0x8] sm:$0xf]
      %v2828 = vld [vmem:[%s2824 + $0xc] sm:$0xf]
      %v2829 = vld [vmem:[%s2824 + $0x10] sm:$0xf]
      %v2830 = vld [vmem:[%s2824 + $0x14] sm:$0xf]
      %v2831 = vld [vmem:[%s2824 + $0x18] sm:$0xf]
      %v2832 = vld [vmem:[%s2824 + $0x1c] sm:$0xf]
      %v2833 = vld [vmem:[%s2824 + $0x20] sm:$0xf]
      %v2834 = vld [vmem:[%s2824 + $0x24] sm:$0xf]
      %v2835 = vld [vmem:[%s2824 + $0x28] sm:$0xf]
      %v2836 = vld [vmem:[%s2824 + $0x2c] sm:$0xf]
      %v2837 = vld [vmem:[%s2824 + $0x30] sm:$0xf]
      %v2838 = vld [vmem:[%s2824 + $0x34] sm:$0xf]
      %v2839 = vld [vmem:[%s2824 + $0x38] sm:$0xf]
      %v2840 = vld [vmem:[%s2824 + $0x3c] sm:$0xf]
      %v2841 = vunpack.c.l.b16 %v2725
      %v2842 = vunpack.c.l.b16 %v2739
      %v2843 = vunpack.c.l.b16 %v2753
      %v2844 = vunpack.c.l.b16 %v2767
      %v2845 = vunpack.c.l.b16 %v2781
      %v2846 = vunpack.c.l.b16 %v2795
      %v2847 = vunpack.c.l.b16 %v2809
      %v2848 = vunpack.c.l.b16 %v2823
      %v2849 = vpack.c.b16 %v2842, %v2841
      %v2850 = vpack.c.b16 %v2844, %v2843
      %v2851 = vpack.c.b16 %v2846, %v2845
      %v2852 = vpack.c.b16 %v2848, %v2847
      %v2873 = vunpack.c.l.b16 %v2825
      %v2874 = vunpack.c.l.b16 %v2826
      %v2875 = vunpack.c.l.b16 %v2827
      %v2876 = vunpack.c.l.b16 %v2828
      %v2877 = vunpack.c.l.b16 %v2829
      %v2878 = vunpack.c.l.b16 %v2830
      %v2879 = vunpack.c.l.b16 %v2831
      %v2880 = vunpack.c.l.b16 %v2832
      %v2881 = vunpack.c.l.b16 %v2833
      %v2882 = vunpack.c.l.b16 %v2834
      %v2883 = vunpack.c.l.b16 %v2835
      %v2884 = vunpack.c.l.b16 %v2836
      %v2885 = vunpack.c.l.b16 %v2837
      %v2886 = vunpack.c.l.b16 %v2838
      %v2887 = vunpack.c.l.b16 %v2839
      %v2888 = vunpack.c.l.b16 %v2840
      %v2889 = vpack.c.b16 %v2874, %v2873
      %v2890 = vpack.c.b16 %v2876, %v2875
      %v2891 = vpack.c.b16 %v2878, %v2877
      %v2892 = vpack.c.b16 %v2880, %v2879
      %v2893 = vpack.c.b16 %v2882, %v2881
      %v2894 = vpack.c.b16 %v2884, %v2883
      %v2895 = vpack.c.b16 %v2886, %v2885
      %v2896 = vpack.c.b16 %v2888, %v2887
      %2905 = vmatprep.subr.bf16.mxu0 0
      %2906 = vmatpush1.bf16.msra.mxu0 %v2889
      %2907 = vmatprep.subr.bf16.mxu0 0
      %2908 = vmatpush1.bf16.msra.mxu0 %v2890
      %2909 = vmatprep.subr.bf16.mxu0 0
      %2910 = vmatpush1.bf16.msra.mxu0 %v2891
      %2911 = vmatprep.subr.bf16.mxu0 0
      %2912 = vmatpush1.bf16.msra.mxu0 %v2892
      %2913 = vmatprep.subr.bf16.mxu0 0
      %2914 = vmatpush1.bf16.msra.mxu0 %v2893
      %2915 = vmatprep.subr.bf16.mxu0 0
      %2916 = vmatpush1.bf16.msra.mxu0 %v2894
      %2917 = vmatprep.subr.bf16.mxu0 0
      %2918 = vmatpush1.bf16.msra.mxu0 %v2895
      %2919 = vmatprep.subr.bf16.mxu0 0
      %2920 = vmatpush1.bf16.msra.mxu0 %v2896
      %2921 = vmatprep.subr.bf16.mxu0 0
      %2922 = vmatpush1.bf16.msra.mxu0 0
      %2923 = vmatprep.subr.bf16.mxu0 0
      %2924 = vmatpush1.bf16.msra.mxu0 0
      %2925 = vmatprep.subr.bf16.mxu0 0
      %2926 = vmatpush1.bf16.msra.mxu0 0
      %2927 = vmatprep.subr.bf16.mxu0 0
      %2928 = vmatpush1.bf16.msra.mxu0 0
      %2929 = vmatprep.subr.bf16.mxu0 0
      %2930 = vmatpush1.bf16.msra.mxu0 0
      %2931 = vmatprep.subr.bf16.mxu0 0
      %2932 = vmatpush1.bf16.msra.mxu0 0
      %2933 = vmatprep.subr.bf16.mxu0 0
      %2934 = vmatpush1.bf16.msra.mxu0 0
      %2935 = vmatprep.subr.bf16.mxu0 0
      %2936 = vmatpush1.bf16.msra.mxu0 0
      %2937 = vmatprep.mubr.bf16.mxu0 0
      %2938 = vmatmul.mubr.bf16.gmra.mrb[0].mxu0 %v2849
      %v2939 = vpop.f32.mrb[0].mxu0
      %v2940 = vadd.f32 0.0, %v2939
      %v2941 = vpop.f32.mrb[0].mxu0
      %v2942 = vpop.f32.mrb[0].mxu0
      %v2943 = vadd.f32 0.0, %v2942
      %v2944 = vpop.f32.mrb[0].mxu0
      %2945 = vmatprep.mubr.bf16.mxu0 0
      %2946 = vmatmul.mubr.bf16.gmra.mrb[0].mxu0 %v2850
      %v2947 = vpop.f32.mrb[0].mxu0
      %v2948 = vadd.f32 0.0, %v2947
      %v2949 = vpop.f32.mrb[0].mxu0
      %v2950 = vpop.f32.mrb[0].mxu0
      %v2951 = vadd.f32 0.0, %v2950
      %v2952 = vpop.f32.mrb[0].mxu0
      %2953 = vmatprep.mubr.bf16.mxu0 0
      %2954 = vmatmul.mubr.bf16.gmra.mrb[0].mxu0 %v2851
      %v2955 = vpop.f32.mrb[0].mxu0
      %v2956 = vadd.f32 0.0, %v2955
      %v2957 = vpop.f32.mrb[0].mxu0
      %v2958 = vpop.f32.mrb[0].mxu0
      %v2959 = vadd.f32 0.0, %v2958
      %v2960 = vpop.f32.mrb[0].mxu0
      %2961 = vmatprep.mubr.bf16.mxu0 0
      %2962 = vmatmul.mubr.bf16.gmra.mrb[0].mxu0 %v2852
      %v2963 = vpop.f32.mrb[0].mxu0
      %v2964 = vadd.f32 0.0, %v2963
      %v2965 = vpop.f32.mrb[0].mxu0
      %v2966 = vpop.f32.mrb[0].mxu0
      %v2967 = vadd.f32 0.0, %v2966
      %v2968 = vpop.f32.mrb[0].mxu0
      %2969 = vdwg.mxu0
      %v2970 = vadd.f32 %v2688, %v2940
      %v2971 = vadd.f32 %v2689, %v2943
      %v2972 = vadd.f32 %v2690, %v2948
      %v2973 = vadd.f32 %v2691, %v2951
      %v2974 = vadd.f32 %v2692, %v2956
      %v2975 = vadd.f32 %v2693, %v2959
      %v2976 = vadd.f32 %v2694, %v2964
      %v2977 = vadd.f32 %v2695, %v2967
      %v2978 = vld [vmem:[%s1831] sm:$0xe]
      %v2979 = vld [vmem:[%s1831 + $0x8] sm:$0xe]
      %v2980 = vld [vmem:[%s1831 + $0x10] sm:$0xe]
      %v2981 = vld [vmem:[%s1831 + $0x18] sm:$0xe]
      %v2982 = vld [vmem:[%s1831 + $0x20] sm:$0xe]
      %v2983 = vld [vmem:[%s1831 + $0x28] sm:$0xe]
      %v2984 = vld [vmem:[%s1831 + $0x30] sm:$0xe]
      %v2985 = vld [vmem:[%s1831 + $0x38] sm:$0xe]
      %v3002 = vrot.slane %v2978, 5
      %v3003 = vrot.slane %v3002, 4
      %v3004 = vrot.slane %v2697, 5
      %v3005 = vsel %vm2339, %v3003, %v3004
      %v3006 = vrot.slane %v2979, 5
      %v3007 = vrot.slane %v3006, 4
      %v3008 = vrot.slane %v2699, 5
      %v3009 = vsel %vm2339, %v3007, %v3008
      %v3010 = vrot.slane %v2980, 5
      %v3011 = vrot.slane %v3010, 4
      %v3012 = vrot.slane %v2701, 5
      %v3013 = vsel %vm2339, %v3011, %v3012
      %v3014 = vrot.slane %v2981, 5
      %v3015 = vrot.slane %v3014, 4
      %v3016 = vrot.slane %v2703, 5
      %v3017 = vsel %vm2339, %v3015, %v3016
      %v3018 = vrot.slane %v2982, 5
      %v3019 = vrot.slane %v3018, 4
      %v3020 = vrot.slane %v2705, 5
      %v3021 = vsel %vm2339, %v3019, %v3020
      %v3022 = vrot.slane %v2983, 5
      %v3023 = vrot.slane %v3022, 4
      %v3024 = vrot.slane %v2707, 5
      %v3025 = vsel %vm2339, %v3023, %v3024
      %v3026 = vrot.slane %v2984, 5
      %v3027 = vrot.slane %v3026, 4
      %v3028 = vrot.slane %v2709, 5
      %v3029 = vsel %vm2339, %v3027, %v3028
      %v3030 = vrot.slane %v2985, 5
      %v3031 = vrot.slane %v3030, 4
      %v3032 = vrot.slane %v2711, 5
      %v3033 = vsel %vm2339, %v3031, %v3032
      %s3034 = scalar_lea.vmem %s3, 320
      %v3035 = vld [vmem:[%s3034] sm:$0xf]
      %v3036 = vld [vmem:[%s3034 + $0x4] sm:$0xf]
      %v3037 = vld [vmem:[%s3034 + $0x8] sm:$0xf]
      %v3038 = vld [vmem:[%s3034 + $0xc] sm:$0xf]
      %v3039 = vld [vmem:[%s3034 + $0x10] sm:$0xf]
      %v3040 = vld [vmem:[%s3034 + $0x14] sm:$0xf]
      %v3041 = vld [vmem:[%s3034 + $0x18] sm:$0xf]
      %v3042 = vld [vmem:[%s3034 + $0x1c] sm:$0xf]
      %v3043 = vld [vmem:[%s3034 + $0x20] sm:$0xf]
      %v3044 = vld [vmem:[%s3034 + $0x24] sm:$0xf]
      %v3045 = vld [vmem:[%s3034 + $0x28] sm:$0xf]
      %v3046 = vld [vmem:[%s3034 + $0x2c] sm:$0xf]
      %v3047 = vld [vmem:[%s3034 + $0x30] sm:$0xf]
      %v3048 = vld [vmem:[%s3034 + $0x34] sm:$0xf]
      %v3049 = vld [vmem:[%s3034 + $0x38] sm:$0xf]
      %v3050 = vld [vmem:[%s3034 + $0x3c] sm:$0xf]
      %v3051 = vunpack.c.l.b16 %v3005
      %v3052 = vunpack.c.l.b16 %v3009
      %v3053 = vunpack.c.l.b16 %v3013
      %v3054 = vunpack.c.l.b16 %v3017
      %v3055 = vunpack.c.l.b16 %v3021
      %v3056 = vunpack.c.l.b16 %v3025
      %v3057 = vunpack.c.l.b16 %v3029
      %v3058 = vunpack.c.l.b16 %v3033
      %v3059 = vpack.c.b16 %v3052, %v3051
      %v3060 = vpack.c.b16 %v3054, %v3053
      %v3061 = vpack.c.b16 %v3056, %v3055
      %v3062 = vpack.c.b16 %v3058, %v3057
      %v3083 = vunpack.c.l.b16 %v3035
      %v3084 = vunpack.c.l.b16 %v3036
      %v3085 = vunpack.c.l.b16 %v3037
      %v3086 = vunpack.c.l.b16 %v3038
      %v3087 = vunpack.c.l.b16 %v3039
      %v3088 = vunpack.c.l.b16 %v3040
      %v3089 = vunpack.c.l.b16 %v3041
      %v3090 = vunpack.c.l.b16 %v3042
      %v3091 = vunpack.c.l.b16 %v3043
      %v3092 = vunpack.c.l.b16 %v3044
      %v3093 = vunpack.c.l.b16 %v3045
      %v3094 = vunpack.c.l.b16 %v3046
      %v3095 = vunpack.c.l.b16 %v3047
      %v3096 = vunpack.c.l.b16 %v3048
      %v3097 = vunpack.c.l.b16 %v3049
      %v3098 = vunpack.c.l.b16 %v3050
      %v3099 = vpack.c.b16 %v3084, %v3083
      %v3100 = vpack.c.b16 %v3086, %v3085
      %v3101 = vpack.c.b16 %v3088, %v3087
      %v3102 = vpack.c.b16 %v3090, %v3089
      %v3103 = vpack.c.b16 %v3092, %v3091
      %v3104 = vpack.c.b16 %v3094, %v3093
      %v3105 = vpack.c.b16 %v3096, %v3095
      %v3106 = vpack.c.b16 %v3098, %v3097
      %3115 = vmatprep.subr.bf16.mxu0 0
      %3116 = vmatpush1.bf16.msra.mxu0 %v3099
      %3117 = vmatprep.subr.bf16.mxu0 0
      %3118 = vmatpush1.bf16.msra.mxu0 %v3100
      %3119 = vmatprep.subr.bf16.mxu0 0
      %3120 = vmatpush1.bf16.msra.mxu0 %v3101
      %3121 = vmatprep.subr.bf16.mxu0 0
      %3122 = vmatpush1.bf16.msra.mxu0 %v3102
      %3123 = vmatprep.subr.bf16.mxu0 0
      %3124 = vmatpush1.bf16.msra.mxu0 %v3103
      %3125 = vmatprep.subr.bf16.mxu0 0
      %3126 = vmatpush1.bf16.msra.mxu0 %v3104
      %3127 = vmatprep.subr.bf16.mxu0 0
      %3128 = vmatpush1.bf16.msra.mxu0 %v3105
      %3129 = vmatprep.subr.bf16.mxu0 0
      %3130 = vmatpush1.bf16.msra.mxu0 %v3106
      %3131 = vmatprep.subr.bf16.mxu0 0
      %3132 = vmatpush1.bf16.msra.mxu0 0
      %3133 = vmatprep.subr.bf16.mxu0 0
      %3134 = vmatpush1.bf16.msra.mxu0 0
      %3135 = vmatprep.subr.bf16.mxu0 0
      %3136 = vmatpush1.bf16.msra.mxu0 0
      %3137 = vmatprep.subr.bf16.mxu0 0
      %3138 = vmatpush1.bf16.msra.mxu0 0
      %3139 = vmatprep.subr.bf16.mxu0 0
      %3140 = vmatpush1.bf16.msra.mxu0 0
      %3141 = vmatprep.subr.bf16.mxu0 0
      %3142 = vmatpush1.bf16.msra.mxu0 0
      %3143 = vmatprep.subr.bf16.mxu0 0
      %3144 = vmatpush1.bf16.msra.mxu0 0
      %3145 = vmatprep.subr.bf16.mxu0 0
      %3146 = vmatpush1.bf16.msra.mxu0 0
      %3147 = vmatprep.mubr.bf16.mxu0 0
      %3148 = vmatmul.mubr.bf16.gmra.mrb[0].mxu0 %v3059
      %v3149 = vpop.f32.mrb[0].mxu0
      %v3150 = vadd.f32 0.0, %v3149
      %v3151 = vpop.f32.mrb[0].mxu0
      %v3152 = vpop.f32.mrb[0].mxu0
      %v3153 = vadd.f32 0.0, %v3152
      %v3154 = vpop.f32.mrb[0].mxu0
      %3155 = vmatprep.mubr.bf16.mxu0 0
      %3156 = vmatmul.mubr.bf16.gmra.mrb[0].mxu0 %v3060
      %v3157 = vpop.f32.mrb[0].mxu0
      %v3158 = vadd.f32 0.0, %v3157
      %v3159 = vpop.f32.mrb[0].mxu0
      %v3160 = vpop.f32.mrb[0].mxu0
      %v3161 = vadd.f32 0.0, %v3160
      %v3162 = vpop.f32.mrb[0].mxu0
      %3163 = vmatprep.mubr.bf16.mxu0 0
      %3164 = vmatmul.mubr.bf16.gmra.mrb[0].mxu0 %v3061
      %v3165 = vpop.f32.mrb[0].mxu0
      %v3166 = vadd.f32 0.0, %v3165
      %v3167 = vpop.f32.mrb[0].mxu0
      %v3168 = vpop.f32.mrb[0].mxu0
      %v3169 = vadd.f32 0.0, %v3168
      %v3170 = vpop.f32.mrb[0].mxu0
      %3171 = vmatprep.mubr.bf16.mxu0 0
      %3172 = vmatmul.mubr.bf16.gmra.mrb[0].mxu0 %v3062
      %v3173 = vpop.f32.mrb[0].mxu0
      %v3174 = vadd.f32 0.0, %v3173
      %v3175 = vpop.f32.mrb[0].mxu0
      %v3176 = vpop.f32.mrb[0].mxu0
      %v3177 = vadd.f32 0.0, %v3176
      %v3178 = vpop.f32.mrb[0].mxu0
      %3179 = vdwg.mxu0
      %v3180 = vadd.f32 %v2970, %v3150
      %v3181 = vadd.f32 %v2971, %v3153
      %v3182 = vadd.f32 %v2972, %v3158
      %v3183 = vadd.f32 %v2973, %v3161
      %v3184 = vadd.f32 %v2974, %v3166
      %v3185 = vadd.f32 %v2975, %v3169
      %v3186 = vadd.f32 %v2976, %v3174
      %v3187 = vadd.f32 %v2977, %v3177
      %s3188 = scalar_lea.vmem [#allocation2], 16
      %v3189 = vld [vmem:[%s3188] sm:$0xf]
      %v3190 = vld [vmem:[%s3188 + $0x8] sm:$0xf]
      %v3191 = vld [vmem:[%s3188 + $0x10] sm:$0xf]
      %v3192 = vld [vmem:[%s3188 + $0x18] sm:$0xf]
      %v3193 = vld [vmem:[%s3188 + $0x20] sm:$0xf]
      %v3194 = vld [vmem:[%s3188 + $0x28] sm:$0xf]
      %v3195 = vld [vmem:[%s3188 + $0x30] sm:$0xf]
      %v3196 = vld [vmem:[%s3188 + $0x38] sm:$0xf]
      %s3197 = scalar_lea.vmem %s3, 384
      %v3198 = vld [vmem:[%s3197] sm:$0xf]
      %v3199 = vld [vmem:[%s3197 + $0x4] sm:$0xf]
      %v3200 = vld [vmem:[%s3197 + $0x8] sm:$0xf]
      %v3201 = vld [vmem:[%s3197 + $0xc] sm:$0xf]
      %v3202 = vld [vmem:[%s3197 + $0x10] sm:$0xf]
      %v3203 = vld [vmem:[%s3197 + $0x14] sm:$0xf]
      %v3204 = vld [vmem:[%s3197 + $0x18] sm:$0xf]
      %v3205 = vld [vmem:[%s3197 + $0x1c] sm:$0xf]
      %v3206 = vld [vmem:[%s3197 + $0x20] sm:$0xf]
      %v3207 = vld [vmem:[%s3197 + $0x24] sm:$0xf]
      %v3208 = vld [vmem:[%s3197 + $0x28] sm:$0xf]
      %v3209 = vld [vmem:[%s3197 + $0x2c] sm:$0xf]
      %v3210 = vld [vmem:[%s3197 + $0x30] sm:$0xf]
      %v3211 = vld [vmem:[%s3197 + $0x34] sm:$0xf]
      %v3212 = vld [vmem:[%s3197 + $0x38] sm:$0xf]
      %v3213 = vld [vmem:[%s3197 + $0x3c] sm:$0xf]
      %v3222 = vunpack.c.l.b16 %v3189
      %v3223 = vunpack.c.l.b16 %v3190
      %v3224 = vunpack.c.l.b16 %v3191
      %v3225 = vunpack.c.l.b16 %v3192
      %v3226 = vunpack.c.l.b16 %v3193
      %v3227 = vunpack.c.l.b16 %v3194
      %v3228 = vunpack.c.l.b16 %v3195
      %v3229 = vunpack.c.l.b16 %v3196
      %v3230 = vpack.c.b16 %v3223, %v3222
      %v3231 = vpack.c.b16 %v3225, %v3224
      %v3232 = vpack.c.b16 %v3227, %v3226
      %v3233 = vpack.c.b16 %v3229, %v3228
      %v3254 = vunpack.c.l.b16 %v3198
      %v3255 = vunpack.c.l.b16 %v3199
      %v3256 = vunpack.c.l.b16 %v3200
      %v3257 = vunpack.c.l.b16 %v3201
      %v3258 = vunpack.c.l.b16 %v3202
      %v3259 = vunpack.c.l.b16 %v3203
      %v3260 = vunpack.c.l.b16 %v3204
      %v3261 = vunpack.c.l.b16 %v3205
      %v3262 = vunpack.c.l.b16 %v3206
      %v3263 = vunpack.c.l.b16 %v3207
      %v3264 = vunpack.c.l.b16 %v3208
      %v3265 = vunpack.c.l.b16 %v3209
      %v3266 = vunpack.c.l.b16 %v3210
      %v3267 = vunpack.c.l.b16 %v3211
      %v3268 = vunpack.c.l.b16 %v3212
      %v3269 = vunpack.c.l.b16 %v3213
      %v3270 = vpack.c.b16 %v3255, %v3254
      %v3271 = vpack.c.b16 %v3257, %v3256
      %v3272 = vpack.c.b16 %v3259, %v3258
      %v3273 = vpack.c.b16 %v3261, %v3260
      %v3274 = vpack.c.b16 %v3263, %v3262
      %v3275 = vpack.c.b16 %v3265, %v3264
      %v3276 = vpack.c.b16 %v3267, %v3266
      %v3277 = vpack.c.b16 %v3269, %v3268
      %3286 = vmatprep.subr.bf16.mxu0 0
      %3287 = vmatpush1.bf16.msra.mxu0 %v3270
      %3288 = vmatprep.subr.bf16.mxu0 0
      %3289 = vmatpush1.bf16.msra.mxu0 %v3271
      %3290 = vmatprep.subr.bf16.mxu0 0
      %3291 = vmatpush1.bf16.msra.mxu0 %v3272
      %3292 = vmatprep.subr.bf16.mxu0 0
      %3293 = vmatpush1.bf16.msra.mxu0 %v3273
      %3294 = vmatprep.subr.bf16.mxu0 0
      %3295 = vmatpush1.bf16.msra.mxu0 %v3274
      %3296 = vmatprep.subr.bf16.mxu0 0
      %3297 = vmatpush1.bf16.msra.mxu0 %v3275
      %3298 = vmatprep.subr.bf16.mxu0 0
      %3299 = vmatpush1.bf16.msra.mxu0 %v3276
      %3300 = vmatprep.subr.bf16.mxu0 0
      %3301 = vmatpush1.bf16.msra.mxu0 %v3277
      %3302 = vmatprep.subr.bf16.mxu0 0
      %3303 = vmatpush1.bf16.msra.mxu0 0
      %3304 = vmatprep.subr.bf16.mxu0 0
      %3305 = vmatpush1.bf16.msra.mxu0 0
      %3306 = vmatprep.subr.bf16.mxu0 0
      %3307 = vmatpush1.bf16.msra.mxu0 0
      %3308 = vmatprep.subr.bf16.mxu0 0
      %3309 = vmatpush1.bf16.msra.mxu0 0
      %3310 = vmatprep.subr.bf16.mxu0 0
      %3311 = vmatpush1.bf16.msra.mxu0 0
      %3312 = vmatprep.subr.bf16.mxu0 0
      %3313 = vmatpush1.bf16.msra.mxu0 0
      %3314 = vmatprep.subr.bf16.mxu0 0
      %3315 = vmatpush1.bf16.msra.mxu0 0
      %3316 = vmatprep.subr.bf16.mxu0 0
      %3317 = vmatpush1.bf16.msra.mxu0 0
      %3318 = vmatprep.mubr.bf16.mxu0 0
      %3319 = vmatmul.mubr.bf16.gmra.mrb[0].mxu0 %v3230
      %v3320 = vpop.f32.mrb[0].mxu0
      %v3321 = vadd.f32 0.0, %v3320
      %v3322 = vpop.f32.mrb[0].mxu0
      %v3323 = vpop.f32.mrb[0].mxu0
      %v3324 = vadd.f32 0.0, %v3323
      %v3325 = vpop.f32.mrb[0].mxu0
      %3326 = vmatprep.mubr.bf16.mxu0 0
      %3327 = vmatmul.mubr.bf16.gmra.mrb[0].mxu0 %v3231
      %v3328 = vpop.f32.mrb[0].mxu0
      %v3329 = vadd.f32 0.0, %v3328
      %v3330 = vpop.f32.mrb[0].mxu0
      %v3331 = vpop.f32.mrb[0].mxu0
      %v3332 = vadd.f32 0.0, %v3331
      %v3333 = vpop.f32.mrb[0].mxu0
      %3334 = vmatprep.mubr.bf16.mxu0 0
      %3335 = vmatmul.mubr.bf16.gmra.mrb[0].mxu0 %v3232
      %v3336 = vpop.f32.mrb[0].mxu0
      %v3337 = vadd.f32 0.0, %v3336
      %v3338 = vpop.f32.mrb[0].mxu0
      %v3339 = vpop.f32.mrb[0].mxu0
      %v3340 = vadd.f32 0.0, %v3339
      %v3341 = vpop.f32.mrb[0].mxu0
      %3342 = vmatprep.mubr.bf16.mxu0 0
      %3343 = vmatmul.mubr.bf16.gmra.mrb[0].mxu0 %v3233
      %v3344 = vpop.f32.mrb[0].mxu0
      %v3345 = vadd.f32 0.0, %v3344
      %v3346 = vpop.f32.mrb[0].mxu0
      %v3347 = vpop.f32.mrb[0].mxu0
      %v3348 = vadd.f32 0.0, %v3347
      %v3349 = vpop.f32.mrb[0].mxu0
      %3350 = vdwg.mxu0
      %v3351 = vadd.f32 %v3180, %v3321
      %v3352 = vadd.f32 %v3181, %v3324
      %v3353 = vadd.f32 %v3182, %v3329
      %v3354 = vadd.f32 %v3183, %v3332
      %v3355 = vadd.f32 %v3184, %v3337
      %v3356 = vadd.f32 %v3185, %v3340
      %v3357 = vadd.f32 %v3186, %v3345
      %v3358 = vadd.f32 %v3187, %v3348
      %v3359 = vld [vmem:[%s3188] sm:$0xf]
      %v3360 = vld [vmem:[%s3188 + $0x4] sm:$0x1]
      %v3361 = vld [vmem:[%s3188 + $0x8] sm:$0xf]
      %v3362 = vld [vmem:[%s3188 + $0xc] sm:$0x1]
      %v3363 = vld [vmem:[%s3188 + $0x10] sm:$0xf]
      %v3364 = vld [vmem:[%s3188 + $0x14] sm:$0x1]
      %v3365 = vld [vmem:[%s3188 + $0x18] sm:$0xf]
      %v3366 = vld [vmem:[%s3188 + $0x1c] sm:$0x1]
      %v3367 = vld [vmem:[%s3188 + $0x20] sm:$0xf]
      %v3368 = vld [vmem:[%s3188 + $0x24] sm:$0x1]
      %v3369 = vld [vmem:[%s3188 + $0x28] sm:$0xf]
      %v3370 = vld [vmem:[%s3188 + $0x2c] sm:$0x1]
      %v3371 = vld [vmem:[%s3188 + $0x30] sm:$0xf]
      %v3372 = vld [vmem:[%s3188 + $0x34] sm:$0x1]
      %v3373 = vld [vmem:[%s3188 + $0x38] sm:$0xf]
      %v3374 = vld [vmem:[%s3188 + $0x3c] sm:$0x1]
      %v3376 = vshrl.u32 %v3359, 16
      %v3378 = vrot.slane %v3376, 4
      %v3379 = vshll.u32 %v3359, 16
      %v3381 = vrot.slane %v3379, 5
      %v3382 = vor.u32 %v3378, %v3381
      %v3383 = vrot.slane %v3382, 4
      %v3385 = vshll.u32 %v3360, 16
      %v3387 = vrot.slane %v3385, 5
      %v3388 = vsel %vm525, %v3383, %v3387
      %v3390 = vshrl.u32 %v3361, 16
      %v3392 = vrot.slane %v3390, 4
      %v3393 = vshll.u32 %v3361, 16
      %v3395 = vrot.slane %v3393, 5
      %v3396 = vor.u32 %v3392, %v3395
      %v3397 = vrot.slane %v3396, 4
      %v3399 = vshll.u32 %v3362, 16
      %v3401 = vrot.slane %v3399, 5
      %v3402 = vsel %vm525, %v3397, %v3401
      %v3404 = vshrl.u32 %v3363, 16
      %v3406 = vrot.slane %v3404, 4
      %v3407 = vshll.u32 %v3363, 16
      %v3409 = vrot.slane %v3407, 5
      %v3410 = vor.u32 %v3406, %v3409
      %v3411 = vrot.slane %v3410, 4
      %v3413 = vshll.u32 %v3364, 16
      %v3415 = vrot.slane %v3413, 5
      %v3416 = vsel %vm525, %v3411, %v3415
      %v3418 = vshrl.u32 %v3365, 16
      %v3420 = vrot.slane %v3418, 4
      %v3421 = vshll.u32 %v3365, 16
      %v3423 = vrot.slane %v3421, 5
      %v3424 = vor.u32 %v3420, %v3423
      %v3425 = vrot.slane %v3424, 4
      %v3427 = vshll.u32 %v3366, 16
      %v3429 = vrot.slane %v3427, 5
      %v3430 = vsel %vm525, %v3425, %v3429
      %v3432 = vshrl.u32 %v3367, 16
      %v3434 = vrot.slane %v3432, 4
      %v3435 = vshll.u32 %v3367, 16
      %v3437 = vrot.slane %v3435, 5
      %v3438 = vor.u32 %v3434, %v3437
      %v3439 = vrot.slane %v3438, 4
      %v3441 = vshll.u32 %v3368, 16
      %v3443 = vrot.slane %v3441, 5
      %v3444 = vsel %vm525, %v3439, %v3443
      %v3446 = vshrl.u32 %v3369, 16
      %v3448 = vrot.slane %v3446, 4
      %v3449 = vshll.u32 %v3369, 16
      %v3451 = vrot.slane %v3449, 5
      %v3452 = vor.u32 %v3448, %v3451
      %v3453 = vrot.slane %v3452, 4
      %v3455 = vshll.u32 %v3370, 16
      %v3457 = vrot.slane %v3455, 5
      %v3458 = vsel %vm525, %v3453, %v3457
      %v3460 = vshrl.u32 %v3371, 16
      %v3462 = vrot.slane %v3460, 4
      %v3463 = vshll.u32 %v3371, 16
      %v3465 = vrot.slane %v3463, 5
      %v3466 = vor.u32 %v3462, %v3465
      %v3467 = vrot.slane %v3466, 4
      %v3469 = vshll.u32 %v3372, 16
      %v3471 = vrot.slane %v3469, 5
      %v3472 = vsel %vm525, %v3467, %v3471
      %v3474 = vshrl.u32 %v3373, 16
      %v3476 = vrot.slane %v3474, 4
      %v3477 = vshll.u32 %v3373, 16
      %v3479 = vrot.slane %v3477, 5
      %v3480 = vor.u32 %v3476, %v3479
      %v3481 = vrot.slane %v3480, 4
      %v3483 = vshll.u32 %v3374, 16
      %v3485 = vrot.slane %v3483, 5
      %v3486 = vsel %vm525, %v3481, %v3485
      %s3487 = scalar_lea.vmem %s3, 448
      %v3488 = vld [vmem:[%s3487] sm:$0xf]
      %v3489 = vld [vmem:[%s3487 + $0x4] sm:$0xf]
      %v3490 = vld [vmem:[%s3487 + $0x8] sm:$0xf]
      %v3491 = vld [vmem:[%s3487 + $0xc] sm:$0xf]
      %v3492 = vld [vmem:[%s3487 + $0x10] sm:$0xf]
      %v3493 = vld [vmem:[%s3487 + $0x14] sm:$0xf]
      %v3494 = vld [vmem:[%s3487 + $0x18] sm:$0xf]
      %v3495 = vld [vmem:[%s3487 + $0x1c] sm:$0xf]
      %v3496 = vld [vmem:[%s3487 + $0x20] sm:$0xf]
      %v3497 = vld [vmem:[%s3487 + $0x24] sm:$0xf]
      %v3498 = vld [vmem:[%s3487 + $0x28] sm:$0xf]
      %v3499 = vld [vmem:[%s3487 + $0x2c] sm:$0xf]
      %v3500 = vld [vmem:[%s3487 + $0x30] sm:$0xf]
      %v3501 = vld [vmem:[%s3487 + $0x34] sm:$0xf]
      %v3502 = vld [vmem:[%s3487 + $0x38] sm:$0xf]
      %v3503 = vld [vmem:[%s3487 + $0x3c] sm:$0xf]
      %v3504 = vunpack.c.l.b16 %v3388
      %v3505 = vunpack.c.l.b16 %v3402
      %v3506 = vunpack.c.l.b16 %v3416
      %v3507 = vunpack.c.l.b16 %v3430
      %v3508 = vunpack.c.l.b16 %v3444
      %v3509 = vunpack.c.l.b16 %v3458
      %v3510 = vunpack.c.l.b16 %v3472
      %v3511 = vunpack.c.l.b16 %v3486
      %v3512 = vpack.c.b16 %v3505, %v3504
      %v3513 = vpack.c.b16 %v3507, %v3506
      %v3514 = vpack.c.b16 %v3509, %v3508
      %v3515 = vpack.c.b16 %v3511, %v3510
      %v3536 = vunpack.c.l.b16 %v3488
      %v3537 = vunpack.c.l.b16 %v3489
      %v3538 = vunpack.c.l.b16 %v3490
      %v3539 = vunpack.c.l.b16 %v3491
      %v3540 = vunpack.c.l.b16 %v3492
      %v3541 = vunpack.c.l.b16 %v3493
      %v3542 = vunpack.c.l.b16 %v3494
      %v3543 = vunpack.c.l.b16 %v3495
      %v3544 = vunpack.c.l.b16 %v3496
      %v3545 = vunpack.c.l.b16 %v3497
      %v3546 = vunpack.c.l.b16 %v3498
      %v3547 = vunpack.c.l.b16 %v3499
      %v3548 = vunpack.c.l.b16 %v3500
      %v3549 = vunpack.c.l.b16 %v3501
      %v3550 = vunpack.c.l.b16 %v3502
      %v3551 = vunpack.c.l.b16 %v3503
      %v3552 = vpack.c.b16 %v3537, %v3536
      %v3553 = vpack.c.b16 %v3539, %v3538
      %v3554 = vpack.c.b16 %v3541, %v3540
      %v3555 = vpack.c.b16 %v3543, %v3542
      %v3556 = vpack.c.b16 %v3545, %v3544
      %v3557 = vpack.c.b16 %v3547, %v3546
      %v3558 = vpack.c.b16 %v3549, %v3548
      %v3559 = vpack.c.b16 %v3551, %v3550
      %3568 = vmatprep.subr.bf16.mxu0 0
      %3569 = vmatpush1.bf16.msra.mxu0 %v3552
      %3570 = vmatprep.subr.bf16.mxu0 0
      %3571 = vmatpush1.bf16.msra.mxu0 %v3553
      %3572 = vmatprep.subr.bf16.mxu0 0
      %3573 = vmatpush1.bf16.msra.mxu0 %v3554
      %3574 = vmatprep.subr.bf16.mxu0 0
      %3575 = vmatpush1.bf16.msra.mxu0 %v3555
      %3576 = vmatprep.subr.bf16.mxu0 0
      %3577 = vmatpush1.bf16.msra.mxu0 %v3556
      %3578 = vmatprep.subr.bf16.mxu0 0
      %3579 = vmatpush1.bf16.msra.mxu0 %v3557
      %3580 = vmatprep.subr.bf16.mxu0 0
      %3581 = vmatpush1.bf16.msra.mxu0 %v3558
      %3582 = vmatprep.subr.bf16.mxu0 0
      %3583 = vmatpush1.bf16.msra.mxu0 %v3559
      %3584 = vmatprep.subr.bf16.mxu0 0
      %3585 = vmatpush1.bf16.msra.mxu0 0
      %3586 = vmatprep.subr.bf16.mxu0 0
      %3587 = vmatpush1.bf16.msra.mxu0 0
      %3588 = vmatprep.subr.bf16.mxu0 0
      %3589 = vmatpush1.bf16.msra.mxu0 0
      %3590 = vmatprep.subr.bf16.mxu0 0
      %3591 = vmatpush1.bf16.msra.mxu0 0
      %3592 = vmatprep.subr.bf16.mxu0 0
      %3593 = vmatpush1.bf16.msra.mxu0 0
      %3594 = vmatprep.subr.bf16.mxu0 0
      %3595 = vmatpush1.bf16.msra.mxu0 0
      %3596 = vmatprep.subr.bf16.mxu0 0
      %3597 = vmatpush1.bf16.msra.mxu0 0
      %3598 = vmatprep.subr.bf16.mxu0 0
      %3599 = vmatpush1.bf16.msra.mxu0 0
      %3600 = vmatprep.mubr.bf16.mxu0 0
      %3601 = vmatmul.mubr.bf16.gmra.mrb[0].mxu0 %v3512
      %v3602 = vpop.f32.mrb[0].mxu0
      %v3603 = vadd.f32 0.0, %v3602
      %v3604 = vpop.f32.mrb[0].mxu0
      %v3605 = vpop.f32.mrb[0].mxu0
      %v3606 = vadd.f32 0.0, %v3605
      %v3607 = vpop.f32.mrb[0].mxu0
      %3608 = vmatprep.mubr.bf16.mxu0 0
      %3609 = vmatmul.mubr.bf16.gmra.mrb[0].mxu0 %v3513
      %v3610 = vpop.f32.mrb[0].mxu0
      %v3611 = vadd.f32 0.0, %v3610
      %v3612 = vpop.f32.mrb[0].mxu0
      %v3613 = vpop.f32.mrb[0].mxu0
      %v3614 = vadd.f32 0.0, %v3613
      %v3615 = vpop.f32.mrb[0].mxu0
      %3616 = vmatprep.mubr.bf16.mxu0 0
      %3617 = vmatmul.mubr.bf16.gmra.mrb[0].mxu0 %v3514
      %v3618 = vpop.f32.mrb[0].mxu0
      %v3619 = vadd.f32 0.0, %v3618
      %v3620 = vpop.f32.mrb[0].mxu0
      %v3621 = vpop.f32.mrb[0].mxu0
      %v3622 = vadd.f32 0.0, %v3621
      %v3623 = vpop.f32.mrb[0].mxu0
      %3624 = vmatprep.mubr.bf16.mxu0 0
      %3625 = vmatmul.mubr.bf16.gmra.mrb[0].mxu0 %v3515
      %v3626 = vpop.f32.mrb[0].mxu0
      %v3627 = vadd.f32 0.0, %v3626
      %v3628 = vpop.f32.mrb[0].mxu0
      %v3629 = vpop.f32.mrb[0].mxu0
      %v3630 = vadd.f32 0.0, %v3629
      %v3631 = vpop.f32.mrb[0].mxu0
      %3632 = vdwg.mxu0
      %v3633 = vadd.f32 %v3351, %v3603
      %v3634 = vadd.f32 %v3352, %v3606
      %v3635 = vadd.f32 %v3353, %v3611
      %v3636 = vadd.f32 %v3354, %v3614
      %v3637 = vadd.f32 %v3355, %v3619
      %v3638 = vadd.f32 %v3356, %v3622
      %v3639 = vadd.f32 %v3357, %v3627
      %v3640 = vadd.f32 %v3358, %v3630
      %v3641 = vld [vmem:[%s3188] sm:$0xe]
      %v3642 = vld [vmem:[%s3188 + $0x8] sm:$0xe]
      %v3643 = vld [vmem:[%s3188 + $0x10] sm:$0xe]
      %v3644 = vld [vmem:[%s3188 + $0x18] sm:$0xe]
      %v3645 = vld [vmem:[%s3188 + $0x20] sm:$0xe]
      %v3646 = vld [vmem:[%s3188 + $0x28] sm:$0xe]
      %v3647 = vld [vmem:[%s3188 + $0x30] sm:$0xe]
      %v3648 = vld [vmem:[%s3188 + $0x38] sm:$0xe]
      %v3665 = vrot.slane %v3641, 5
      %v3666 = vrot.slane %v3665, 4
      %v3667 = vrot.slane %v3360, 5
      %v3668 = vsel %vm2339, %v3666, %v3667
      %v3669 = vrot.slane %v3642, 5
      %v3670 = vrot.slane %v3669, 4
      %v3671 = vrot.slane %v3362, 5
      %v3672 = vsel %vm2339, %v3670, %v3671
      %v3673 = vrot.slane %v3643, 5
      %v3674 = vrot.slane %v3673, 4
      %v3675 = vrot.slane %v3364, 5
      %v3676 = vsel %vm2339, %v3674, %v3675
      %v3677 = vrot.slane %v3644, 5
      %v3678 = vrot.slane %v3677, 4
      %v3679 = vrot.slane %v3366, 5
      %v3680 = vsel %vm2339, %v3678, %v3679
      %v3681 = vrot.slane %v3645, 5
      %v3682 = vrot.slane %v3681, 4
      %v3683 = vrot.slane %v3368, 5
      %v3684 = vsel %vm2339, %v3682, %v3683
      %v3685 = vrot.slane %v3646, 5
      %v3686 = vrot.slane %v3685, 4
      %v3687 = vrot.slane %v3370, 5
      %v3688 = vsel %vm2339, %v3686, %v3687
      %v3689 = vrot.slane %v3647, 5
      %v3690 = vrot.slane %v3689, 4
      %v3691 = vrot.slane %v3372, 5
      %v3692 = vsel %vm2339, %v3690, %v3691
      %v3693 = vrot.slane %v3648, 5
      %v3694 = vrot.slane %v3693, 4
      %v3695 = vrot.slane %v3374, 5
      %v3696 = vsel %vm2339, %v3694, %v3695
      %s3697 = scalar_lea.vmem %s3, 512
      %v3698 = vld [vmem:[%s3697] sm:$0xf]
      %v3699 = vld [vmem:[%s3697 + $0x4] sm:$0xf]
      %v3700 = vld [vmem:[%s3697 + $0x8] sm:$0xf]
      %v3701 = vld [vmem:[%s3697 + $0xc] sm:$0xf]
      %v3702 = vld [vmem:[%s3697 + $0x10] sm:$0xf]
      %v3703 = vld [vmem:[%s3697 + $0x14] sm:$0xf]
      %v3704 = vld [vmem:[%s3697 + $0x18] sm:$0xf]
      %v3705 = vld [vmem:[%s3697 + $0x1c] sm:$0xf]
      %v3706 = vld [vmem:[%s3697 + $0x20] sm:$0xf]
      %v3707 = vld [vmem:[%s3697 + $0x24] sm:$0xf]
      %v3708 = vld [vmem:[%s3697 + $0x28] sm:$0xf]
      %v3709 = vld [vmem:[%s3697 + $0x2c] sm:$0xf]
      %v3710 = vld [vmem:[%s3697 + $0x30] sm:$0xf]
      %v3711 = vld [vmem:[%s3697 + $0x34] sm:$0xf]
      %v3712 = vld [vmem:[%s3697 + $0x38] sm:$0xf]
      %v3713 = vld [vmem:[%s3697 + $0x3c] sm:$0xf]
      %v3714 = vunpack.c.l.b16 %v3668
      %v3715 = vunpack.c.l.b16 %v3672
      %v3716 = vunpack.c.l.b16 %v3676
      %v3717 = vunpack.c.l.b16 %v3680
      %v3718 = vunpack.c.l.b16 %v3684
      %v3719 = vunpack.c.l.b16 %v3688
      %v3720 = vunpack.c.l.b16 %v3692
      %v3721 = vunpack.c.l.b16 %v3696
      %v3722 = vpack.c.b16 %v3715, %v3714
      %v3723 = vpack.c.b16 %v3717, %v3716
      %v3724 = vpack.c.b16 %v3719, %v3718
      %v3725 = vpack.c.b16 %v3721, %v3720
      %v3746 = vunpack.c.l.b16 %v3698
      %v3747 = vunpack.c.l.b16 %v3699
      %v3748 = vunpack.c.l.b16 %v3700
      %v3749 = vunpack.c.l.b16 %v3701
      %v3750 = vunpack.c.l.b16 %v3702
      %v3751 = vunpack.c.l.b16 %v3703
      %v3752 = vunpack.c.l.b16 %v3704
      %v3753 = vunpack.c.l.b16 %v3705
      %v3754 = vunpack.c.l.b16 %v3706
      %v3755 = vunpack.c.l.b16 %v3707
      %v3756 = vunpack.c.l.b16 %v3708
      %v3757 = vunpack.c.l.b16 %v3709
      %v3758 = vunpack.c.l.b16 %v3710
      %v3759 = vunpack.c.l.b16 %v3711
      %v3760 = vunpack.c.l.b16 %v3712
      %v3761 = vunpack.c.l.b16 %v3713
      %v3762 = vpack.c.b16 %v3747, %v3746
      %v3763 = vpack.c.b16 %v3749, %v3748
      %v3764 = vpack.c.b16 %v3751, %v3750
      %v3765 = vpack.c.b16 %v3753, %v3752
      %v3766 = vpack.c.b16 %v3755, %v3754
      %v3767 = vpack.c.b16 %v3757, %v3756
      %v3768 = vpack.c.b16 %v3759, %v3758
      %v3769 = vpack.c.b16 %v3761, %v3760
      %3778 = vmatprep.subr.bf16.mxu0 0
      %3779 = vmatpush1.bf16.msra.mxu0 %v3762
      %3780 = vmatprep.subr.bf16.mxu0 0
      %3781 = vmatpush1.bf16.msra.mxu0 %v3763
      %3782 = vmatprep.subr.bf16.mxu0 0
      %3783 = vmatpush1.bf16.msra.mxu0 %v3764
      %3784 = vmatprep.subr.bf16.mxu0 0
      %3785 = vmatpush1.bf16.msra.mxu0 %v3765
      %3786 = vmatprep.subr.bf16.mxu0 0
      %3787 = vmatpush1.bf16.msra.mxu0 %v3766
      %3788 = vmatprep.subr.bf16.mxu0 0
      %3789 = vmatpush1.bf16.msra.mxu0 %v3767
      %3790 = vmatprep.subr.bf16.mxu0 0
      %3791 = vmatpush1.bf16.msra.mxu0 %v3768
      %3792 = vmatprep.subr.bf16.mxu0 0
      %3793 = vmatpush1.bf16.msra.mxu0 %v3769
      %3794 = vmatprep.subr.bf16.mxu0 0
      %3795 = vmatpush1.bf16.msra.mxu0 0
      %3796 = vmatprep.subr.bf16.mxu0 0
      %3797 = vmatpush1.bf16.msra.mxu0 0
      %3798 = vmatprep.subr.bf16.mxu0 0
      %3799 = vmatpush1.bf16.msra.mxu0 0
      %3800 = vmatprep.subr.bf16.mxu0 0
      %3801 = vmatpush1.bf16.msra.mxu0 0
      %3802 = vmatprep.subr.bf16.mxu0 0
      %3803 = vmatpush1.bf16.msra.mxu0 0
      %3804 = vmatprep.subr.bf16.mxu0 0
      %3805 = vmatpush1.bf16.msra.mxu0 0
      %3806 = vmatprep.subr.bf16.mxu0 0
      %3807 = vmatpush1.bf16.msra.mxu0 0
      %3808 = vmatprep.subr.bf16.mxu0 0
      %3809 = vmatpush1.bf16.msra.mxu0 0
      %3810 = vmatprep.mubr.bf16.mxu0 0
      %3811 = vmatmul.mubr.bf16.gmra.mrb[0].mxu0 %v3722
      %v3812 = vpop.f32.mrb[0].mxu0
      %v3813 = vadd.f32 0.0, %v3812
      %v3814 = vpop.f32.mrb[0].mxu0
      %v3815 = vpop.f32.mrb[0].mxu0
      %v3816 = vadd.f32 0.0, %v3815
      %v3817 = vpop.f32.mrb[0].mxu0
      %3818 = vmatprep.mubr.bf16.mxu0 0
      %3819 = vmatmul.mubr.bf16.gmra.mrb[0].mxu0 %v3723
      %v3820 = vpop.f32.mrb[0].mxu0
      %v3821 = vadd.f32 0.0, %v3820
      %v3822 = vpop.f32.mrb[0].mxu0
      %v3823 = vpop.f32.mrb[0].mxu0
      %v3824 = vadd.f32 0.0, %v3823
      %v3825 = vpop.f32.mrb[0].mxu0
      %3826 = vmatprep.mubr.bf16.mxu0 0
      %3827 = vmatmul.mubr.bf16.gmra.mrb[0].mxu0 %v3724
      %v3828 = vpop.f32.mrb[0].mxu0
      %v3829 = vadd.f32 0.0, %v3828
      %v3830 = vpop.f32.mrb[0].mxu0
      %v3831 = vpop.f32.mrb[0].mxu0
      %v3832 = vadd.f32 0.0, %v3831
      %v3833 = vpop.f32.mrb[0].mxu0
      %3834 = vmatprep.mubr.bf16.mxu0 0
      %3835 = vmatmul.mubr.bf16.gmra.mrb[0].mxu0 %v3725
      %v3836 = vpop.f32.mrb[0].mxu0
      %v3837 = vadd.f32 0.0, %v3836
      %v3838 = vpop.f32.mrb[0].mxu0
      %v3839 = vpop.f32.mrb[0].mxu0
      %v3840 = vadd.f32 0.0, %v3839
      %v3841 = vpop.f32.mrb[0].mxu0
      %3842 = vdwg.mxu0
      %v3843 = vadd.f32 %v3633, %v3813
      %v3844 = vadd.f32 %v3634, %v3816
      %v3845 = vadd.f32 %v3635, %v3821
      %v3846 = vadd.f32 %v3636, %v3824
      %v3847 = vadd.f32 %v3637, %v3829
      %v3848 = vadd.f32 %v3638, %v3832
      %v3849 = vadd.f32 %v3639, %v3837
      %v3850 = vadd.f32 %v3640, %v3840
      %v3851 = vld [vmem:[%s859] sm:$0xf]
      %v3852 = vld [vmem:[%s859 + $0x8] sm:$0xf]
      %v3853 = vld [vmem:[%s859 + $0x10] sm:$0xf]
      %v3854 = vld [vmem:[%s859 + $0x18] sm:$0xf]
      %v3855 = vld [vmem:[%s859 + $0x20] sm:$0xf]
      %v3856 = vld [vmem:[%s859 + $0x28] sm:$0xf]
      %v3857 = vld [vmem:[%s859 + $0x30] sm:$0xf]
      %v3858 = vld [vmem:[%s859 + $0x38] sm:$0xf]
      %v3859 = vld [vmem:[%s5] sm:$0x3]
      %v3860 = vld [vmem:[%s6] sm:$0x1]
      %v3862 = vlaneseq
      %v3863 = vshrl.u32 %v3862, 7
      %v3864 = vsub.s32 0, %v3863
      %v3865 = vrot.slane %v3860, %v3864
      %v3875 = vunpack.c.l.b16 %v3851
      %v3876 = vunpack.c.l.b16 %v3852
      %v3877 = vunpack.c.l.b16 %v3853
      %v3878 = vunpack.c.l.b16 %v3854
      %v3879 = vunpack.c.l.b16 %v3855
      %v3880 = vunpack.c.l.b16 %v3856
      %v3881 = vunpack.c.l.b16 %v3857
      %v3882 = vunpack.c.l.b16 %v3858
      %v3883 = vpack.c.b16 %v3876, %v3875
      %v3884 = vpack.c.b16 %v3878, %v3877
      %v3885 = vpack.c.b16 %v3880, %v3879
      %v3886 = vpack.c.b16 %v3882, %v3881
      %v3888 = vsel %vm325, %v3883, 0
      %v3891 = vsel %vm325, %v3884, 0
      %v3894 = vsel %vm325, %v3885, 0
      %v3897 = vsel %vm325, %v3886, 0
      %v3900 = vsel %vm338, %v3859, 0
      %3902 = vmatprep.subr.bf16.mxu0 0
      %3903 = vmatpush1.bf16.msra.mxu0 %v3900
      %3904 = vmatprep.subr.bf16.mxu0 0
      %3905 = vmatpush1.bf16.msra.mxu0 0
      %3906 = vmatprep.subr.bf16.mxu0 0
      %3907 = vmatpush1.bf16.msra.mxu0 0
      %3908 = vmatprep.subr.bf16.mxu0 0
      %3909 = vmatpush1.bf16.msra.mxu0 0
      %3910 = vmatprep.subr.bf16.mxu0 0
      %3911 = vmatpush1.bf16.msra.mxu0 0
      %3912 = vmatprep.subr.bf16.mxu0 0
      %3913 = vmatpush1.bf16.msra.mxu0 0
      %3914 = vmatprep.subr.bf16.mxu0 0
      %3915 = vmatpush1.bf16.msra.mxu0 0
      %3916 = vmatprep.subr.bf16.mxu0 0
      %3917 = vmatpush1.bf16.msra.mxu0 0
      %3918 = vmatprep.subr.bf16.mxu0 0
      %3919 = vmatpush1.bf16.msra.mxu0 0
      %3920 = vmatprep.subr.bf16.mxu0 0
      %3921 = vmatpush1.bf16.msra.mxu0 0
      %3922 = vmatprep.subr.bf16.mxu0 0
      %3923 = vmatpush1.bf16.msra.mxu0 0
      %3924 = vmatprep.subr.bf16.mxu0 0
      %3925 = vmatpush1.bf16.msra.mxu0 0
      %3926 = vmatprep.subr.bf16.mxu0 0
      %3927 = vmatpush1.bf16.msra.mxu0 0
      %3928 = vmatprep.subr.bf16.mxu0 0
      %3929 = vmatpush1.bf16.msra.mxu0 0
      %3930 = vmatprep.subr.bf16.mxu0 0
      %3931 = vmatpush1.bf16.msra.mxu0 0
      %3932 = vmatprep.subr.bf16.mxu0 0
      %3933 = vmatpush1.bf16.msra.mxu0 0
      %3934 = vmatprep.mubr.bf16.mxu0 0
      %3935 = vmatmul.mubr.bf16.gmra.mrb[0].mxu0 %v3888
      %v3936 = vpop.f32.mrb[0].mxu0
      %v3937 = vadd.f32 %v3865, %v3936
      %v3938 = vpop.f32.mrb[0].mxu0
      %v3939 = vpop.f32.mrb[0].mxu0
      %v3940 = vadd.f32 %v3865, %v3939
      %v3941 = vpop.f32.mrb[0].mxu0
      %3942 = vmatprep.mubr.bf16.mxu0 0
      %3943 = vmatmul.mubr.bf16.gmra.mrb[0].mxu0 %v3891
      %v3944 = vpop.f32.mrb[0].mxu0
      %v3945 = vadd.f32 %v3865, %v3944
      %v3946 = vpop.f32.mrb[0].mxu0
      %v3947 = vpop.f32.mrb[0].mxu0
      %v3948 = vadd.f32 %v3865, %v3947
      %v3949 = vpop.f32.mrb[0].mxu0
      %3950 = vmatprep.mubr.bf16.mxu0 0
      %3951 = vmatmul.mubr.bf16.gmra.mrb[0].mxu0 %v3894
      %v3952 = vpop.f32.mrb[0].mxu0
      %v3953 = vadd.f32 %v3865, %v3952
      %v3954 = vpop.f32.mrb[0].mxu0
      %v3955 = vpop.f32.mrb[0].mxu0
      %v3956 = vadd.f32 %v3865, %v3955
      %v3957 = vpop.f32.mrb[0].mxu0
      %3958 = vmatprep.mubr.bf16.mxu0 0
      %3959 = vmatmul.mubr.bf16.gmra.mrb[0].mxu0 %v3897
      %v3960 = vpop.f32.mrb[0].mxu0
      %v3961 = vadd.f32 %v3865, %v3960
      %v3962 = vpop.f32.mrb[0].mxu0
      %v3963 = vpop.f32.mrb[0].mxu0
      %v3964 = vadd.f32 %v3865, %v3963
      %v3965 = vpop.f32.mrb[0].mxu0
      %3966 = vdwg.mxu0
      %v3967 = vld [vmem:[%s4] sm:$0x1]
      %v3969 = vlaneseq
      %v3970 = vshrl.u32 %v3969, 7
      %v3971 = vsub.s32 0, %v3970
      %v3972 = vrot.slane %v3967, %v3971
      %v3974 = vadd.f32 %v3843, %v3972
      %v3975 = vadd.f32 %v3844, %v3972
      %v3976 = vadd.f32 %v3845, %v3972
      %v3977 = vadd.f32 %v3846, %v3972
      %v3978 = vadd.f32 %v3847, %v3972
      %v3979 = vadd.f32 %v3848, %v3972
      %v3980 = vadd.f32 %v3849, %v3972
      %v3981 = vadd.f32 %v3850, %v3972
      %v3982 = vadd.f32 %v3974, %v3937
      %v3983 = vadd.f32 %v3975, %v3940
      %v3984 = vadd.f32 %v3976, %v3945
      %v3985 = vadd.f32 %v3977, %v3948
      %v3986 = vadd.f32 %v3978, %v3953
      %v3987 = vadd.f32 %v3979, %v3956
      %v3988 = vadd.f32 %v3980, %v3961
      %v3989 = vadd.f32 %v3981, %v3964
      %v3990 = vmax.f32 %v3982, 0.0
      %v3991 = vmax.f32 %v3983, 0.0
      %v3992 = vmax.f32 %v3984, 0.0
      %v3993 = vmax.f32 %v3985, 0.0
      %v3994 = vmax.f32 %v3986, 0.0
      %v3995 = vmax.f32 %v3987, 0.0
      %v3996 = vmax.f32 %v3988, 0.0
      %v3997 = vmax.f32 %v3989, 0.0
      %v3998 = vpack.c.bf16 %v3990, %v3990
      %v3999 = vpack.c.bf16 %v3991, %v3991
      %v4000 = vpack.c.bf16 %v3992, %v3992
      %v4001 = vpack.c.bf16 %v3993, %v3993
      %v4002 = vpack.c.bf16 %v3994, %v3994
      %v4003 = vpack.c.bf16 %v3995, %v3995
      %v4004 = vpack.c.bf16 %v3996, %v3996
      %v4005 = vpack.c.bf16 %v3997, %v3997
      %4006 = vst [vmem:[%s283] sm:$0xf] %v3998
      %4007 = vst [vmem:[%s283 + $0x4] sm:$0xf] %v3999
      %4008 = vst [vmem:[%s283 + $0x8] sm:$0xf] %v4000
      %4009 = vst [vmem:[%s283 + $0xc] sm:$0xf] %v4001
      %4010 = vst [vmem:[%s283 + $0x10] sm:$0xf] %v4002
      %4011 = vst [vmem:[%s283 + $0x14] sm:$0xf] %v4003
      %4012 = vst [vmem:[%s283 + $0x18] sm:$0xf] %v4004
      %4013 = vst [vmem:[%s283 + $0x1c] sm:$0xf] %v4005
      %p4014 = scmp.lt.s32.totalorder %s18, 1
      %s4015 = scalar_select %p4014, %s18, 1
      %s4016 = smul.addr %s4015, 8
      %s4017 = smul.addr %s4016, 4
      %s4018 = scalar_lea.vmem %s7, %s4017
      // Predicated region
      $region49: #{a_call__.1} parent=47 // pred_check
        %p4019 = pneg %p188
      $region50: #{a_call__.1} parent=47 // pred_check_branch
        %4021 = sbr.rel (%p4019) target = $region52
      $region51: #{a_call__.1} parent=47 // pred_region
        _
      $region52: #{a_call__.1} parent=47 // pred_fallthru
        _
    $region48: #{a_call__.1} parent=5 // pred_fallthru
      _
    %p4022 = scmp.le.s32.totalorder 2, %s13
    // Predicated region
    $region53: #{a_call__.1} parent=5 // pred_check
      %p4023 = pneg %p4022
    $region54: #{a_call__.1} parent=5 // pred_check_branch
      %4025 = sbr.rel (%p4023) target = $region56
    $region55: #{a_call__.1} parent=5 // pred_region
      %s4026 = ssub.s32 %s13, 2
      // Predicated region
      $region57: #{a_call__.1} parent=55 // pred_check
        %p4027 = pneg %p194
      $region58: #{a_call__.1} parent=55 // pred_check_branch
        %4029 = sbr.rel (%p4027) target = $region60
      $region59: #{a_call__.1} parent=55 // pred_region
        %p4030 = scmp.lt.s32.totalorder %s19, 1
        %s4031 = scalar_select %p4030, %s19, 1
        %s4032 = smul.addr %s4031, 8
        %s4033 = smul.addr %s4032, 4
        %s4034 = scalar_lea.vmem %s7, %s4033
      $region60: #{a_call__.1} parent=55 // pred_fallthru
        _
    $region56: #{a_call__.1} parent=5 // pred_fallthru
      _
  $region6: #{a_call__.1} parent=0 // loop_footer
    %s17 = sadd.s32 1, %s13
  $region7: #{a_call__.1} parent=0 // loop_footer_branch
    %12 = sbr.rel target = $region3
  $region8: #{a_call__.1} parent=0 // loop_exit
    _

</llo_original>
